<compile_context>
chip_gen: v6e
topology: v6e:2x2x1
jax: 0.10.0
libtpu: 0.0.40
codegen_flags: <defaults>
</compile_context>

<pallas_src>
import functools

import jax
import jax.numpy as jnp
from jax.experimental import pallas as pl
from jax.experimental.pallas import tpu as pltpu

_LN_EPS = 1e-5  # PyTorch nn.LayerNorm default


def _layer_norm(x, gamma, beta):
    mu = jnp.mean(x, axis=-1, keepdims=True)
    xc = x - mu
    var = jnp.mean(xc * xc, axis=-1, keepdims=True)
    return xc * jax.lax.rsqrt(var + _LN_EPS) * gamma + beta


def _fast_recip(x):
    # EUP approx reciprocal (free slot) + one Newton step (2 cheap VALU ops) -> ~f32
    # accuracy without the full VALU divide sequence.
    r = pl.reciprocal(x, approx=True)
    return r * (2.0 - x * r)


def _erf(x):
    # Abramowitz & Stegun 7.1.26 (max abs error ~1.5e-7) -> exact-GELU semantics,
    # built only from ops that lower cleanly in Mosaic (abs/exp/mul/add/where/recip).
    a1, a2, a3, a4, a5 = 0.254829592, -0.284496736, 1.421413741, -1.453152027, 1.061405429
    p = 0.3275911
    ax = jnp.abs(x)
    t = _fast_recip(1.0 + p * ax)
    poly = ((((a5 * t + a4) * t + a3) * t + a2) * t + a1) * t
    y = 1.0 - poly * jnp.exp(-ax * ax)
    return jnp.where(x >= 0, y, -y)


def _gelu_exact(x):
    return 0.5 * x * (1.0 + _erf(x * 0.7071067811865476))


# ----------------------------------------------------------------------------------
# Fused per-layer kernel:
#   x <- x + Wout @ MHA(LN1(x)) + bout
#   o <- x + W2 @ GELU(W1 @ LN2(x) + b1) + b2              (one batch element per step)
# ----------------------------------------------------------------------------------
def _layer_kernel(x_ref, g1_ref, b1n_ref, wqkv_ref, wo_ref, bo_ref,
                  g2_ref, b2n_ref, w1_ref, bh_ref, w2_ref, b2_ref,
                  o_ref, ctx_ref, *, heads, dh, compute_dtype):
    D = heads * dh

    # ---------------- Attention block ----------------
    x = x_ref[...].astype(jnp.float32)                                    # (N, D) residual, f32
    xn = _layer_norm(x, g1_ref[...], b1n_ref[...]).astype(compute_dtype)

    # Full-width QKV projection; softmax scale is pre-folded into the Q columns of Wqkv^T.
    # Cast to compute dtype immediately: halves the live (N,3D) intermediate for bf16.
    qkv = jnp.dot(xn, wqkv_ref[...],
                  preferred_element_type=jnp.float32).astype(compute_dtype)  # (N, 3D)

    # Statically-unrolled head loop (static lane offsets, no dynamic slices).
    for h in range(heads):
        q = qkv[:, h * dh:(h + 1) * dh]
        k = qkv[:, D + h * dh:D + (h + 1) * dh]
        v = qkv[:, 2 * D + h * dh:2 * D + (h + 1) * dh]

        # q @ k^T without materializing a transpose of k.
        dots = jax.lax.dot_general(q, k, (((1,), (1,)), ((), ())),
                                   preferred_element_type=jnp.float32)    # (N, N) f32
        dots = dots - jnp.max(dots, axis=-1, keepdims=True)
        p = jnp.exp(dots)                                                 # p <= 1 (bf16-safe)
        inv = _fast_recip(jnp.sum(p, axis=-1, keepdims=True))             # (N, 1) f32
        # Normalize AFTER the PV matmul: multiplies (N,dh), not (N,N).
        ctx_h = jnp.dot(p.astype(compute_dtype), v,
                        preferred_element_type=jnp.float32) * inv         # (N, dh) f32
        ctx_ref[:, h * dh:(h + 1) * dh] = ctx_h.astype(compute_dtype)

    # Single full-width output projection + bias, then residual add (all f32).
    y = jnp.dot(ctx_ref[...], wo_ref[...], preferred_element_type=jnp.float32) + bo_ref[...]
    x = x + y                                                             # (N, D) f32

    # ---------------- FeedForward block ----------------
    xn2 = _layer_norm(x, g2_ref[...], b2n_ref[...]).astype(compute_dtype)
    hidden = jnp.dot(xn2, w1_ref[...], preferred_element_type=jnp.float32) + bh_ref[...]
    hidden = _gelu_exact(hidden).astype(compute_dtype)                    # (N, Hmlp)
    y2 = jnp.dot(hidden, w2_ref[...], preferred_element_type=jnp.float32) + b2_ref[...]
    o_ref[...] = (x + y2).astype(o_ref.dtype)


def _estimate_vmem_bytes(N, D, Hmlp, compute_dtype):
    cb = jnp.dtype(compute_dtype).itemsize
    weights = (D * 3 * D + D * D + D * Hmlp + Hmlp * D) * cb              # resident weights
    io = 2 * 2 * N * D * 4                                                # dbl-buffered in/out f32
    inter = ((N * 3 * D) * cb        # qkv (compute dtype)
             + 2 * N * D * 4         # x / y residual intermediates, f32
             + 2 * N * N * 4         # per-head scores + exp, f32
             + N * D * cb            # ctx scratch
             + 2 * N * Hmlp * 4)     # FFN hidden + GELU, f32
    return weights + io + inter


def _layer_block(x, p, heads, compute_dtype):
    B, N, D = x.shape
    assert D % heads == 0
    dh = D // heads
    Hmlp = p["w1_t"].shape[1]

    kernel = functools.partial(_layer_kernel, heads=heads, dh=dh, compute_dtype=compute_dtype)

    # Raise scoped VMEM above the 16 MiB (v5e) / 32 MiB (v6e,v7x) defaults, sized from the
    # actual footprint (+50% headroom), capped at 96 MiB.  On v7x (64 MiB physical) very
    # large (N, D, mlp_dim) need the flash/N-tiling TODO anyway.
    vmem_limit = int(min(max(1.5 * _estimate_vmem_bytes(N, D, Hmlp, compute_dtype),
                             32 * 1024 * 1024), 96 * 1024 * 1024))

    return pl.pallas_call(
        kernel,
        out_shape=jax.ShapeDtypeStruct((B, N, D), x.dtype),
        grid_spec=pltpu.PrefetchScalarGridSpec(
            num_scalar_prefetch=0,
            grid=(B,),
            in_specs=[
                pl.BlockSpec((None, N, D), lambda b: (b, 0, 0)),   # x (residual stream)
                pl.BlockSpec((1, D), lambda b: (0, 0)),            # LN1 gamma  (resident)
                pl.BlockSpec((1, D), lambda b: (0, 0)),            # LN1 beta   (resident)
                pl.BlockSpec((D, 3 * D), lambda b: (0, 0)),        # Wqkv^T     (resident, scale-folded)
                pl.BlockSpec((D, D), lambda b: (0, 0)),            # Wout^T     (resident)
                pl.BlockSpec((1, D), lambda b: (0, 0)),            # b_out      (resident)
                pl.BlockSpec((1, D), lambda b: (0, 0)),            # LN2 gamma  (resident)
                pl.BlockSpec((1, D), lambda b: (0, 0)),            # LN2 beta   (resident)
                pl.BlockSpec((D, Hmlp), lambda b: (0, 0)),         # W1^T       (resident)
                pl.BlockSpec((1, Hmlp), lambda b: (0, 0)),         # b1         (resident)
                pl.BlockSpec((Hmlp, D), lambda b: (0, 0)),         # W2^T       (resident)
                pl.BlockSpec((1, D), lambda b: (0, 0)),            # b2         (resident)
            ],
            out_specs=pl.BlockSpec((None, N, D), lambda b: (b, 0, 0)),
            scratch_shapes=[pltpu.VMEM((N, D), compute_dtype)],    # per-head ctx assembly
        ),
        compiler_params=pltpu.CompilerParams(
            dimension_semantics=("parallel",),
            vmem_limit_bytes=vmem_limit,
        ),
        input_output_aliases={0: 0},   # residual stream fully overwritten -> reuse buffer
    )(x, p["ln1_g"], p["ln1_b"], p["wqkv_t"], p["wo_t"], p["b_out"],
      p["ln2_g"], p["ln2_b"], p["w1_t"], p["b1"], p["w2_t"], p["b2"])


# ----------------------------------------------------------------------------------
# One-time parameter preparation (transpose, cast, fold softmax scale into Q weights).
# ----------------------------------------------------------------------------------
def prepare_params(layers, compute_dtype):
    prepared = []
    for p in layers:
        D = p["w_qkv"].shape[1]
        Hmlp = p["w1"].shape[0]
        scale = float(D) ** -0.5      # full model dim, faithful to the PyTorch module
        wqkv_t = p["w_qkv"].T                                            # (D, 3D)
        wqkv_t = jnp.concatenate([wqkv_t[:, :D] * scale, wqkv_t[:, D:]], axis=1)
        prepared.append(dict(
            ln1_g=p["ln1_g"].reshape(1, D).astype(jnp.float32),
            ln1_b=p["ln1_b"].reshape(1, D).astype(jnp.float32),
            wqkv_t=wqkv_t.astype(compute_dtype),
            wo_t=p["w_out"].T.astype(compute_dtype),
            b_out=p["b_out"].reshape(1, D).astype(jnp.float32),
            ln2_g=p["ln2_g"].reshape(1, D).astype(jnp.float32),
            ln2_b=p["ln2_b"].reshape(1, D).astype(jnp.float32),
            w1_t=p["w1"].T.astype(compute_dtype),
            b1=p["b1"].reshape(1, Hmlp).astype(jnp.float32),
            w2_t=p["w2"].T.astype(compute_dtype),
            b2=p["b2"].reshape(1, D).astype(jnp.float32),
        ))
    return prepared


# ----------------------------------------------------------------------------------
# Full transformer (depth fused layers), jitted so the per-layer pallas_calls and the
# input/output aliasing are handled inside one XLA program.
# ----------------------------------------------------------------------------------
@functools.partial(jax.jit, static_argnames=("heads", "compute_dtype"))
def dtransformer_pallas(x, prepared_layers, heads, compute_dtype=jnp.bfloat16):
    """x: (B, N, D) float32. prepared_layers: output of prepare_params(...)."""
    for p in prepared_layers:
        x = _layer_block(x, p, heads, compute_dtype)
    return x


# ----------------------------------------------------------------------------------
# Pure-JAX reference (mirrors the PyTorch module exactly, f32 everywhere)
# ----------------------------------------------------------------------------------
def dtransformer_reference(x, layers, heads):
    B, N, D = x.shape
    dh = D // heads
    scale = float(D) ** -0.5
    for p in layers:
        xn = _layer_norm(x, p["ln1_g"], p["ln1_b"])
        qkv = xn @ p["w_qkv"].T
        q, k, v = jnp.split(qkv, 3, axis=-1)
        to_heads = lambda t: t.reshape(B, N, heads, dh).transpose(0, 2, 1, 3)
        q, k, v = map(to_heads, (q, k, v))
        dots = jnp.einsum("bhid,bhjd->bhij", q, k) * scale
        attn = jax.nn.softmax(dots, axis=-1)
        out = jnp.einsum("bhij,bhjd->bhid", attn, v)
        out = out.transpose(0, 2, 1, 3).reshape(B, N, D)
        x = x + out @ p["w_out"].T + p["b_out"]

        xn = _layer_norm(x, p["ln2_g"], p["ln2_b"])
        h = jax.nn.gelu(xn @ p["w1"].T + p["b1"], approximate=False)   # exact erf-GELU
        x = x + h @ p["w2"].T + p["b2"]
    return x


def init_params(key, dim, depth, heads, mlp_dim):
    layers = []
    for _ in range(depth):
        key, *ks = jax.random.split(key, 12)
        layers.append(dict(
            ln1_g=1.0 + 0.1 * jax.random.normal(ks[0], (dim,), jnp.float32),
            ln1_b=0.1 * jax.random.normal(ks[1], (dim,), jnp.float32),
            w_qkv=0.05 * jax.random.normal(ks[2], (3 * dim, dim), jnp.float32),
            w_out=0.05 * jax.random.normal(ks[3], (dim, dim), jnp.float32),
            b_out=0.05 * jax.random.normal(ks[4], (dim,), jnp.float32),
            ln2_g=1.0 + 0.1 * jax.random.normal(ks[5], (dim,), jnp.float32),
            ln2_b=0.1 * jax.random.normal(ks[6], (dim,), jnp.float32),
            w1=0.05 * jax.random.normal(ks[7], (mlp_dim, dim), jnp.float32),
            b1=0.05 * jax.random.normal(ks[8], (mlp_dim,), jnp.float32),
            w2=0.05 * jax.random.normal(ks[9], (dim, mlp_dim), jnp.float32),
            b2=0.05 * jax.random.normal(ks[10], (dim,), jnp.float32),
        ))
    return layers


if __name__ == "__main__":
    B, N, D, H = 2, 8, 32, 8          # batch=2, seq=8, dim=32, heads=8 (dh=4)
    MLP_DIM, DEPTH = 64, 2

    key = jax.random.PRNGKey(0)
    kx, kp = jax.random.split(key)
    x = jax.random.normal(kx, (B, N, D), dtype=jnp.float32)
    layers = init_params(kp, D, DEPTH, H, MLP_DIM)

    y_ref = dtransformer_reference(x, layers, H)

    # f32 compute path (approx+Newton reciprocals and poly-erf are the only approximations).
    prep32 = prepare_params(layers, jnp.float32)
    y32 = jax.block_until_ready(
        dtransformer_pallas(x, prep32, heads=H, compute_dtype=jnp.float32))
    assert y32.shape == (B, N, D)
    assert jnp.allclose(y32, y_ref, atol=5e-3, rtol=5e-3), "f32 kernel mismatch vs reference"

    # Default bf16-operand path (f32 accumulation): tolerance covers bf16 operand rounding.
    prep16 = prepare_params(layers, jnp.bfloat16)
    y16 = jax.block_until_ready(
        dtransformer_pallas(x, prep16, heads=H, compute_dtype=jnp.bfloat16))
    assert y16.shape == (B, N, D)
    assert jnp.allclose(y16, y_ref, atol=5e-2, rtol=5e-2), "bf16 kernel mismatch vs reference"

    print("KERNEL_OK")
</pallas_src>

<mosaic_0001>
module attributes {stable_mosaic.version = 11 : i64} {
  func.func @_layer_kernel(%arg0: i32, %arg1: memref<1x8x32xf32, #tpu.memory_space<vmem>>, %arg2: memref<1x32xf32, #tpu.memory_space<vmem>>, %arg3: memref<1x32xf32, #tpu.memory_space<vmem>>, %arg4: memref<32x96xf32, #tpu.memory_space<vmem>>, %arg5: memref<32x32xf32, #tpu.memory_space<vmem>>, %arg6: memref<1x32xf32, #tpu.memory_space<vmem>>, %arg7: memref<1x32xf32, #tpu.memory_space<vmem>>, %arg8: memref<1x32xf32, #tpu.memory_space<vmem>>, %arg9: memref<32x64xf32, #tpu.memory_space<vmem>>, %arg10: memref<1x64xf32, #tpu.memory_space<vmem>>, %arg11: memref<64x32xf32, #tpu.memory_space<vmem>>, %arg12: memref<1x32xf32, #tpu.memory_space<vmem>>, %arg13: memref<1x8x32xf32, #tpu.memory_space<vmem>>, %arg14: memref<8x32xf32, #tpu.memory_space<vmem>>) attributes {dimension_semantics = [#tpu.dimension_semantics<parallel>], iteration_bounds = array<i64: 2>, scalar_prefetch = 0 : i64, scratch_operands = 1 : i64, tpu.core_type = #tpu.core_type<tc>, window_params = [{transform_indices = @transform_0, window_bounds = array<i64: 1, 8, 32>}, {pipeline_mode = #tpu.pipeline_mode<synchronous>, transform_indices = @transform_1, window_bounds = array<i64: 1, 32>}, {pipeline_mode = #tpu.pipeline_mode<synchronous>, transform_indices = @transform_2, window_bounds = array<i64: 1, 32>}, {pipeline_mode = #tpu.pipeline_mode<synchronous>, transform_indices = @transform_3, window_bounds = array<i64: 32, 96>}, {pipeline_mode = #tpu.pipeline_mode<synchronous>, transform_indices = @transform_4, window_bounds = array<i64: 32, 32>}, {pipeline_mode = #tpu.pipeline_mode<synchronous>, transform_indices = @transform_5, window_bounds = array<i64: 1, 32>}, {pipeline_mode = #tpu.pipeline_mode<synchronous>, transform_indices = @transform_6, window_bounds = array<i64: 1, 32>}, {pipeline_mode = #tpu.pipeline_mode<synchronous>, transform_indices = @transform_7, window_bounds = array<i64: 1, 32>}, {pipeline_mode = #tpu.pipeline_mode<synchronous>, transform_indices = @transform_8, window_bounds = array<i64: 32, 64>}, {pipeline_mode = #tpu.pipeline_mode<synchronous>, transform_indices = @transform_9, window_bounds = array<i64: 1, 64>}, {pipeline_mode = #tpu.pipeline_mode<synchronous>, transform_indices = @transform_10, window_bounds = array<i64: 64, 32>}, {pipeline_mode = #tpu.pipeline_mode<synchronous>, transform_indices = @transform_11, window_bounds = array<i64: 1, 32>}, {transform_indices = @transform_12, window_bounds = array<i64: 1, 8, 32>}]} {
    %c0 = arith.constant 0 : index
    %c0_0 = arith.constant 0 : index
    %c0_1 = arith.constant 0 : index
    %0 = vector.load %arg1[%c0, %c0_0, %c0_1] : memref<1x8x32xf32, #tpu.memory_space<vmem>>, vector<1x8x32xf32>
    %1 = vector.shape_cast %0 : vector<1x8x32xf32> to vector<8x32xf32>
    %c0_2 = arith.constant 0 : index
    %c0_3 = arith.constant 0 : index
    %2 = vector.load %arg2[%c0_2, %c0_3] : memref<1x32xf32, #tpu.memory_space<vmem>>, vector<1x32xf32>
    %c0_4 = arith.constant 0 : index
    %c0_5 = arith.constant 0 : index
    %3 = vector.load %arg3[%c0_4, %c0_5] : memref<1x32xf32, #tpu.memory_space<vmem>>, vector<1x32xf32>
    %cst = arith.constant dense<0.000000e+00> : vector<8xf32>
    %4 = vector.multi_reduction <add>, %1, %cst [1] : vector<8x32xf32> to vector<8xf32>
    %5 = vector.shape_cast %4 : vector<8xf32> to vector<8x1xf32>
    %cst_6 = arith.constant 3.200000e+01 : f32
    %6 = vector.broadcast %cst_6 : f32 to vector<8x1xf32>
    %7 = arith.divf %5, %6 : vector<8x1xf32>
    %8 = vector.broadcast %7 : vector<8x1xf32> to vector<8x32xf32>
    %9 = arith.subf %1, %8 : vector<8x32xf32>
    %10 = arith.mulf %9, %9 : vector<8x32xf32>
    %cst_7 = arith.constant dense<0.000000e+00> : vector<8xf32>
    %11 = vector.multi_reduction <add>, %10, %cst_7 [1] : vector<8x32xf32> to vector<8xf32>
    %12 = vector.shape_cast %11 : vector<8xf32> to vector<8x1xf32>
    %cst_8 = arith.constant 3.200000e+01 : f32
    %13 = vector.broadcast %cst_8 : f32 to vector<8x1xf32>
    %14 = arith.divf %12, %13 : vector<8x1xf32>
    %cst_9 = arith.constant 9.99999974E-6 : f32
    %15 = vector.broadcast %cst_9 : f32 to vector<8x1xf32>
    %16 = arith.addf %14, %15 : vector<8x1xf32>
    %17 = math.rsqrt %16 : vector<8x1xf32>
    %18 = vector.broadcast %17 : vector<8x1xf32> to vector<8x32xf32>
    %19 = arith.mulf %9, %18 : vector<8x32xf32>
    %20 = vector.broadcast %2 : vector<1x32xf32> to vector<8x32xf32>
    %21 = arith.mulf %19, %20 : vector<8x32xf32>
    %22 = vector.broadcast %3 : vector<1x32xf32> to vector<8x32xf32>
    %23 = arith.addf %21, %22 : vector<8x32xf32>
    %c0_10 = arith.constant 0 : index
    %c0_11 = arith.constant 0 : index
    %24 = vector.load %arg4[%c0_10, %c0_11] : memref<32x96xf32, #tpu.memory_space<vmem>>, vector<32x96xf32>
    %cst_12 = arith.constant dense<0.000000e+00> : vector<8x96xf32>
    %25 = tpu.matmul %23, %24, %cst_12 {dimension_numbers = #tpu.dot_dimension_numbers<[1], [0], [0], [1], [0, 0, 1, 1], [], []>} : vector<8x32xf32>, vector<32x96xf32>, vector<8x96xf32> -> vector<8x96xf32>
    %26 = vector.extract_strided_slice %25 {offsets = [0, 0], sizes = [8, 4], strides = [1, 1]} : vector<8x96xf32> to vector<8x4xf32>
    %27 = vector.extract_strided_slice %25 {offsets = [0, 32], sizes = [8, 4], strides = [1, 1]} : vector<8x96xf32> to vector<8x4xf32>
    %28 = vector.extract_strided_slice %25 {offsets = [0, 64], sizes = [8, 4], strides = [1, 1]} : vector<8x96xf32> to vector<8x4xf32>
    %cst_13 = arith.constant dense<0.000000e+00> : vector<8x8xf32>
    %29 = tpu.matmul %26, %27, %cst_13 {dimension_numbers = #tpu.dot_dimension_numbers<[1], [1], [0], [0], [0, 0, 1, 0], [], []>} : vector<8x4xf32>, vector<8x4xf32>, vector<8x8xf32> -> vector<8x8xf32>
    %cst_14 = arith.constant dense<0xFF800000> : vector<8xf32>
    %30 = vector.multi_reduction <maximumf>, %29, %cst_14 [1] : vector<8x8xf32> to vector<8xf32>
    %31 = vector.shape_cast %30 : vector<8xf32> to vector<8x1xf32>
    %32 = vector.broadcast %31 : vector<8x1xf32> to vector<8x8xf32>
    %33 = arith.subf %29, %32 : vector<8x8xf32>
    %34 = math.exp %33 : vector<8x8xf32>
    %cst_15 = arith.constant dense<0.000000e+00> : vector<8xf32>
    %35 = vector.multi_reduction <add>, %34, %cst_15 [1] : vector<8x8xf32> to vector<8xf32>
    %36 = vector.shape_cast %35 : vector<8xf32> to vector<8x1xf32>
    %37 = tpu.reciprocal %36 {approx = true} : vector<8x1xf32> -> vector<8x1xf32>
    %38 = arith.mulf %36, %37 : vector<8x1xf32>
    %cst_16 = arith.constant 2.000000e+00 : f32
    %39 = vector.broadcast %cst_16 : f32 to vector<8x1xf32>
    %40 = arith.subf %39, %38 : vector<8x1xf32>
    %41 = arith.mulf %37, %40 : vector<8x1xf32>
    %cst_17 = arith.constant dense<0.000000e+00> : vector<8x4xf32>
    %42 = tpu.matmul %34, %28, %cst_17 {dimension_numbers = #tpu.dot_dimension_numbers<[1], [0], [0], [1], [0, 0, 1, 1], [], []>} : vector<8x8xf32>, vector<8x4xf32>, vector<8x4xf32> -> vector<8x4xf32>
    %43 = vector.broadcast %41 : vector<8x1xf32> to vector<8x4xf32>
    %44 = arith.mulf %42, %43 : vector<8x4xf32>
    %c0_18 = arith.constant 0 : index
    %c0_19 = arith.constant 0 : index
    %45 = vector.load %arg14[%c0_18, %c0_19] : memref<8x32xf32, #tpu.memory_space<vmem>>, vector<8x4xf32>
    tpu.vector_store %arg14[%c0_18, %c0_19], %44 {strides = array<i32>} : memref<8x32xf32, #tpu.memory_space<vmem>>, vector<8x4xf32>,
    %46 = vector.extract_strided_slice %25 {offsets = [0, 4], sizes = [8, 4], strides = [1, 1]} : vector<8x96xf32> to vector<8x4xf32>
    %47 = vector.extract_strided_slice %25 {offsets = [0, 36], sizes = [8, 4], strides = [1, 1]} : vector<8x96xf32> to vector<8x4xf32>
    %48 = vector.extract_strided_slice %25 {offsets = [0, 68], sizes = [8, 4], strides = [1, 1]} : vector<8x96xf32> to vector<8x4xf32>
    %cst_20 = arith.constant dense<0.000000e+00> : vector<8x8xf32>
    %49 = tpu.matmul %46, %47, %cst_20 {dimension_numbers = #tpu.dot_dimension_numbers<[1], [1], [0], [0], [0, 0, 1, 0], [], []>} : vector<8x4xf32>, vector<8x4xf32>, vector<8x8xf32> -> vector<8x8xf32>
    %cst_21 = arith.constant dense<0xFF800000> : vector<8xf32>
    %50 = vector.multi_reduction <maximumf>, %49, %cst_21 [1] : vector<8x8xf32> to vector<8xf32>
    %51 = vector.shape_cast %50 : vector<8xf32> to vector<8x1xf32>
    %52 = vector.broadcast %51 : vector<8x1xf32> to vector<8x8xf32>
    %53 = arith.subf %49, %52 : vector<8x8xf32>
    %54 = math.exp %53 : vector<8x8xf32>
    %cst_22 = arith.constant dense<0.000000e+00> : vector<8xf32>
    %55 = vector.multi_reduction <add>, %54, %cst_22 [1] : vector<8x8xf32> to vector<8xf32>
    %56 = vector.shape_cast %55 : vector<8xf32> to vector<8x1xf32>
    %57 = tpu.reciprocal %56 {approx = true} : vector<8x1xf32> -> vector<8x1xf32>
    %58 = arith.mulf %56, %57 : vector<8x1xf32>
    %cst_23 = arith.constant 2.000000e+00 : f32
    %59 = vector.broadcast %cst_23 : f32 to vector<8x1xf32>
    %60 = arith.subf %59, %58 : vector<8x1xf32>
    %61 = arith.mulf %57, %60 : vector<8x1xf32>
    %cst_24 = arith.constant dense<0.000000e+00> : vector<8x4xf32>
    %62 = tpu.matmul %54, %48, %cst_24 {dimension_numbers = #tpu.dot_dimension_numbers<[1], [0], [0], [1], [0, 0, 1, 1], [], []>} : vector<8x8xf32>, vector<8x4xf32>, vector<8x4xf32> -> vector<8x4xf32>
    %63 = vector.broadcast %61 : vector<8x1xf32> to vector<8x4xf32>
    %64 = arith.mulf %62, %63 : vector<8x4xf32>
    %c0_25 = arith.constant 0 : index
    %c4 = arith.constant 4 : index
    %65 = vector.load %arg14[%c0_25, %c4] : memref<8x32xf32, #tpu.memory_space<vmem>>, vector<8x4xf32>
    tpu.vector_store %arg14[%c0_25, %c4], %64 {strides = array<i32>} : memref<8x32xf32, #tpu.memory_space<vmem>>, vector<8x4xf32>,
    %66 = vector.extract_strided_slice %25 {offsets = [0, 8], sizes = [8, 4], strides = [1, 1]} : vector<8x96xf32> to vector<8x4xf32>
    %67 = vector.extract_strided_slice %25 {offsets = [0, 40], sizes = [8, 4], strides = [1, 1]} : vector<8x96xf32> to vector<8x4xf32>
    %68 = vector.extract_strided_slice %25 {offsets = [0, 72], sizes = [8, 4], strides = [1, 1]} : vector<8x96xf32> to vector<8x4xf32>
    %cst_26 = arith.constant dense<0.000000e+00> : vector<8x8xf32>
    %69 = tpu.matmul %66, %67, %cst_26 {dimension_numbers = #tpu.dot_dimension_numbers<[1], [1], [0], [0], [0, 0, 1, 0], [], []>} : vector<8x4xf32>, vector<8x4xf32>, vector<8x8xf32> -> vector<8x8xf32>
    %cst_27 = arith.constant dense<0xFF800000> : vector<8xf32>
    %70 = vector.multi_reduction <maximumf>, %69, %cst_27 [1] : vector<8x8xf32> to vector<8xf32>
    %71 = vector.shape_cast %70 : vector<8xf32> to vector<8x1xf32>
    %72 = vector.broadcast %71 : vector<8x1xf32> to vector<8x8xf32>
    %73 = arith.subf %69, %72 : vector<8x8xf32>
    %74 = math.exp %73 : vector<8x8xf32>
    %cst_28 = arith.constant dense<0.000000e+00> : vector<8xf32>
    %75 = vector.multi_reduction <add>, %74, %cst_28 [1] : vector<8x8xf32> to vector<8xf32>
    %76 = vector.shape_cast %75 : vector<8xf32> to vector<8x1xf32>
    %77 = tpu.reciprocal %76 {approx = true} : vector<8x1xf32> -> vector<8x1xf32>
    %78 = arith.mulf %76, %77 : vector<8x1xf32>
    %cst_29 = arith.constant 2.000000e+00 : f32
    %79 = vector.broadcast %cst_29 : f32 to vector<8x1xf32>
    %80 = arith.subf %79, %78 : vector<8x1xf32>
    %81 = arith.mulf %77, %80 : vector<8x1xf32>
    %cst_30 = arith.constant dense<0.000000e+00> : vector<8x4xf32>
    %82 = tpu.matmul %74, %68, %cst_30 {dimension_numbers = #tpu.dot_dimension_numbers<[1], [0], [0], [1], [0, 0, 1, 1], [], []>} : vector<8x8xf32>, vector<8x4xf32>, vector<8x4xf32> -> vector<8x4xf32>
    %83 = vector.broadcast %81 : vector<8x1xf32> to vector<8x4xf32>
    %84 = arith.mulf %82, %83 : vector<8x4xf32>
    %c0_31 = arith.constant 0 : index
    %c8 = arith.constant 8 : index
    %85 = vector.load %arg14[%c0_31, %c8] : memref<8x32xf32, #tpu.memory_space<vmem>>, vector<8x4xf32>
    tpu.vector_store %arg14[%c0_31, %c8], %84 {strides = array<i32>} : memref<8x32xf32, #tpu.memory_space<vmem>>, vector<8x4xf32>,
    %86 = vector.extract_strided_slice %25 {offsets = [0, 12], sizes = [8, 4], strides = [1, 1]} : vector<8x96xf32> to vector<8x4xf32>
    %87 = vector.extract_strided_slice %25 {offsets = [0, 44], sizes = [8, 4], strides = [1, 1]} : vector<8x96xf32> to vector<8x4xf32>
    %88 = vector.extract_strided_slice %25 {offsets = [0, 76], sizes = [8, 4], strides = [1, 1]} : vector<8x96xf32> to vector<8x4xf32>
    %cst_32 = arith.constant dense<0.000000e+00> : vector<8x8xf32>
    %89 = tpu.matmul %86, %87, %cst_32 {dimension_numbers = #tpu.dot_dimension_numbers<[1], [1], [0], [0], [0, 0, 1, 0], [], []>} : vector<8x4xf32>, vector<8x4xf32>, vector<8x8xf32> -> vector<8x8xf32>
    %cst_33 = arith.constant dense<0xFF800000> : vector<8xf32>
    %90 = vector.multi_reduction <maximumf>, %89, %cst_33 [1] : vector<8x8xf32> to vector<8xf32>
    %91 = vector.shape_cast %90 : vector<8xf32> to vector<8x1xf32>
    %92 = vector.broadcast %91 : vector<8x1xf32> to vector<8x8xf32>
    %93 = arith.subf %89, %92 : vector<8x8xf32>
    %94 = math.exp %93 : vector<8x8xf32>
    %cst_34 = arith.constant dense<0.000000e+00> : vector<8xf32>
    %95 = vector.multi_reduction <add>, %94, %cst_34 [1] : vector<8x8xf32> to vector<8xf32>
    %96 = vector.shape_cast %95 : vector<8xf32> to vector<8x1xf32>
    %97 = tpu.reciprocal %96 {approx = true} : vector<8x1xf32> -> vector<8x1xf32>
    %98 = arith.mulf %96, %97 : vector<8x1xf32>
    %cst_35 = arith.constant 2.000000e+00 : f32
    %99 = vector.broadcast %cst_35 : f32 to vector<8x1xf32>
    %100 = arith.subf %99, %98 : vector<8x1xf32>
    %101 = arith.mulf %97, %100 : vector<8x1xf32>
    %cst_36 = arith.constant dense<0.000000e+00> : vector<8x4xf32>
    %102 = tpu.matmul %94, %88, %cst_36 {dimension_numbers = #tpu.dot_dimension_numbers<[1], [0], [0], [1], [0, 0, 1, 1], [], []>} : vector<8x8xf32>, vector<8x4xf32>, vector<8x4xf32> -> vector<8x4xf32>
    %103 = vector.broadcast %101 : vector<8x1xf32> to vector<8x4xf32>
    %104 = arith.mulf %102, %103 : vector<8x4xf32>
    %c0_37 = arith.constant 0 : index
    %c12 = arith.constant 12 : index
    %105 = vector.load %arg14[%c0_37, %c12] : memref<8x32xf32, #tpu.memory_space<vmem>>, vector<8x4xf32>
    tpu.vector_store %arg14[%c0_37, %c12], %104 {strides = array<i32>} : memref<8x32xf32, #tpu.memory_space<vmem>>, vector<8x4xf32>,
    %106 = vector.extract_strided_slice %25 {offsets = [0, 16], sizes = [8, 4], strides = [1, 1]} : vector<8x96xf32> to vector<8x4xf32>
    %107 = vector.extract_strided_slice %25 {offsets = [0, 48], sizes = [8, 4], strides = [1, 1]} : vector<8x96xf32> to vector<8x4xf32>
    %108 = vector.extract_strided_slice %25 {offsets = [0, 80], sizes = [8, 4], strides = [1, 1]} : vector<8x96xf32> to vector<8x4xf32>
    %cst_38 = arith.constant dense<0.000000e+00> : vector<8x8xf32>
    %109 = tpu.matmul %106, %107, %cst_38 {dimension_numbers = #tpu.dot_dimension_numbers<[1], [1], [0], [0], [0, 0, 1, 0], [], []>} : vector<8x4xf32>, vector<8x4xf32>, vector<8x8xf32> -> vector<8x8xf32>
    %cst_39 = arith.constant dense<0xFF800000> : vector<8xf32>
    %110 = vector.multi_reduction <maximumf>, %109, %cst_39 [1] : vector<8x8xf32> to vector<8xf32>
    %111 = vector.shape_cast %110 : vector<8xf32> to vector<8x1xf32>
    %112 = vector.broadcast %111 : vector<8x1xf32> to vector<8x8xf32>
    %113 = arith.subf %109, %112 : vector<8x8xf32>
    %114 = math.exp %113 : vector<8x8xf32>
    %cst_40 = arith.constant dense<0.000000e+00> : vector<8xf32>
    %115 = vector.multi_reduction <add>, %114, %cst_40 [1] : vector<8x8xf32> to vector<8xf32>
    %116 = vector.shape_cast %115 : vector<8xf32> to vector<8x1xf32>
    %117 = tpu.reciprocal %116 {approx = true} : vector<8x1xf32> -> vector<8x1xf32>
    %118 = arith.mulf %116, %117 : vector<8x1xf32>
    %cst_41 = arith.constant 2.000000e+00 : f32
    %119 = vector.broadcast %cst_41 : f32 to vector<8x1xf32>
    %120 = arith.subf %119, %118 : vector<8x1xf32>
    %121 = arith.mulf %117, %120 : vector<8x1xf32>
    %cst_42 = arith.constant dense<0.000000e+00> : vector<8x4xf32>
    %122 = tpu.matmul %114, %108, %cst_42 {dimension_numbers = #tpu.dot_dimension_numbers<[1], [0], [0], [1], [0, 0, 1, 1], [], []>} : vector<8x8xf32>, vector<8x4xf32>, vector<8x4xf32> -> vector<8x4xf32>
    %123 = vector.broadcast %121 : vector<8x1xf32> to vector<8x4xf32>
    %124 = arith.mulf %122, %123 : vector<8x4xf32>
    %c0_43 = arith.constant 0 : index
    %c16 = arith.constant 16 : index
    %125 = vector.load %arg14[%c0_43, %c16] : memref<8x32xf32, #tpu.memory_space<vmem>>, vector<8x4xf32>
    tpu.vector_store %arg14[%c0_43, %c16], %124 {strides = array<i32>} : memref<8x32xf32, #tpu.memory_space<vmem>>, vector<8x4xf32>,
    %126 = vector.extract_strided_slice %25 {offsets = [0, 20], sizes = [8, 4], strides = [1, 1]} : vector<8x96xf32> to vector<8x4xf32>
    %127 = vector.extract_strided_slice %25 {offsets = [0, 52], sizes = [8, 4], strides = [1, 1]} : vector<8x96xf32> to vector<8x4xf32>
    %128 = vector.extract_strided_slice %25 {offsets = [0, 84], sizes = [8, 4], strides = [1, 1]} : vector<8x96xf32> to vector<8x4xf32>
    %cst_44 = arith.constant dense<0.000000e+00> : vector<8x8xf32>
    %129 = tpu.matmul %126, %127, %cst_44 {dimension_numbers = #tpu.dot_dimension_numbers<[1], [1], [0], [0], [0, 0, 1, 0], [], []>} : vector<8x4xf32>, vector<8x4xf32>, vector<8x8xf32> -> vector<8x8xf32>
    %cst_45 = arith.constant dense<0xFF800000> : vector<8xf32>
    %130 = vector.multi_reduction <maximumf>, %129, %cst_45 [1] : vector<8x8xf32> to vector<8xf32>
    %131 = vector.shape_cast %130 : vector<8xf32> to vector<8x1xf32>
    %132 = vector.broadcast %131 : vector<8x1xf32> to vector<8x8xf32>
    %133 = arith.subf %129, %132 : vector<8x8xf32>
    %134 = math.exp %133 : vector<8x8xf32>
    %cst_46 = arith.constant dense<0.000000e+00> : vector<8xf32>
    %135 = vector.multi_reduction <add>, %134, %cst_46 [1] : vector<8x8xf32> to vector<8xf32>
    %136 = vector.shape_cast %135 : vector<8xf32> to vector<8x1xf32>
    %137 = tpu.reciprocal %136 {approx = true} : vector<8x1xf32> -> vector<8x1xf32>
    %138 = arith.mulf %136, %137 : vector<8x1xf32>
    %cst_47 = arith.constant 2.000000e+00 : f32
    %139 = vector.broadcast %cst_47 : f32 to vector<8x1xf32>
    %140 = arith.subf %139, %138 : vector<8x1xf32>
    %141 = arith.mulf %137, %140 : vector<8x1xf32>
    %cst_48 = arith.constant dense<0.000000e+00> : vector<8x4xf32>
    %142 = tpu.matmul %134, %128, %cst_48 {dimension_numbers = #tpu.dot_dimension_numbers<[1], [0], [0], [1], [0, 0, 1, 1], [], []>} : vector<8x8xf32>, vector<8x4xf32>, vector<8x4xf32> -> vector<8x4xf32>
    %143 = vector.broadcast %141 : vector<8x1xf32> to vector<8x4xf32>
    %144 = arith.mulf %142, %143 : vector<8x4xf32>
    %c0_49 = arith.constant 0 : index
    %c20 = arith.constant 20 : index
    %145 = vector.load %arg14[%c0_49, %c20] : memref<8x32xf32, #tpu.memory_space<vmem>>, vector<8x4xf32>
    tpu.vector_store %arg14[%c0_49, %c20], %144 {strides = array<i32>} : memref<8x32xf32, #tpu.memory_space<vmem>>, vector<8x4xf32>,
    %146 = vector.extract_strided_slice %25 {offsets = [0, 24], sizes = [8, 4], strides = [1, 1]} : vector<8x96xf32> to vector<8x4xf32>
    %147 = vector.extract_strided_slice %25 {offsets = [0, 56], sizes = [8, 4], strides = [1, 1]} : vector<8x96xf32> to vector<8x4xf32>
    %148 = vector.extract_strided_slice %25 {offsets = [0, 88], sizes = [8, 4], strides = [1, 1]} : vector<8x96xf32> to vector<8x4xf32>
    %cst_50 = arith.constant dense<0.000000e+00> : vector<8x8xf32>
    %149 = tpu.matmul %146, %147, %cst_50 {dimension_numbers = #tpu.dot_dimension_numbers<[1], [1], [0], [0], [0, 0, 1, 0], [], []>} : vector<8x4xf32>, vector<8x4xf32>, vector<8x8xf32> -> vector<8x8xf32>
    %cst_51 = arith.constant dense<0xFF800000> : vector<8xf32>
    %150 = vector.multi_reduction <maximumf>, %149, %cst_51 [1] : vector<8x8xf32> to vector<8xf32>
    %151 = vector.shape_cast %150 : vector<8xf32> to vector<8x1xf32>
    %152 = vector.broadcast %151 : vector<8x1xf32> to vector<8x8xf32>
    %153 = arith.subf %149, %152 : vector<8x8xf32>
    %154 = math.exp %153 : vector<8x8xf32>
    %cst_52 = arith.constant dense<0.000000e+00> : vector<8xf32>
    %155 = vector.multi_reduction <add>, %154, %cst_52 [1] : vector<8x8xf32> to vector<8xf32>
    %156 = vector.shape_cast %155 : vector<8xf32> to vector<8x1xf32>
    %157 = tpu.reciprocal %156 {approx = true} : vector<8x1xf32> -> vector<8x1xf32>
    %158 = arith.mulf %156, %157 : vector<8x1xf32>
    %cst_53 = arith.constant 2.000000e+00 : f32
    %159 = vector.broadcast %cst_53 : f32 to vector<8x1xf32>
    %160 = arith.subf %159, %158 : vector<8x1xf32>
    %161 = arith.mulf %157, %160 : vector<8x1xf32>
    %cst_54 = arith.constant dense<0.000000e+00> : vector<8x4xf32>
    %162 = tpu.matmul %154, %148, %cst_54 {dimension_numbers = #tpu.dot_dimension_numbers<[1], [0], [0], [1], [0, 0, 1, 1], [], []>} : vector<8x8xf32>, vector<8x4xf32>, vector<8x4xf32> -> vector<8x4xf32>
    %163 = vector.broadcast %161 : vector<8x1xf32> to vector<8x4xf32>
    %164 = arith.mulf %162, %163 : vector<8x4xf32>
    %c0_55 = arith.constant 0 : index
    %c24 = arith.constant 24 : index
    %165 = vector.load %arg14[%c0_55, %c24] : memref<8x32xf32, #tpu.memory_space<vmem>>, vector<8x4xf32>
    tpu.vector_store %arg14[%c0_55, %c24], %164 {strides = array<i32>} : memref<8x32xf32, #tpu.memory_space<vmem>>, vector<8x4xf32>,
    %166 = vector.extract_strided_slice %25 {offsets = [0, 28], sizes = [8, 4], strides = [1, 1]} : vector<8x96xf32> to vector<8x4xf32>
    %167 = vector.extract_strided_slice %25 {offsets = [0, 60], sizes = [8, 4], strides = [1, 1]} : vector<8x96xf32> to vector<8x4xf32>
    %168 = vector.extract_strided_slice %25 {offsets = [0, 92], sizes = [8, 4], strides = [1, 1]} : vector<8x96xf32> to vector<8x4xf32>
    %cst_56 = arith.constant dense<0.000000e+00> : vector<8x8xf32>
    %169 = tpu.matmul %166, %167, %cst_56 {dimension_numbers = #tpu.dot_dimension_numbers<[1], [1], [0], [0], [0, 0, 1, 0], [], []>} : vector<8x4xf32>, vector<8x4xf32>, vector<8x8xf32> -> vector<8x8xf32>
    %cst_57 = arith.constant dense<0xFF800000> : vector<8xf32>
    %170 = vector.multi_reduction <maximumf>, %169, %cst_57 [1] : vector<8x8xf32> to vector<8xf32>
    %171 = vector.shape_cast %170 : vector<8xf32> to vector<8x1xf32>
    %172 = vector.broadcast %171 : vector<8x1xf32> to vector<8x8xf32>
    %173 = arith.subf %169, %172 : vector<8x8xf32>
    %174 = math.exp %173 : vector<8x8xf32>
    %cst_58 = arith.constant dense<0.000000e+00> : vector<8xf32>
    %175 = vector.multi_reduction <add>, %174, %cst_58 [1] : vector<8x8xf32> to vector<8xf32>
    %176 = vector.shape_cast %175 : vector<8xf32> to vector<8x1xf32>
    %177 = tpu.reciprocal %176 {approx = true} : vector<8x1xf32> -> vector<8x1xf32>
    %178 = arith.mulf %176, %177 : vector<8x1xf32>
    %cst_59 = arith.constant 2.000000e+00 : f32
    %179 = vector.broadcast %cst_59 : f32 to vector<8x1xf32>
    %180 = arith.subf %179, %178 : vector<8x1xf32>
    %181 = arith.mulf %177, %180 : vector<8x1xf32>
    %cst_60 = arith.constant dense<0.000000e+00> : vector<8x4xf32>
    %182 = tpu.matmul %174, %168, %cst_60 {dimension_numbers = #tpu.dot_dimension_numbers<[1], [0], [0], [1], [0, 0, 1, 1], [], []>} : vector<8x8xf32>, vector<8x4xf32>, vector<8x4xf32> -> vector<8x4xf32>
    %183 = vector.broadcast %181 : vector<8x1xf32> to vector<8x4xf32>
    %184 = arith.mulf %182, %183 : vector<8x4xf32>
    %c0_61 = arith.constant 0 : index
    %c28 = arith.constant 28 : index
    %185 = vector.load %arg14[%c0_61, %c28] : memref<8x32xf32, #tpu.memory_space<vmem>>, vector<8x4xf32>
    tpu.vector_store %arg14[%c0_61, %c28], %184 {strides = array<i32>} : memref<8x32xf32, #tpu.memory_space<vmem>>, vector<8x4xf32>,
    %c0_62 = arith.constant 0 : index
    %c0_63 = arith.constant 0 : index
    %186 = vector.load %arg14[%c0_62, %c0_63] : memref<8x32xf32, #tpu.memory_space<vmem>>, vector<8x32xf32>
    %c0_64 = arith.constant 0 : index
    %c0_65 = arith.constant 0 : index
    %187 = vector.load %arg5[%c0_64, %c0_65] : memref<32x32xf32, #tpu.memory_space<vmem>>, vector<32x32xf32>
    %cst_66 = arith.constant dense<0.000000e+00> : vector<8x32xf32>
    %188 = tpu.matmul %186, %187, %cst_66 {dimension_numbers = #tpu.dot_dimension_numbers<[1], [0], [0], [1], [0, 0, 1, 1], [], []>} : vector<8x32xf32>, vector<32x32xf32>, vector<8x32xf32> -> vector<8x32xf32>
    %c0_67 = arith.constant 0 : index
    %c0_68 = arith.constant 0 : index
    %189 = vector.load %arg6[%c0_67, %c0_68] : memref<1x32xf32, #tpu.memory_space<vmem>>, vector<1x32xf32>
    %190 = vector.broadcast %189 : vector<1x32xf32> to vector<8x32xf32>
    %191 = arith.addf %188, %190 : vector<8x32xf32>
    %192 = arith.addf %1, %191 : vector<8x32xf32>
    %c0_69 = arith.constant 0 : index
    %c0_70 = arith.constant 0 : index
    %193 = vector.load %arg7[%c0_69, %c0_70] : memref<1x32xf32, #tpu.memory_space<vmem>>, vector<1x32xf32>
    %c0_71 = arith.constant 0 : index
    %c0_72 = arith.constant 0 : index
    %194 = vector.load %arg8[%c0_71, %c0_72] : memref<1x32xf32, #tpu.memory_space<vmem>>, vector<1x32xf32>
    %cst_73 = arith.constant dense<0.000000e+00> : vector<8xf32>
    %195 = vector.multi_reduction <add>, %192, %cst_73 [1] : vector<8x32xf32> to vector<8xf32>
    %196 = vector.shape_cast %195 : vector<8xf32> to vector<8x1xf32>
    %cst_74 = arith.constant 3.200000e+01 : f32
    %197 = vector.broadcast %cst_74 : f32 to vector<8x1xf32>
    %198 = arith.divf %196, %197 : vector<8x1xf32>
    %199 = vector.broadcast %198 : vector<8x1xf32> to vector<8x32xf32>
    %200 = arith.subf %192, %199 : vector<8x32xf32>
    %201 = arith.mulf %200, %200 : vector<8x32xf32>
    %cst_75 = arith.constant dense<0.000000e+00> : vector<8xf32>
    %202 = vector.multi_reduction <add>, %201, %cst_75 [1] : vector<8x32xf32> to vector<8xf32>
    %203 = vector.shape_cast %202 : vector<8xf32> to vector<8x1xf32>
    %cst_76 = arith.constant 3.200000e+01 : f32
    %204 = vector.broadcast %cst_76 : f32 to vector<8x1xf32>
    %205 = arith.divf %203, %204 : vector<8x1xf32>
    %cst_77 = arith.constant 9.99999974E-6 : f32
    %206 = vector.broadcast %cst_77 : f32 to vector<8x1xf32>
    %207 = arith.addf %205, %206 : vector<8x1xf32>
    %208 = math.rsqrt %207 : vector<8x1xf32>
    %209 = vector.broadcast %208 : vector<8x1xf32> to vector<8x32xf32>
    %210 = arith.mulf %200, %209 : vector<8x32xf32>
    %211 = vector.broadcast %193 : vector<1x32xf32> to vector<8x32xf32>
    %212 = arith.mulf %210, %211 : vector<8x32xf32>
    %213 = vector.broadcast %194 : vector<1x32xf32> to vector<8x32xf32>
    %214 = arith.addf %212, %213 : vector<8x32xf32>
    %c0_78 = arith.constant 0 : index
    %c0_79 = arith.constant 0 : index
    %215 = vector.load %arg9[%c0_78, %c0_79] : memref<32x64xf32, #tpu.memory_space<vmem>>, vector<32x64xf32>
    %cst_80 = arith.constant dense<0.000000e+00> : vector<8x64xf32>
    %216 = tpu.matmul %214, %215, %cst_80 {dimension_numbers = #tpu.dot_dimension_numbers<[1], [0], [0], [1], [0, 0, 1, 1], [], []>} : vector<8x32xf32>, vector<32x64xf32>, vector<8x64xf32> -> vector<8x64xf32>
    %c0_81 = arith.constant 0 : index
    %c0_82 = arith.constant 0 : index
    %217 = vector.load %arg10[%c0_81, %c0_82] : memref<1x64xf32, #tpu.memory_space<vmem>>, vector<1x64xf32>
    %218 = vector.broadcast %217 : vector<1x64xf32> to vector<8x64xf32>
    %219 = arith.addf %216, %218 : vector<8x64xf32>
    %cst_83 = arith.constant 5.000000e-01 : f32
    %220 = vector.broadcast %cst_83 : f32 to vector<8x64xf32>
    %221 = arith.mulf %220, %219 : vector<8x64xf32>
    %cst_84 = arith.constant 0.707106769 : f32
    %222 = vector.broadcast %cst_84 : f32 to vector<8x64xf32>
    %223 = arith.mulf %219, %222 : vector<8x64xf32>
    %224 = math.absf %223 : vector<8x64xf32>
    %cst_85 = arith.constant 0.327591091 : f32
    %225 = vector.broadcast %cst_85 : f32 to vector<8x64xf32>
    %226 = arith.mulf %225, %224 : vector<8x64xf32>
    %cst_86 = arith.constant 1.000000e+00 : f32
    %227 = vector.broadcast %cst_86 : f32 to vector<8x64xf32>
    %228 = arith.addf %227, %226 : vector<8x64xf32>
    %229 = tpu.reciprocal %228 {approx = true} : vector<8x64xf32> -> vector<8x64xf32>
    %230 = arith.mulf %228, %229 : vector<8x64xf32>
    %cst_87 = arith.constant 2.000000e+00 : f32
    %231 = vector.broadcast %cst_87 : f32 to vector<8x64xf32>
    %232 = arith.subf %231, %230 : vector<8x64xf32>
    %233 = arith.mulf %229, %232 : vector<8x64xf32>
    %cst_88 = arith.constant 1.06140542 : f32
    %234 = vector.broadcast %cst_88 : f32 to vector<8x64xf32>
    %235 = arith.mulf %234, %233 : vector<8x64xf32>
    %cst_89 = arith.constant -1.45315206 : f32
    %236 = vector.broadcast %cst_89 : f32 to vector<8x64xf32>
    %237 = arith.addf %235, %236 : vector<8x64xf32>
    %238 = arith.mulf %237, %233 : vector<8x64xf32>
    %cst_90 = arith.constant 1.42141378 : f32
    %239 = vector.broadcast %cst_90 : f32 to vector<8x64xf32>
    %240 = arith.addf %238, %239 : vector<8x64xf32>
    %241 = arith.mulf %240, %233 : vector<8x64xf32>
    %cst_91 = arith.constant -0.284496725 : f32
    %242 = vector.broadcast %cst_91 : f32 to vector<8x64xf32>
    %243 = arith.addf %241, %242 : vector<8x64xf32>
    %244 = arith.mulf %243, %233 : vector<8x64xf32>
    %cst_92 = arith.constant 0.254829586 : f32
    %245 = vector.broadcast %cst_92 : f32 to vector<8x64xf32>
    %246 = arith.addf %244, %245 : vector<8x64xf32>
    %247 = arith.mulf %246, %233 : vector<8x64xf32>
    %cst_93 = arith.constant 0.000000e+00 : f32
    %248 = vector.broadcast %cst_93 : f32 to vector<8x64xf32>
    %249 = arith.subf %248, %224 : vector<8x64xf32>
    %250 = arith.mulf %249, %224 : vector<8x64xf32>
    %251 = math.exp %250 : vector<8x64xf32>
    %252 = arith.mulf %247, %251 : vector<8x64xf32>
    %cst_94 = arith.constant 1.000000e+00 : f32
    %253 = vector.broadcast %cst_94 : f32 to vector<8x64xf32>
    %254 = arith.subf %253, %252 : vector<8x64xf32>
    %cst_95 = arith.constant 0.000000e+00 : f32
    %255 = vector.broadcast %cst_95 : f32 to vector<8x64xf32>
    %256 = arith.cmpf oge, %223, %255 : vector<8x64xf32>
    %cst_96 = arith.constant 0.000000e+00 : f32
    %257 = vector.broadcast %cst_96 : f32 to vector<8x64xf32>
    %258 = arith.subf %257, %254 : vector<8x64xf32>
    %259 = arith.select %256, %254, %258 : vector<8x64xi1>, vector<8x64xf32>
    %cst_97 = arith.constant 1.000000e+00 : f32
    %260 = vector.broadcast %cst_97 : f32 to vector<8x64xf32>
    %261 = arith.addf %260, %259 : vector<8x64xf32>
    %262 = arith.mulf %221, %261 : vector<8x64xf32>
    %c0_98 = arith.constant 0 : index
    %c0_99 = arith.constant 0 : index
    %263 = vector.load %arg11[%c0_98, %c0_99] : memref<64x32xf32, #tpu.memory_space<vmem>>, vector<64x32xf32>
    %cst_100 = arith.constant dense<0.000000e+00> : vector<8x32xf32>
    %264 = tpu.matmul %262, %263, %cst_100 {dimension_numbers = #tpu.dot_dimension_numbers<[1], [0], [0], [1], [0, 0, 1, 1], [], []>} : vector<8x64xf32>, vector<64x32xf32>, vector<8x32xf32> -> vector<8x32xf32>
    %c0_101 = arith.constant 0 : index
    %c0_102 = arith.constant 0 : index
    %265 = vector.load %arg12[%c0_101, %c0_102] : memref<1x32xf32, #tpu.memory_space<vmem>>, vector<1x32xf32>
    %266 = vector.broadcast %265 : vector<1x32xf32> to vector<8x32xf32>
    %267 = arith.addf %264, %266 : vector<8x32xf32>
    %268 = arith.addf %192, %267 : vector<8x32xf32>
    %c0_103 = arith.constant 0 : index
    %c0_104 = arith.constant 0 : index
    %c0_105 = arith.constant 0 : index
    %269 = vector.load %arg13[%c0_103, %c0_104, %c0_105] : memref<1x8x32xf32, #tpu.memory_space<vmem>>, vector<1x8x32xf32>
    %270 = vector.shape_cast %269 : vector<1x8x32xf32> to vector<8x32xf32>
    %271 = vector.shape_cast %268 : vector<8x32xf32> to vector<1x8x32xf32>
    tpu.vector_store %arg13[%c0_103, %c0_104, %c0_105], %271 {strides = array<i32>} : memref<1x8x32xf32, #tpu.memory_space<vmem>>, vector<1x8x32xf32>,
    return
  }
  func.func @transform_0(%arg0: i32) -> (i32, i32, i32) {
    %c0_i32 = arith.constant 0 : i32
    %c0_i32_0 = arith.constant 0 : i32
    %c0_i32_1 = arith.constant 0 : i32
    return %arg0, %c0_i32, %c0_i32_0 : i32, i32, i32
  }
  func.func @transform_1(%arg0: i32) -> (i32, i32) {
    %c0_i32 = arith.constant 0 : i32
    %c0_i32_0 = arith.constant 0 : i32
    %c0_i32_1 = arith.constant 0 : i32
    return %c0_i32, %c0_i32_0 : i32, i32
  }
  func.func @transform_2(%arg0: i32) -> (i32, i32) {
    %c0_i32 = arith.constant 0 : i32
    %c0_i32_0 = arith.constant 0 : i32
    %c0_i32_1 = arith.constant 0 : i32
    return %c0_i32, %c0_i32_0 : i32, i32
  }
  func.func @transform_3(%arg0: i32) -> (i32, i32) {
    %c0_i32 = arith.constant 0 : i32
    %c0_i32_0 = arith.constant 0 : i32
    %c0_i32_1 = arith.constant 0 : i32
    return %c0_i32, %c0_i32_0 : i32, i32
  }
  func.func @transform_4(%arg0: i32) -> (i32, i32) {
    %c0_i32 = arith.constant 0 : i32
    %c0_i32_0 = arith.constant 0 : i32
    %c0_i32_1 = arith.constant 0 : i32
    return %c0_i32, %c0_i32_0 : i32, i32
  }
  func.func @transform_5(%arg0: i32) -> (i32, i32) {
    %c0_i32 = arith.constant 0 : i32
    %c0_i32_0 = arith.constant 0 : i32
    %c0_i32_1 = arith.constant 0 : i32
    return %c0_i32, %c0_i32_0 : i32, i32
  }
  func.func @transform_6(%arg0: i32) -> (i32, i32) {
    %c0_i32 = arith.constant 0 : i32
    %c0_i32_0 = arith.constant 0 : i32
    %c0_i32_1 = arith.constant 0 : i32
    return %c0_i32, %c0_i32_0 : i32, i32
  }
  func.func @transform_7(%arg0: i32) -> (i32, i32) {
    %c0_i32 = arith.constant 0 : i32
    %c0_i32_0 = arith.constant 0 : i32
    %c0_i32_1 = arith.constant 0 : i32
    return %c0_i32, %c0_i32_0 : i32, i32
  }
  func.func @transform_8(%arg0: i32) -> (i32, i32) {
    %c0_i32 = arith.constant 0 : i32
    %c0_i32_0 = arith.constant 0 : i32
    %c0_i32_1 = arith.constant 0 : i32
    return %c0_i32, %c0_i32_0 : i32, i32
  }
  func.func @transform_9(%arg0: i32) -> (i32, i32) {
    %c0_i32 = arith.constant 0 : i32
    %c0_i32_0 = arith.constant 0 : i32
    %c0_i32_1 = arith.constant 0 : i32
    return %c0_i32, %c0_i32_0 : i32, i32
  }
  func.func @transform_10(%arg0: i32) -> (i32, i32) {
    %c0_i32 = arith.constant 0 : i32
    %c0_i32_0 = arith.constant 0 : i32
    %c0_i32_1 = arith.constant 0 : i32
    return %c0_i32, %c0_i32_0 : i32, i32
  }
  func.func @transform_11(%arg0: i32) -> (i32, i32) {
    %c0_i32 = arith.constant 0 : i32
    %c0_i32_0 = arith.constant 0 : i32
    %c0_i32_1 = arith.constant 0 : i32
    return %c0_i32, %c0_i32_0 : i32, i32
  }
  func.func @transform_12(%arg0: i32) -> (i32, i32, i32) {
    %c0_i32 = arith.constant 0 : i32
    %c0_i32_0 = arith.constant 0 : i32
    %c0_i32_1 = arith.constant 0 : i32
    return %arg0, %c0_i32, %c0_i32_0 : i32, i32, i32
  }
}

module attributes {stable_mosaic.version = 11 : i64} {
  func.func @_layer_kernel(%arg0: i32, %arg1: memref<1x8x32xf32, #tpu.memory_space<vmem>>, %arg2: memref<1x32xf32, #tpu.memory_space<vmem>>, %arg3: memref<1x32xf32, #tpu.memory_space<vmem>>, %arg4: memref<32x96xf32, #tpu.memory_space<vmem>>, %arg5: memref<32x32xf32, #tpu.memory_space<vmem>>, %arg6: memref<1x32xf32, #tpu.memory_space<vmem>>, %arg7: memref<1x32xf32, #tpu.memory_space<vmem>>, %arg8: memref<1x32xf32, #tpu.memory_space<vmem>>, %arg9: memref<32x64xf32, #tpu.memory_space<vmem>>, %arg10: memref<1x64xf32, #tpu.memory_space<vmem>>, %arg11: memref<64x32xf32, #tpu.memory_space<vmem>>, %arg12: memref<1x32xf32, #tpu.memory_space<vmem>>, %arg13: memref<1x8x32xf32, #tpu.memory_space<vmem>>, %arg14: memref<8x32xf32, #tpu.memory_space<vmem>>) attributes {dimension_semantics = [#tpu.dimension_semantics<parallel>], iteration_bounds = array<i64: 2>, scalar_prefetch = 0 : i64, scratch_operands = 1 : i64, tpu.core_type = #tpu.core_type<tc>, window_params = [{transform_indices = @transform_0, window_bounds = array<i64: 1, 8, 32>}, {pipeline_mode = #tpu.pipeline_mode<synchronous>, transform_indices = @transform_1, window_bounds = array<i64: 1, 32>}, {pipeline_mode = #tpu.pipeline_mode<synchronous>, transform_indices = @transform_2, window_bounds = array<i64: 1, 32>}, {pipeline_mode = #tpu.pipeline_mode<synchronous>, transform_indices = @transform_3, window_bounds = array<i64: 32, 96>}, {pipeline_mode = #tpu.pipeline_mode<synchronous>, transform_indices = @transform_4, window_bounds = array<i64: 32, 32>}, {pipeline_mode = #tpu.pipeline_mode<synchronous>, transform_indices = @transform_5, window_bounds = array<i64: 1, 32>}, {pipeline_mode = #tpu.pipeline_mode<synchronous>, transform_indices = @transform_6, window_bounds = array<i64: 1, 32>}, {pipeline_mode = #tpu.pipeline_mode<synchronous>, transform_indices = @transform_7, window_bounds = array<i64: 1, 32>}, {pipeline_mode = #tpu.pipeline_mode<synchronous>, transform_indices = @transform_8, window_bounds = array<i64: 32, 64>}, {pipeline_mode = #tpu.pipeline_mode<synchronous>, transform_indices = @transform_9, window_bounds = array<i64: 1, 64>}, {pipeline_mode = #tpu.pipeline_mode<synchronous>, transform_indices = @transform_10, window_bounds = array<i64: 64, 32>}, {pipeline_mode = #tpu.pipeline_mode<synchronous>, transform_indices = @transform_11, window_bounds = array<i64: 1, 32>}, {transform_indices = @transform_12, window_bounds = array<i64: 1, 8, 32>}]} {
    %c0 = arith.constant 0 : index
    %c0_0 = arith.constant 0 : index
    %c0_1 = arith.constant 0 : index
    %0 = vector.load %arg1[%c0, %c0_0, %c0_1] : memref<1x8x32xf32, #tpu.memory_space<vmem>>, vector<1x8x32xf32>
    %1 = vector.shape_cast %0 : vector<1x8x32xf32> to vector<8x32xf32>
    %c0_2 = arith.constant 0 : index
    %c0_3 = arith.constant 0 : index
    %2 = vector.load %arg2[%c0_2, %c0_3] : memref<1x32xf32, #tpu.memory_space<vmem>>, vector<1x32xf32>
    %c0_4 = arith.constant 0 : index
    %c0_5 = arith.constant 0 : index
    %3 = vector.load %arg3[%c0_4, %c0_5] : memref<1x32xf32, #tpu.memory_space<vmem>>, vector<1x32xf32>
    %cst = arith.constant dense<0.000000e+00> : vector<8xf32>
    %4 = vector.multi_reduction <add>, %1, %cst [1] : vector<8x32xf32> to vector<8xf32>
    %5 = vector.shape_cast %4 : vector<8xf32> to vector<8x1xf32>
    %cst_6 = arith.constant 3.200000e+01 : f32
    %6 = vector.broadcast %cst_6 : f32 to vector<8x1xf32>
    %7 = arith.divf %5, %6 : vector<8x1xf32>
    %8 = vector.broadcast %7 : vector<8x1xf32> to vector<8x32xf32>
    %9 = arith.subf %1, %8 : vector<8x32xf32>
    %10 = arith.mulf %9, %9 : vector<8x32xf32>
    %cst_7 = arith.constant dense<0.000000e+00> : vector<8xf32>
    %11 = vector.multi_reduction <add>, %10, %cst_7 [1] : vector<8x32xf32> to vector<8xf32>
    %12 = vector.shape_cast %11 : vector<8xf32> to vector<8x1xf32>
    %cst_8 = arith.constant 3.200000e+01 : f32
    %13 = vector.broadcast %cst_8 : f32 to vector<8x1xf32>
    %14 = arith.divf %12, %13 : vector<8x1xf32>
    %cst_9 = arith.constant 9.99999974E-6 : f32
    %15 = vector.broadcast %cst_9 : f32 to vector<8x1xf32>
    %16 = arith.addf %14, %15 : vector<8x1xf32>
    %17 = math.rsqrt %16 : vector<8x1xf32>
    %18 = vector.broadcast %17 : vector<8x1xf32> to vector<8x32xf32>
    %19 = arith.mulf %9, %18 : vector<8x32xf32>
    %20 = vector.broadcast %2 : vector<1x32xf32> to vector<8x32xf32>
    %21 = arith.mulf %19, %20 : vector<8x32xf32>
    %22 = vector.broadcast %3 : vector<1x32xf32> to vector<8x32xf32>
    %23 = arith.addf %21, %22 : vector<8x32xf32>
    %c0_10 = arith.constant 0 : index
    %c0_11 = arith.constant 0 : index
    %24 = vector.load %arg4[%c0_10, %c0_11] : memref<32x96xf32, #tpu.memory_space<vmem>>, vector<32x96xf32>
    %cst_12 = arith.constant dense<0.000000e+00> : vector<8x96xf32>
    %25 = tpu.matmul %23, %24, %cst_12 {dimension_numbers = #tpu.dot_dimension_numbers<[1], [0], [0], [1], [0, 0, 1, 1], [], []>} : vector<8x32xf32>, vector<32x96xf32>, vector<8x96xf32> -> vector<8x96xf32>
    %26 = vector.extract_strided_slice %25 {offsets = [0, 0], sizes = [8, 4], strides = [1, 1]} : vector<8x96xf32> to vector<8x4xf32>
    %27 = vector.extract_strided_slice %25 {offsets = [0, 32], sizes = [8, 4], strides = [1, 1]} : vector<8x96xf32> to vector<8x4xf32>
    %28 = vector.extract_strided_slice %25 {offsets = [0, 64], sizes = [8, 4], strides = [1, 1]} : vector<8x96xf32> to vector<8x4xf32>
    %cst_13 = arith.constant dense<0.000000e+00> : vector<8x8xf32>
    %29 = tpu.matmul %26, %27, %cst_13 {dimension_numbers = #tpu.dot_dimension_numbers<[1], [1], [0], [0], [0, 0, 1, 0], [], []>} : vector<8x4xf32>, vector<8x4xf32>, vector<8x8xf32> -> vector<8x8xf32>
    %cst_14 = arith.constant dense<0xFF800000> : vector<8xf32>
    %30 = vector.multi_reduction <maximumf>, %29, %cst_14 [1] : vector<8x8xf32> to vector<8xf32>
    %31 = vector.shape_cast %30 : vector<8xf32> to vector<8x1xf32>
    %32 = vector.broadcast %31 : vector<8x1xf32> to vector<8x8xf32>
    %33 = arith.subf %29, %32 : vector<8x8xf32>
    %34 = math.exp %33 : vector<8x8xf32>
    %cst_15 = arith.constant dense<0.000000e+00> : vector<8xf32>
    %35 = vector.multi_reduction <add>, %34, %cst_15 [1] : vector<8x8xf32> to vector<8xf32>
    %36 = vector.shape_cast %35 : vector<8xf32> to vector<8x1xf32>
    %37 = tpu.reciprocal %36 {approx = true} : vector<8x1xf32> -> vector<8x1xf32>
    %38 = arith.mulf %36, %37 : vector<8x1xf32>
    %cst_16 = arith.constant 2.000000e+00 : f32
    %39 = vector.broadcast %cst_16 : f32 to vector<8x1xf32>
    %40 = arith.subf %39, %38 : vector<8x1xf32>
    %41 = arith.mulf %37, %40 : vector<8x1xf32>
    %cst_17 = arith.constant dense<0.000000e+00> : vector<8x4xf32>
    %42 = tpu.matmul %34, %28, %cst_17 {dimension_numbers = #tpu.dot_dimension_numbers<[1], [0], [0], [1], [0, 0, 1, 1], [], []>} : vector<8x8xf32>, vector<8x4xf32>, vector<8x4xf32> -> vector<8x4xf32>
    %43 = vector.broadcast %41 : vector<8x1xf32> to vector<8x4xf32>
    %44 = arith.mulf %42, %43 : vector<8x4xf32>
    %c0_18 = arith.constant 0 : index
    %c0_19 = arith.constant 0 : index
    %45 = vector.load %arg14[%c0_18, %c0_19] : memref<8x32xf32, #tpu.memory_space<vmem>>, vector<8x4xf32>
    tpu.vector_store %arg14[%c0_18, %c0_19], %44 {strides = array<i32>} : memref<8x32xf32, #tpu.memory_space<vmem>>, vector<8x4xf32>,
    %46 = vector.extract_strided_slice %25 {offsets = [0, 4], sizes = [8, 4], strides = [1, 1]} : vector<8x96xf32> to vector<8x4xf32>
    %47 = vector.extract_strided_slice %25 {offsets = [0, 36], sizes = [8, 4], strides = [1, 1]} : vector<8x96xf32> to vector<8x4xf32>
    %48 = vector.extract_strided_slice %25 {offsets = [0, 68], sizes = [8, 4], strides = [1, 1]} : vector<8x96xf32> to vector<8x4xf32>
    %cst_20 = arith.constant dense<0.000000e+00> : vector<8x8xf32>
    %49 = tpu.matmul %46, %47, %cst_20 {dimension_numbers = #tpu.dot_dimension_numbers<[1], [1], [0], [0], [0, 0, 1, 0], [], []>} : vector<8x4xf32>, vector<8x4xf32>, vector<8x8xf32> -> vector<8x8xf32>
    %cst_21 = arith.constant dense<0xFF800000> : vector<8xf32>
    %50 = vector.multi_reduction <maximumf>, %49, %cst_21 [1] : vector<8x8xf32> to vector<8xf32>
    %51 = vector.shape_cast %50 : vector<8xf32> to vector<8x1xf32>
    %52 = vector.broadcast %51 : vector<8x1xf32> to vector<8x8xf32>
    %53 = arith.subf %49, %52 : vector<8x8xf32>
    %54 = math.exp %53 : vector<8x8xf32>
    %cst_22 = arith.constant dense<0.000000e+00> : vector<8xf32>
    %55 = vector.multi_reduction <add>, %54, %cst_22 [1] : vector<8x8xf32> to vector<8xf32>
    %56 = vector.shape_cast %55 : vector<8xf32> to vector<8x1xf32>
    %57 = tpu.reciprocal %56 {approx = true} : vector<8x1xf32> -> vector<8x1xf32>
    %58 = arith.mulf %56, %57 : vector<8x1xf32>
    %cst_23 = arith.constant 2.000000e+00 : f32
    %59 = vector.broadcast %cst_23 : f32 to vector<8x1xf32>
    %60 = arith.subf %59, %58 : vector<8x1xf32>
    %61 = arith.mulf %57, %60 : vector<8x1xf32>
    %cst_24 = arith.constant dense<0.000000e+00> : vector<8x4xf32>
    %62 = tpu.matmul %54, %48, %cst_24 {dimension_numbers = #tpu.dot_dimension_numbers<[1], [0], [0], [1], [0, 0, 1, 1], [], []>} : vector<8x8xf32>, vector<8x4xf32>, vector<8x4xf32> -> vector<8x4xf32>
    %63 = vector.broadcast %61 : vector<8x1xf32> to vector<8x4xf32>
    %64 = arith.mulf %62, %63 : vector<8x4xf32>
    %c0_25 = arith.constant 0 : index
    %c4 = arith.constant 4 : index
    %65 = vector.load %arg14[%c0_25, %c4] : memref<8x32xf32, #tpu.memory_space<vmem>>, vector<8x4xf32>
    tpu.vector_store %arg14[%c0_25, %c4], %64 {strides = array<i32>} : memref<8x32xf32, #tpu.memory_space<vmem>>, vector<8x4xf32>,
    %66 = vector.extract_strided_slice %25 {offsets = [0, 8], sizes = [8, 4], strides = [1, 1]} : vector<8x96xf32> to vector<8x4xf32>
    %67 = vector.extract_strided_slice %25 {offsets = [0, 40], sizes = [8, 4], strides = [1, 1]} : vector<8x96xf32> to vector<8x4xf32>
    %68 = vector.extract_strided_slice %25 {offsets = [0, 72], sizes = [8, 4], strides = [1, 1]} : vector<8x96xf32> to vector<8x4xf32>
    %cst_26 = arith.constant dense<0.000000e+00> : vector<8x8xf32>
    %69 = tpu.matmul %66, %67, %cst_26 {dimension_numbers = #tpu.dot_dimension_numbers<[1], [1], [0], [0], [0, 0, 1, 0], [], []>} : vector<8x4xf32>, vector<8x4xf32>, vector<8x8xf32> -> vector<8x8xf32>
    %cst_27 = arith.constant dense<0xFF800000> : vector<8xf32>
    %70 = vector.multi_reduction <maximumf>, %69, %cst_27 [1] : vector<8x8xf32> to vector<8xf32>
    %71 = vector.shape_cast %70 : vector<8xf32> to vector<8x1xf32>
    %72 = vector.broadcast %71 : vector<8x1xf32> to vector<8x8xf32>
    %73 = arith.subf %69, %72 : vector<8x8xf32>
    %74 = math.exp %73 : vector<8x8xf32>
    %cst_28 = arith.constant dense<0.000000e+00> : vector<8xf32>
    %75 = vector.multi_reduction <add>, %74, %cst_28 [1] : vector<8x8xf32> to vector<8xf32>
    %76 = vector.shape_cast %75 : vector<8xf32> to vector<8x1xf32>
    %77 = tpu.reciprocal %76 {approx = true} : vector<8x1xf32> -> vector<8x1xf32>
    %78 = arith.mulf %76, %77 : vector<8x1xf32>
    %cst_29 = arith.constant 2.000000e+00 : f32
    %79 = vector.broadcast %cst_29 : f32 to vector<8x1xf32>
    %80 = arith.subf %79, %78 : vector<8x1xf32>
    %81 = arith.mulf %77, %80 : vector<8x1xf32>
    %cst_30 = arith.constant dense<0.000000e+00> : vector<8x4xf32>
    %82 = tpu.matmul %74, %68, %cst_30 {dimension_numbers = #tpu.dot_dimension_numbers<[1], [0], [0], [1], [0, 0, 1, 1], [], []>} : vector<8x8xf32>, vector<8x4xf32>, vector<8x4xf32> -> vector<8x4xf32>
    %83 = vector.broadcast %81 : vector<8x1xf32> to vector<8x4xf32>
    %84 = arith.mulf %82, %83 : vector<8x4xf32>
    %c0_31 = arith.constant 0 : index
    %c8 = arith.constant 8 : index
    %85 = vector.load %arg14[%c0_31, %c8] : memref<8x32xf32, #tpu.memory_space<vmem>>, vector<8x4xf32>
    tpu.vector_store %arg14[%c0_31, %c8], %84 {strides = array<i32>} : memref<8x32xf32, #tpu.memory_space<vmem>>, vector<8x4xf32>,
    %86 = vector.extract_strided_slice %25 {offsets = [0, 12], sizes = [8, 4], strides = [1, 1]} : vector<8x96xf32> to vector<8x4xf32>
    %87 = vector.extract_strided_slice %25 {offsets = [0, 44], sizes = [8, 4], strides = [1, 1]} : vector<8x96xf32> to vector<8x4xf32>
    %88 = vector.extract_strided_slice %25 {offsets = [0, 76], sizes = [8, 4], strides = [1, 1]} : vector<8x96xf32> to vector<8x4xf32>
    %cst_32 = arith.constant dense<0.000000e+00> : vector<8x8xf32>
    %89 = tpu.matmul %86, %87, %cst_32 {dimension_numbers = #tpu.dot_dimension_numbers<[1], [1], [0], [0], [0, 0, 1, 0], [], []>} : vector<8x4xf32>, vector<8x4xf32>, vector<8x8xf32> -> vector<8x8xf32>
    %cst_33 = arith.constant dense<0xFF800000> : vector<8xf32>
    %90 = vector.multi_reduction <maximumf>, %89, %cst_33 [1] : vector<8x8xf32> to vector<8xf32>
    %91 = vector.shape_cast %90 : vector<8xf32> to vector<8x1xf32>
    %92 = vector.broadcast %91 : vector<8x1xf32> to vector<8x8xf32>
    %93 = arith.subf %89, %92 : vector<8x8xf32>
    %94 = math.exp %93 : vector<8x8xf32>
    %cst_34 = arith.constant dense<0.000000e+00> : vector<8xf32>
    %95 = vector.multi_reduction <add>, %94, %cst_34 [1] : vector<8x8xf32> to vector<8xf32>
    %96 = vector.shape_cast %95 : vector<8xf32> to vector<8x1xf32>
    %97 = tpu.reciprocal %96 {approx = true} : vector<8x1xf32> -> vector<8x1xf32>
    %98 = arith.mulf %96, %97 : vector<8x1xf32>
    %cst_35 = arith.constant 2.000000e+00 : f32
    %99 = vector.broadcast %cst_35 : f32 to vector<8x1xf32>
    %100 = arith.subf %99, %98 : vector<8x1xf32>
    %101 = arith.mulf %97, %100 : vector<8x1xf32>
    %cst_36 = arith.constant dense<0.000000e+00> : vector<8x4xf32>
    %102 = tpu.matmul %94, %88, %cst_36 {dimension_numbers = #tpu.dot_dimension_numbers<[1], [0], [0], [1], [0, 0, 1, 1], [], []>} : vector<8x8xf32>, vector<8x4xf32>, vector<8x4xf32> -> vector<8x4xf32>
    %103 = vector.broadcast %101 : vector<8x1xf32> to vector<8x4xf32>
    %104 = arith.mulf %102, %103 : vector<8x4xf32>
    %c0_37 = arith.constant 0 : index
    %c12 = arith.constant 12 : index
    %105 = vector.load %arg14[%c0_37, %c12] : memref<8x32xf32, #tpu.memory_space<vmem>>, vector<8x4xf32>
    tpu.vector_store %arg14[%c0_37, %c12], %104 {strides = array<i32>} : memref<8x32xf32, #tpu.memory_space<vmem>>, vector<8x4xf32>,
    %106 = vector.extract_strided_slice %25 {offsets = [0, 16], sizes = [8, 4], strides = [1, 1]} : vector<8x96xf32> to vector<8x4xf32>
    %107 = vector.extract_strided_slice %25 {offsets = [0, 48], sizes = [8, 4], strides = [1, 1]} : vector<8x96xf32> to vector<8x4xf32>
    %108 = vector.extract_strided_slice %25 {offsets = [0, 80], sizes = [8, 4], strides = [1, 1]} : vector<8x96xf32> to vector<8x4xf32>
    %cst_38 = arith.constant dense<0.000000e+00> : vector<8x8xf32>
    %109 = tpu.matmul %106, %107, %cst_38 {dimension_numbers = #tpu.dot_dimension_numbers<[1], [1], [0], [0], [0, 0, 1, 0], [], []>} : vector<8x4xf32>, vector<8x4xf32>, vector<8x8xf32> -> vector<8x8xf32>
    %cst_39 = arith.constant dense<0xFF800000> : vector<8xf32>
    %110 = vector.multi_reduction <maximumf>, %109, %cst_39 [1] : vector<8x8xf32> to vector<8xf32>
    %111 = vector.shape_cast %110 : vector<8xf32> to vector<8x1xf32>
    %112 = vector.broadcast %111 : vector<8x1xf32> to vector<8x8xf32>
    %113 = arith.subf %109, %112 : vector<8x8xf32>
    %114 = math.exp %113 : vector<8x8xf32>
    %cst_40 = arith.constant dense<0.000000e+00> : vector<8xf32>
    %115 = vector.multi_reduction <add>, %114, %cst_40 [1] : vector<8x8xf32> to vector<8xf32>
    %116 = vector.shape_cast %115 : vector<8xf32> to vector<8x1xf32>
    %117 = tpu.reciprocal %116 {approx = true} : vector<8x1xf32> -> vector<8x1xf32>
    %118 = arith.mulf %116, %117 : vector<8x1xf32>
    %cst_41 = arith.constant 2.000000e+00 : f32
    %119 = vector.broadcast %cst_41 : f32 to vector<8x1xf32>
    %120 = arith.subf %119, %118 : vector<8x1xf32>
    %121 = arith.mulf %117, %120 : vector<8x1xf32>
    %cst_42 = arith.constant dense<0.000000e+00> : vector<8x4xf32>
    %122 = tpu.matmul %114, %108, %cst_42 {dimension_numbers = #tpu.dot_dimension_numbers<[1], [0], [0], [1], [0, 0, 1, 1], [], []>} : vector<8x8xf32>, vector<8x4xf32>, vector<8x4xf32> -> vector<8x4xf32>
    %123 = vector.broadcast %121 : vector<8x1xf32> to vector<8x4xf32>
    %124 = arith.mulf %122, %123 : vector<8x4xf32>
    %c0_43 = arith.constant 0 : index
    %c16 = arith.constant 16 : index
    %125 = vector.load %arg14[%c0_43, %c16] : memref<8x32xf32, #tpu.memory_space<vmem>>, vector<8x4xf32>
    tpu.vector_store %arg14[%c0_43, %c16], %124 {strides = array<i32>} : memref<8x32xf32, #tpu.memory_space<vmem>>, vector<8x4xf32>,
    %126 = vector.extract_strided_slice %25 {offsets = [0, 20], sizes = [8, 4], strides = [1, 1]} : vector<8x96xf32> to vector<8x4xf32>
    %127 = vector.extract_strided_slice %25 {offsets = [0, 52], sizes = [8, 4], strides = [1, 1]} : vector<8x96xf32> to vector<8x4xf32>
    %128 = vector.extract_strided_slice %25 {offsets = [0, 84], sizes = [8, 4], strides = [1, 1]} : vector<8x96xf32> to vector<8x4xf32>
    %cst_44 = arith.constant dense<0.000000e+00> : vector<8x8xf32>
    %129 = tpu.matmul %126, %127, %cst_44 {dimension_numbers = #tpu.dot_dimension_numbers<[1], [1], [0], [0], [0, 0, 1, 0], [], []>} : vector<8x4xf32>, vector<8x4xf32>, vector<8x8xf32> -> vector<8x8xf32>
    %cst_45 = arith.constant dense<0xFF800000> : vector<8xf32>
    %130 = vector.multi_reduction <maximumf>, %129, %cst_45 [1] : vector<8x8xf32> to vector<8xf32>
    %131 = vector.shape_cast %130 : vector<8xf32> to vector<8x1xf32>
    %132 = vector.broadcast %131 : vector<8x1xf32> to vector<8x8xf32>
    %133 = arith.subf %129, %132 : vector<8x8xf32>
    %134 = math.exp %133 : vector<8x8xf32>
    %cst_46 = arith.constant dense<0.000000e+00> : vector<8xf32>
    %135 = vector.multi_reduction <add>, %134, %cst_46 [1] : vector<8x8xf32> to vector<8xf32>
    %136 = vector.shape_cast %135 : vector<8xf32> to vector<8x1xf32>
    %137 = tpu.reciprocal %136 {approx = true} : vector<8x1xf32> -> vector<8x1xf32>
    %138 = arith.mulf %136, %137 : vector<8x1xf32>
    %cst_47 = arith.constant 2.000000e+00 : f32
    %139 = vector.broadcast %cst_47 : f32 to vector<8x1xf32>
    %140 = arith.subf %139, %138 : vector<8x1xf32>
    %141 = arith.mulf %137, %140 : vector<8x1xf32>
    %cst_48 = arith.constant dense<0.000000e+00> : vector<8x4xf32>
    %142 = tpu.matmul %134, %128, %cst_48 {dimension_numbers = #tpu.dot_dimension_numbers<[1], [0], [0], [1], [0, 0, 1, 1], [], []>} : vector<8x8xf32>, vector<8x4xf32>, vector<8x4xf32> -> vector<8x4xf32>
    %143 = vector.broadcast %141 : vector<8x1xf32> to vector<8x4xf32>
    %144 = arith.mulf %142, %143 : vector<8x4xf32>
    %c0_49 = arith.constant 0 : index
    %c20 = arith.constant 20 : index
    %145 = vector.load %arg14[%c0_49, %c20] : memref<8x32xf32, #tpu.memory_space<vmem>>, vector<8x4xf32>
    tpu.vector_store %arg14[%c0_49, %c20], %144 {strides = array<i32>} : memref<8x32xf32, #tpu.memory_space<vmem>>, vector<8x4xf32>,
    %146 = vector.extract_strided_slice %25 {offsets = [0, 24], sizes = [8, 4], strides = [1, 1]} : vector<8x96xf32> to vector<8x4xf32>
    %147 = vector.extract_strided_slice %25 {offsets = [0, 56], sizes = [8, 4], strides = [1, 1]} : vector<8x96xf32> to vector<8x4xf32>
    %148 = vector.extract_strided_slice %25 {offsets = [0, 88], sizes = [8, 4], strides = [1, 1]} : vector<8x96xf32> to vector<8x4xf32>
    %cst_50 = arith.constant dense<0.000000e+00> : vector<8x8xf32>
    %149 = tpu.matmul %146, %147, %cst_50 {dimension_numbers = #tpu.dot_dimension_numbers<[1], [1], [0], [0], [0, 0, 1, 0], [], []>} : vector<8x4xf32>, vector<8x4xf32>, vector<8x8xf32> -> vector<8x8xf32>
    %cst_51 = arith.constant dense<0xFF800000> : vector<8xf32>
    %150 = vector.multi_reduction <maximumf>, %149, %cst_51 [1] : vector<8x8xf32> to vector<8xf32>
    %151 = vector.shape_cast %150 : vector<8xf32> to vector<8x1xf32>
    %152 = vector.broadcast %151 : vector<8x1xf32> to vector<8x8xf32>
    %153 = arith.subf %149, %152 : vector<8x8xf32>
    %154 = math.exp %153 : vector<8x8xf32>
    %cst_52 = arith.constant dense<0.000000e+00> : vector<8xf32>
    %155 = vector.multi_reduction <add>, %154, %cst_52 [1] : vector<8x8xf32> to vector<8xf32>
    %156 = vector.shape_cast %155 : vector<8xf32> to vector<8x1xf32>
    %157 = tpu.reciprocal %156 {approx = true} : vector<8x1xf32> -> vector<8x1xf32>
    %158 = arith.mulf %156, %157 : vector<8x1xf32>
    %cst_53 = arith.constant 2.000000e+00 : f32
    %159 = vector.broadcast %cst_53 : f32 to vector<8x1xf32>
    %160 = arith.subf %159, %158 : vector<8x1xf32>
    %161 = arith.mulf %157, %160 : vector<8x1xf32>
    %cst_54 = arith.constant dense<0.000000e+00> : vector<8x4xf32>
    %162 = tpu.matmul %154, %148, %cst_54 {dimension_numbers = #tpu.dot_dimension_numbers<[1], [0], [0], [1], [0, 0, 1, 1], [], []>} : vector<8x8xf32>, vector<8x4xf32>, vector<8x4xf32> -> vector<8x4xf32>
    %163 = vector.broadcast %161 : vector<8x1xf32> to vector<8x4xf32>
    %164 = arith.mulf %162, %163 : vector<8x4xf32>
    %c0_55 = arith.constant 0 : index
    %c24 = arith.constant 24 : index
    %165 = vector.load %arg14[%c0_55, %c24] : memref<8x32xf32, #tpu.memory_space<vmem>>, vector<8x4xf32>
    tpu.vector_store %arg14[%c0_55, %c24], %164 {strides = array<i32>} : memref<8x32xf32, #tpu.memory_space<vmem>>, vector<8x4xf32>,
    %166 = vector.extract_strided_slice %25 {offsets = [0, 28], sizes = [8, 4], strides = [1, 1]} : vector<8x96xf32> to vector<8x4xf32>
    %167 = vector.extract_strided_slice %25 {offsets = [0, 60], sizes = [8, 4], strides = [1, 1]} : vector<8x96xf32> to vector<8x4xf32>
    %168 = vector.extract_strided_slice %25 {offsets = [0, 92], sizes = [8, 4], strides = [1, 1]} : vector<8x96xf32> to vector<8x4xf32>
    %cst_56 = arith.constant dense<0.000000e+00> : vector<8x8xf32>
    %169 = tpu.matmul %166, %167, %cst_56 {dimension_numbers = #tpu.dot_dimension_numbers<[1], [1], [0], [0], [0, 0, 1, 0], [], []>} : vector<8x4xf32>, vector<8x4xf32>, vector<8x8xf32> -> vector<8x8xf32>
    %cst_57 = arith.constant dense<0xFF800000> : vector<8xf32>
    %170 = vector.multi_reduction <maximumf>, %169, %cst_57 [1] : vector<8x8xf32> to vector<8xf32>
    %171 = vector.shape_cast %170 : vector<8xf32> to vector<8x1xf32>
    %172 = vector.broadcast %171 : vector<8x1xf32> to vector<8x8xf32>
    %173 = arith.subf %169, %172 : vector<8x8xf32>
    %174 = math.exp %173 : vector<8x8xf32>
    %cst_58 = arith.constant dense<0.000000e+00> : vector<8xf32>
    %175 = vector.multi_reduction <add>, %174, %cst_58 [1] : vector<8x8xf32> to vector<8xf32>
    %176 = vector.shape_cast %175 : vector<8xf32> to vector<8x1xf32>
    %177 = tpu.reciprocal %176 {approx = true} : vector<8x1xf32> -> vector<8x1xf32>
    %178 = arith.mulf %176, %177 : vector<8x1xf32>
    %cst_59 = arith.constant 2.000000e+00 : f32
    %179 = vector.broadcast %cst_59 : f32 to vector<8x1xf32>
    %180 = arith.subf %179, %178 : vector<8x1xf32>
    %181 = arith.mulf %177, %180 : vector<8x1xf32>
    %cst_60 = arith.constant dense<0.000000e+00> : vector<8x4xf32>
    %182 = tpu.matmul %174, %168, %cst_60 {dimension_numbers = #tpu.dot_dimension_numbers<[1], [0], [0], [1], [0, 0, 1, 1], [], []>} : vector<8x8xf32>, vector<8x4xf32>, vector<8x4xf32> -> vector<8x4xf32>
    %183 = vector.broadcast %181 : vector<8x1xf32> to vector<8x4xf32>
    %184 = arith.mulf %182, %183 : vector<8x4xf32>
    %c0_61 = arith.constant 0 : index
    %c28 = arith.constant 28 : index
    %185 = vector.load %arg14[%c0_61, %c28] : memref<8x32xf32, #tpu.memory_space<vmem>>, vector<8x4xf32>
    tpu.vector_store %arg14[%c0_61, %c28], %184 {strides = array<i32>} : memref<8x32xf32, #tpu.memory_space<vmem>>, vector<8x4xf32>,
    %c0_62 = arith.constant 0 : index
    %c0_63 = arith.constant 0 : index
    %186 = vector.load %arg14[%c0_62, %c0_63] : memref<8x32xf32, #tpu.memory_space<vmem>>, vector<8x32xf32>
    %c0_64 = arith.constant 0 : index
    %c0_65 = arith.constant 0 : index
    %187 = vector.load %arg5[%c0_64, %c0_65] : memref<32x32xf32, #tpu.memory_space<vmem>>, vector<32x32xf32>
    %cst_66 = arith.constant dense<0.000000e+00> : vector<8x32xf32>
    %188 = tpu.matmul %186, %187, %cst_66 {dimension_numbers = #tpu.dot_dimension_numbers<[1], [0], [0], [1], [0, 0, 1, 1], [], []>} : vector<8x32xf32>, vector<32x32xf32>, vector<8x32xf32> -> vector<8x32xf32>
    %c0_67 = arith.constant 0 : index
    %c0_68 = arith.constant 0 : index
    %189 = vector.load %arg6[%c0_67, %c0_68] : memref<1x32xf32, #tpu.memory_space<vmem>>, vector<1x32xf32>
    %190 = vector.broadcast %189 : vector<1x32xf32> to vector<8x32xf32>
    %191 = arith.addf %188, %190 : vector<8x32xf32>
    %192 = arith.addf %1, %191 : vector<8x32xf32>
    %c0_69 = arith.constant 0 : index
    %c0_70 = arith.constant 0 : index
    %193 = vector.load %arg7[%c0_69, %c0_70] : memref<1x32xf32, #tpu.memory_space<vmem>>, vector<1x32xf32>
    %c0_71 = arith.constant 0 : index
    %c0_72 = arith.constant 0 : index
    %194 = vector.load %arg8[%c0_71, %c0_72] : memref<1x32xf32, #tpu.memory_space<vmem>>, vector<1x32xf32>
    %cst_73 = arith.constant dense<0.000000e+00> : vector<8xf32>
    %195 = vector.multi_reduction <add>, %192, %cst_73 [1] : vector<8x32xf32> to vector<8xf32>
    %196 = vector.shape_cast %195 : vector<8xf32> to vector<8x1xf32>
    %cst_74 = arith.constant 3.200000e+01 : f32
    %197 = vector.broadcast %cst_74 : f32 to vector<8x1xf32>
    %198 = arith.divf %196, %197 : vector<8x1xf32>
    %199 = vector.broadcast %198 : vector<8x1xf32> to vector<8x32xf32>
    %200 = arith.subf %192, %199 : vector<8x32xf32>
    %201 = arith.mulf %200, %200 : vector<8x32xf32>
    %cst_75 = arith.constant dense<0.000000e+00> : vector<8xf32>
    %202 = vector.multi_reduction <add>, %201, %cst_75 [1] : vector<8x32xf32> to vector<8xf32>
    %203 = vector.shape_cast %202 : vector<8xf32> to vector<8x1xf32>
    %cst_76 = arith.constant 3.200000e+01 : f32
    %204 = vector.broadcast %cst_76 : f32 to vector<8x1xf32>
    %205 = arith.divf %203, %204 : vector<8x1xf32>
    %cst_77 = arith.constant 9.99999974E-6 : f32
    %206 = vector.broadcast %cst_77 : f32 to vector<8x1xf32>
    %207 = arith.addf %205, %206 : vector<8x1xf32>
    %208 = math.rsqrt %207 : vector<8x1xf32>
    %209 = vector.broadcast %208 : vector<8x1xf32> to vector<8x32xf32>
    %210 = arith.mulf %200, %209 : vector<8x32xf32>
    %211 = vector.broadcast %193 : vector<1x32xf32> to vector<8x32xf32>
    %212 = arith.mulf %210, %211 : vector<8x32xf32>
    %213 = vector.broadcast %194 : vector<1x32xf32> to vector<8x32xf32>
    %214 = arith.addf %212, %213 : vector<8x32xf32>
    %c0_78 = arith.constant 0 : index
    %c0_79 = arith.constant 0 : index
    %215 = vector.load %arg9[%c0_78, %c0_79] : memref<32x64xf32, #tpu.memory_space<vmem>>, vector<32x64xf32>
    %cst_80 = arith.constant dense<0.000000e+00> : vector<8x64xf32>
    %216 = tpu.matmul %214, %215, %cst_80 {dimension_numbers = #tpu.dot_dimension_numbers<[1], [0], [0], [1], [0, 0, 1, 1], [], []>} : vector<8x32xf32>, vector<32x64xf32>, vector<8x64xf32> -> vector<8x64xf32>
    %c0_81 = arith.constant 0 : index
    %c0_82 = arith.constant 0 : index
    %217 = vector.load %arg10[%c0_81, %c0_82] : memref<1x64xf32, #tpu.memory_space<vmem>>, vector<1x64xf32>
    %218 = vector.broadcast %217 : vector<1x64xf32> to vector<8x64xf32>
    %219 = arith.addf %216, %218 : vector<8x64xf32>
    %cst_83 = arith.constant 5.000000e-01 : f32
    %220 = vector.broadcast %cst_83 : f32 to vector<8x64xf32>
    %221 = arith.mulf %220, %219 : vector<8x64xf32>
    %cst_84 = arith.constant 0.707106769 : f32
    %222 = vector.broadcast %cst_84 : f32 to vector<8x64xf32>
    %223 = arith.mulf %219, %222 : vector<8x64xf32>
    %224 = math.absf %223 : vector<8x64xf32>
    %cst_85 = arith.constant 0.327591091 : f32
    %225 = vector.broadcast %cst_85 : f32 to vector<8x64xf32>
    %226 = arith.mulf %225, %224 : vector<8x64xf32>
    %cst_86 = arith.constant 1.000000e+00 : f32
    %227 = vector.broadcast %cst_86 : f32 to vector<8x64xf32>
    %228 = arith.addf %227, %226 : vector<8x64xf32>
    %229 = tpu.reciprocal %228 {approx = true} : vector<8x64xf32> -> vector<8x64xf32>
    %230 = arith.mulf %228, %229 : vector<8x64xf32>
    %cst_87 = arith.constant 2.000000e+00 : f32
    %231 = vector.broadcast %cst_87 : f32 to vector<8x64xf32>
    %232 = arith.subf %231, %230 : vector<8x64xf32>
    %233 = arith.mulf %229, %232 : vector<8x64xf32>
    %cst_88 = arith.constant 1.06140542 : f32
    %234 = vector.broadcast %cst_88 : f32 to vector<8x64xf32>
    %235 = arith.mulf %234, %233 : vector<8x64xf32>
    %cst_89 = arith.constant -1.45315206 : f32
    %236 = vector.broadcast %cst_89 : f32 to vector<8x64xf32>
    %237 = arith.addf %235, %236 : vector<8x64xf32>
    %238 = arith.mulf %237, %233 : vector<8x64xf32>
    %cst_90 = arith.constant 1.42141378 : f32
    %239 = vector.broadcast %cst_90 : f32 to vector<8x64xf32>
    %240 = arith.addf %238, %239 : vector<8x64xf32>
    %241 = arith.mulf %240, %233 : vector<8x64xf32>
    %cst_91 = arith.constant -0.284496725 : f32
    %242 = vector.broadcast %cst_91 : f32 to vector<8x64xf32>
    %243 = arith.addf %241, %242 : vector<8x64xf32>
    %244 = arith.mulf %243, %233 : vector<8x64xf32>
    %cst_92 = arith.constant 0.254829586 : f32
    %245 = vector.broadcast %cst_92 : f32 to vector<8x64xf32>
    %246 = arith.addf %244, %245 : vector<8x64xf32>
    %247 = arith.mulf %246, %233 : vector<8x64xf32>
    %cst_93 = arith.constant 0.000000e+00 : f32
    %248 = vector.broadcast %cst_93 : f32 to vector<8x64xf32>
    %249 = arith.subf %248, %224 : vector<8x64xf32>
    %250 = arith.mulf %249, %224 : vector<8x64xf32>
    %251 = math.exp %250 : vector<8x64xf32>
    %252 = arith.mulf %247, %251 : vector<8x64xf32>
    %cst_94 = arith.constant 1.000000e+00 : f32
    %253 = vector.broadcast %cst_94 : f32 to vector<8x64xf32>
    %254 = arith.subf %253, %252 : vector<8x64xf32>
    %cst_95 = arith.constant 0.000000e+00 : f32
    %255 = vector.broadcast %cst_95 : f32 to vector<8x64xf32>
    %256 = arith.cmpf oge, %223, %255 : vector<8x64xf32>
    %cst_96 = arith.constant 0.000000e+00 : f32
    %257 = vector.broadcast %cst_96 : f32 to vector<8x64xf32>
    %258 = arith.subf %257, %254 : vector<8x64xf32>
    %259 = arith.select %256, %254, %258 : vector<8x64xi1>, vector<8x64xf32>
    %cst_97 = arith.constant 1.000000e+00 : f32
    %260 = vector.broadcast %cst_97 : f32 to vector<8x64xf32>
    %261 = arith.addf %260, %259 : vector<8x64xf32>
    %262 = arith.mulf %221, %261 : vector<8x64xf32>
    %c0_98 = arith.constant 0 : index
    %c0_99 = arith.constant 0 : index
    %263 = vector.load %arg11[%c0_98, %c0_99] : memref<64x32xf32, #tpu.memory_space<vmem>>, vector<64x32xf32>
    %cst_100 = arith.constant dense<0.000000e+00> : vector<8x32xf32>
    %264 = tpu.matmul %262, %263, %cst_100 {dimension_numbers = #tpu.dot_dimension_numbers<[1], [0], [0], [1], [0, 0, 1, 1], [], []>} : vector<8x64xf32>, vector<64x32xf32>, vector<8x32xf32> -> vector<8x32xf32>
    %c0_101 = arith.constant 0 : index
    %c0_102 = arith.constant 0 : index
    %265 = vector.load %arg12[%c0_101, %c0_102] : memref<1x32xf32, #tpu.memory_space<vmem>>, vector<1x32xf32>
    %266 = vector.broadcast %265 : vector<1x32xf32> to vector<8x32xf32>
    %267 = arith.addf %264, %266 : vector<8x32xf32>
    %268 = arith.addf %192, %267 : vector<8x32xf32>
    %c0_103 = arith.constant 0 : index
    %c0_104 = arith.constant 0 : index
    %c0_105 = arith.constant 0 : index
    %269 = vector.load %arg13[%c0_103, %c0_104, %c0_105] : memref<1x8x32xf32, #tpu.memory_space<vmem>>, vector<1x8x32xf32>
    %270 = vector.shape_cast %269 : vector<1x8x32xf32> to vector<8x32xf32>
    %271 = vector.shape_cast %268 : vector<8x32xf32> to vector<1x8x32xf32>
    tpu.vector_store %arg13[%c0_103, %c0_104, %c0_105], %271 {strides = array<i32>} : memref<1x8x32xf32, #tpu.memory_space<vmem>>, vector<1x8x32xf32>,
    return
  }
  func.func @transform_0(%arg0: i32) -> (i32, i32, i32) {
    %c0_i32 = arith.constant 0 : i32
    %c0_i32_0 = arith.constant 0 : i32
    %c0_i32_1 = arith.constant 0 : i32
    return %arg0, %c0_i32, %c0_i32_0 : i32, i32, i32
  }
  func.func @transform_1(%arg0: i32) -> (i32, i32) {
    %c0_i32 = arith.constant 0 : i32
    %c0_i32_0 = arith.constant 0 : i32
    %c0_i32_1 = arith.constant 0 : i32
    return %c0_i32, %c0_i32_0 : i32, i32
  }
  func.func @transform_2(%arg0: i32) -> (i32, i32) {
    %c0_i32 = arith.constant 0 : i32
    %c0_i32_0 = arith.constant 0 : i32
    %c0_i32_1 = arith.constant 0 : i32
    return %c0_i32, %c0_i32_0 : i32, i32
  }
  func.func @transform_3(%arg0: i32) -> (i32, i32) {
    %c0_i32 = arith.constant 0 : i32
    %c0_i32_0 = arith.constant 0 : i32
    %c0_i32_1 = arith.constant 0 : i32
    return %c0_i32, %c0_i32_0 : i32, i32
  }
  func.func @transform_4(%arg0: i32) -> (i32, i32) {
    %c0_i32 = arith.constant 0 : i32
    %c0_i32_0 = arith.constant 0 : i32
    %c0_i32_1 = arith.constant 0 : i32
    return %c0_i32, %c0_i32_0 : i32, i32
  }
  func.func @transform_5(%arg0: i32) -> (i32, i32) {
    %c0_i32 = arith.constant 0 : i32
    %c0_i32_0 = arith.constant 0 : i32
    %c0_i32_1 = arith.constant 0 : i32
    return %c0_i32, %c0_i32_0 : i32, i32
  }
  func.func @transform_6(%arg0: i32) -> (i32, i32) {
    %c0_i32 = arith.constant 0 : i32
    %c0_i32_0 = arith.constant 0 : i32
    %c0_i32_1 = arith.constant 0 : i32
    return %c0_i32, %c0_i32_0 : i32, i32
  }
  func.func @transform_7(%arg0: i32) -> (i32, i32) {
    %c0_i32 = arith.constant 0 : i32
    %c0_i32_0 = arith.constant 0 : i32
    %c0_i32_1 = arith.constant 0 : i32
    return %c0_i32, %c0_i32_0 : i32, i32
  }
  func.func @transform_8(%arg0: i32) -> (i32, i32) {
    %c0_i32 = arith.constant 0 : i32
    %c0_i32_0 = arith.constant 0 : i32
    %c0_i32_1 = arith.constant 0 : i32
    return %c0_i32, %c0_i32_0 : i32, i32
  }
  func.func @transform_9(%arg0: i32) -> (i32, i32) {
    %c0_i32 = arith.constant 0 : i32
    %c0_i32_0 = arith.constant 0 : i32
    %c0_i32_1 = arith.constant 0 : i32
    return %c0_i32, %c0_i32_0 : i32, i32
  }
  func.func @transform_10(%arg0: i32) -> (i32, i32) {
    %c0_i32 = arith.constant 0 : i32
    %c0_i32_0 = arith.constant 0 : i32
    %c0_i32_1 = arith.constant 0 : i32
    return %c0_i32, %c0_i32_0 : i32, i32
  }
  func.func @transform_11(%arg0: i32) -> (i32, i32) {
    %c0_i32 = arith.constant 0 : i32
    %c0_i32_0 = arith.constant 0 : i32
    %c0_i32_1 = arith.constant 0 : i32
    return %c0_i32, %c0_i32_0 : i32, i32
  }
  func.func @transform_12(%arg0: i32) -> (i32, i32, i32) {
    %c0_i32 = arith.constant 0 : i32
    %c0_i32_0 = arith.constant 0 : i32
    %c0_i32_1 = arith.constant 0 : i32
    return %arg0, %c0_i32, %c0_i32_0 : i32, i32, i32
  }
}

</mosaic_0001>

<llo_original>
// kernel: dtransformer_pallas.3
$region0: #{dtransformer_pallas.3}
  #allocation0 [shape = 'u32[]', space=smem, size = 0x4, offset = 0x4, fixed_abs, tag = 'smem constant byte address 0x4 - core index']
  #allocation1 [shape = 'u32[144,128]{1,0:T(1,128)}', space=vmem, size = 0x12000, scoped, tag = 'internal scratch']
  #allocation2 [shape = 'f32[8,32]{1,0:T(8,128)}', space=vmem, size = 0x1000, scoped, tag = 'scratch operand']
  %s0 = inlined_call_operand.hbm [shape: f32[2,8,32], index: 0, kind: input, shape index: {}, may-alias: {0,12}]
  %s1 = inlined_call_operand.vmem [shape: f32[1,32], index: 1, kind: input, shape index: {}]
  %s2 = inlined_call_operand.vmem [shape: f32[1,32], index: 2, kind: input, shape index: {}]
  %s3 = inlined_call_operand.vmem [shape: f32[32,96], index: 3, kind: input, shape index: {}]
  %s4 = inlined_call_operand.vmem [shape: f32[32,32], index: 4, kind: input, shape index: {}]
  %s5 = inlined_call_operand.vmem [shape: f32[1,32], index: 5, kind: input, shape index: {}]
  %s6 = inlined_call_operand.vmem [shape: f32[1,32], index: 6, kind: input, shape index: {}]
  %s7 = inlined_call_operand.vmem [shape: f32[1,32], index: 7, kind: input, shape index: {}]
  %s8 = inlined_call_operand.vmem [shape: f32[32,64], index: 8, kind: input, shape index: {}]
  %s9 = inlined_call_operand.vmem [shape: f32[1,64], index: 9, kind: input, shape index: {}]
  %s10 = inlined_call_operand.vmem [shape: f32[64,32], index: 10, kind: input, shape index: {}]
  %s11 = inlined_call_operand.vmem [shape: f32[1,32], index: 11, kind: input, shape index: {}]
  %s12 = inlined_call_operand.hbm [shape: f32[2,8,32], index: 12, kind: output, shape index: {}, may-alias: {0,12}]
  %s13 = sld [smem:[#allocation0]]
  $region85: #{dtransformer_pallas.3} parent=0
    _
  %s15 = ssub.s32 1, %s13
  %s16 = scalar_select 0, %s15, %s13
  $region1: #{dtransformer_pallas.3} parent=0
    #allocation3 [shape = 'u8[8192]{0}', space=vmem, size = 0x2000, scoped, tag = 'input window, operand 0']
    #allocation4 [shape = 's32[2]{0}', space=sflag, size = 0x8, scoped, tag = 'scoped memory for dtransformer_pallas.3']
    #allocation5 [shape = 's32[2]{0}', space=sflag, size = 0x8, scoped, tag = 'scoped memory for dtransformer_pallas.3']
    #allocation6 [shape = 'u8[8192]{0}', space=vmem, size = 0x2000, scoped, tag = 'output window, operand 0']
    %17 = vsyncpa [#allocation4], 0
    %s18 = scalar_lea.sflag [#allocation4], 1
    %19 = vsyncpa %s18, 0
    %20 = vsyncpa [#allocation5], 0
    %s21 = scalar_lea.sflag [#allocation5], 1
    %22 = vsyncpa %s21, 0
    loop: start=0, step=1, limit=4
    $region2: #{dtransformer_pallas.3} parent=1 // loop_pre_header
      _
    $region3: #{dtransformer_pallas.3} parent=1 // loop_header
      %s24 = sphi 0, %s28
      %p25 = scmp.ge.s32.totalorder %s24, 4
      %s34 = sphi 0, %s36
      %s37 = sphi 0, %s34
      %s38 = sphi 0, %s37
      %s54 = sphi 0, %s38
      %s58 = sphi 0, %s58
      %s60 = sphi 0, %s58
      %s61 = sphi 0, %s60
      %s75 = sphi 0, %s61
      %s79 = sphi 0, %s79
      %s81 = sphi 0, %s79
      %s82 = sphi 0, %s81
      %s96 = sphi 0, %s82
      %s100 = sphi 0, %s100
      %s102 = sphi 0, %s100
      %s103 = sphi 0, %s102
      %s117 = sphi 0, %s103
      %s121 = sphi 0, %s121
      %s123 = sphi 0, %s121
      %s124 = sphi 0, %s123
      %s138 = sphi 0, %s124
      %s142 = sphi 0, %s142
      %s144 = sphi 0, %s142
      %s145 = sphi 0, %s144
      %s159 = sphi 0, %s145
      %s163 = sphi 0, %s163
      %s165 = sphi 0, %s163
      %s166 = sphi 0, %s165
      %s180 = sphi 0, %s166
      %s184 = sphi 0, %s184
      %s186 = sphi 0, %s184
      %s187 = sphi 0, %s186
      %s201 = sphi 0, %s187
      %s205 = sphi 0, %s205
      %s207 = sphi 0, %s205
      %s208 = sphi 0, %s207
      %s222 = sphi 0, %s208
      %s226 = sphi 0, %s226
      %s228 = sphi 0, %s226
      %s229 = sphi 0, %s228
      %s243 = sphi 0, %s229
      %s247 = sphi 0, %s247
      %s249 = sphi 0, %s247
      %s250 = sphi 0, %s249
      %s264 = sphi 0, %s250
      %s268 = sphi 0, %s268
      %s270 = sphi 0, %s268
      %s271 = sphi 0, %s270
      %s285 = sphi 0, %s271
      %s291 = sphi 0, %s293
      %s294 = sphi 0, %s291
      %s295 = sphi 0, %s294
      %s311 = sphi 0, %s295
    $region4: #{dtransformer_pallas.3} parent=1 // loop_header_branch
      %27 = sbr.rel (%p25) target = $region8
    $region5: #{dtransformer_pallas.3} parent=1 // loop_body
      %s29 = ssub.s32 %s24, 1
      %s30 = ssub.s32 %s24, 2
      %s31 = sadd.s32 %s24, 1
      %s32 = ssub.s32 %s24, %s31
      %p33 = scmp.eq.s32.totalorder %s32, 0
      %s35 = sadd.s32 %s34, 1
      %s36 = scalar_select %p33, %s34, %s35
      %p39 = pneg %p33
      %p40 = scmp.eq.s32.totalorder %s24, 1
      %p41 = por %p39, %p40
      %p42 = scmp.ne.s32.totalorder %s34, %s37
      %p43 = scmp.eq.s32.totalorder %s24, 0
      %p44 = por %p42, %p43
      %p45 = scmp.ne.s32.totalorder %s34, %s37
      %p46 = scmp.eq.s32.totalorder %s29, 1
      %p47 = por %p45, %p46
      %p48 = scmp.ne.s32.totalorder %s37, %s38
      %p49 = scmp.eq.s32.totalorder %s29, 0
      %p50 = por %p48, %p49
      %p51 = scmp.ne.s32.totalorder %s37, %s38
      %p52 = scmp.eq.s32.totalorder %s30, 1
      %p53 = por %p51, %p52
      %p55 = scmp.ne.s32.totalorder %s38, %s54
      %p56 = scmp.eq.s32.totalorder %s30, 0
      %p57 = por %p55, %p56
      %s59 = sadd.s32 %s58, 1
      %p62 = scmp.eq.s32.totalorder %s24, 1
      %p63 = scmp.ne.s32.totalorder %s58, %s60
      %p64 = scmp.eq.s32.totalorder %s24, 0
      %p65 = por %p63, %p64
      %p66 = scmp.ne.s32.totalorder %s58, %s60
      %p67 = scmp.eq.s32.totalorder %s29, 1
      %p68 = por %p66, %p67
      %p69 = scmp.ne.s32.totalorder %s60, %s61
      %p70 = scmp.eq.s32.totalorder %s29, 0
      %p71 = por %p69, %p70
      %p72 = scmp.ne.s32.totalorder %s60, %s61
      %p73 = scmp.eq.s32.totalorder %s30, 1
      %p74 = por %p72, %p73
      %p76 = scmp.ne.s32.totalorder %s61, %s75
      %p77 = scmp.eq.s32.totalorder %s30, 0
      %p78 = por %p76, %p77
      %s80 = sadd.s32 %s79, 1
      %p83 = scmp.eq.s32.totalorder %s24, 1
      %p84 = scmp.ne.s32.totalorder %s79, %s81
      %p85 = scmp.eq.s32.totalorder %s24, 0
      %p86 = por %p84, %p85
      %p87 = scmp.ne.s32.totalorder %s79, %s81
      %p88 = scmp.eq.s32.totalorder %s29, 1
      %p89 = por %p87, %p88
      %p90 = scmp.ne.s32.totalorder %s81, %s82
      %p91 = scmp.eq.s32.totalorder %s29, 0
      %p92 = por %p90, %p91
      %p93 = scmp.ne.s32.totalorder %s81, %s82
      %p94 = scmp.eq.s32.totalorder %s30, 1
      %p95 = por %p93, %p94
      %p97 = scmp.ne.s32.totalorder %s82, %s96
      %p98 = scmp.eq.s32.totalorder %s30, 0
      %p99 = por %p97, %p98
      %s101 = sadd.s32 %s100, 1
      %p104 = scmp.eq.s32.totalorder %s24, 1
      %p105 = scmp.ne.s32.totalorder %s100, %s102
      %p106 = scmp.eq.s32.totalorder %s24, 0
      %p107 = por %p105, %p106
      %p108 = scmp.ne.s32.totalorder %s100, %s102
      %p109 = scmp.eq.s32.totalorder %s29, 1
      %p110 = por %p108, %p109
      %p111 = scmp.ne.s32.totalorder %s102, %s103
      %p112 = scmp.eq.s32.totalorder %s29, 0
      %p113 = por %p111, %p112
      %p114 = scmp.ne.s32.totalorder %s102, %s103
      %p115 = scmp.eq.s32.totalorder %s30, 1
      %p116 = por %p114, %p115
      %p118 = scmp.ne.s32.totalorder %s103, %s117
      %p119 = scmp.eq.s32.totalorder %s30, 0
      %p120 = por %p118, %p119
      %s122 = sadd.s32 %s121, 1
      %p125 = scmp.eq.s32.totalorder %s24, 1
      %p126 = scmp.ne.s32.totalorder %s121, %s123
      %p127 = scmp.eq.s32.totalorder %s24, 0
      %p128 = por %p126, %p127
      %p129 = scmp.ne.s32.totalorder %s121, %s123
      %p130 = scmp.eq.s32.totalorder %s29, 1
      %p131 = por %p129, %p130
      %p132 = scmp.ne.s32.totalorder %s123, %s124
      %p133 = scmp.eq.s32.totalorder %s29, 0
      %p134 = por %p132, %p133
      %p135 = scmp.ne.s32.totalorder %s123, %s124
      %p136 = scmp.eq.s32.totalorder %s30, 1
      %p137 = por %p135, %p136
      %p139 = scmp.ne.s32.totalorder %s124, %s138
      %p140 = scmp.eq.s32.totalorder %s30, 0
      %p141 = por %p139, %p140
      %s143 = sadd.s32 %s142, 1
      %p146 = scmp.eq.s32.totalorder %s24, 1
      %p147 = scmp.ne.s32.totalorder %s142, %s144
      %p148 = scmp.eq.s32.totalorder %s24, 0
      %p149 = por %p147, %p148
      %p150 = scmp.ne.s32.totalorder %s142, %s144
      %p151 = scmp.eq.s32.totalorder %s29, 1
      %p152 = por %p150, %p151
      %p153 = scmp.ne.s32.totalorder %s144, %s145
      %p154 = scmp.eq.s32.totalorder %s29, 0
      %p155 = por %p153, %p154
      %p156 = scmp.ne.s32.totalorder %s144, %s145
      %p157 = scmp.eq.s32.totalorder %s30, 1
      %p158 = por %p156, %p157
      %p160 = scmp.ne.s32.totalorder %s145, %s159
      %p161 = scmp.eq.s32.totalorder %s30, 0
      %p162 = por %p160, %p161
      %s164 = sadd.s32 %s163, 1
      %p167 = scmp.eq.s32.totalorder %s24, 1
      %p168 = scmp.ne.s32.totalorder %s163, %s165
      %p169 = scmp.eq.s32.totalorder %s24, 0
      %p170 = por %p168, %p169
      %p171 = scmp.ne.s32.totalorder %s163, %s165
      %p172 = scmp.eq.s32.totalorder %s29, 1
      %p173 = por %p171, %p172
      %p174 = scmp.ne.s32.totalorder %s165, %s166
      %p175 = scmp.eq.s32.totalorder %s29, 0
      %p176 = por %p174, %p175
      %p177 = scmp.ne.s32.totalorder %s165, %s166
      %p178 = scmp.eq.s32.totalorder %s30, 1
      %p179 = por %p177, %p178
      %p181 = scmp.ne.s32.totalorder %s166, %s180
      %p182 = scmp.eq.s32.totalorder %s30, 0
      %p183 = por %p181, %p182
      %s185 = sadd.s32 %s184, 1
      %p188 = scmp.eq.s32.totalorder %s24, 1
      %p189 = scmp.ne.s32.totalorder %s184, %s186
      %p190 = scmp.eq.s32.totalorder %s24, 0
      %p191 = por %p189, %p190
      %p192 = scmp.ne.s32.totalorder %s184, %s186
      %p193 = scmp.eq.s32.totalorder %s29, 1
      %p194 = por %p192, %p193
      %p195 = scmp.ne.s32.totalorder %s186, %s187
      %p196 = scmp.eq.s32.totalorder %s29, 0
      %p197 = por %p195, %p196
      %p198 = scmp.ne.s32.totalorder %s186, %s187
      %p199 = scmp.eq.s32.totalorder %s30, 1
      %p200 = por %p198, %p199
      %p202 = scmp.ne.s32.totalorder %s187, %s201
      %p203 = scmp.eq.s32.totalorder %s30, 0
      %p204 = por %p202, %p203
      %s206 = sadd.s32 %s205, 1
      %p209 = scmp.eq.s32.totalorder %s24, 1
      %p210 = scmp.ne.s32.totalorder %s205, %s207
      %p211 = scmp.eq.s32.totalorder %s24, 0
      %p212 = por %p210, %p211
      %p213 = scmp.ne.s32.totalorder %s205, %s207
      %p214 = scmp.eq.s32.totalorder %s29, 1
      %p215 = por %p213, %p214
      %p216 = scmp.ne.s32.totalorder %s207, %s208
      %p217 = scmp.eq.s32.totalorder %s29, 0
      %p218 = por %p216, %p217
      %p219 = scmp.ne.s32.totalorder %s207, %s208
      %p220 = scmp.eq.s32.totalorder %s30, 1
      %p221 = por %p219, %p220
      %p223 = scmp.ne.s32.totalorder %s208, %s222
      %p224 = scmp.eq.s32.totalorder %s30, 0
      %p225 = por %p223, %p224
      %s227 = sadd.s32 %s226, 1
      %p230 = scmp.eq.s32.totalorder %s24, 1
      %p231 = scmp.ne.s32.totalorder %s226, %s228
      %p232 = scmp.eq.s32.totalorder %s24, 0
      %p233 = por %p231, %p232
      %p234 = scmp.ne.s32.totalorder %s226, %s228
      %p235 = scmp.eq.s32.totalorder %s29, 1
      %p236 = por %p234, %p235
      %p237 = scmp.ne.s32.totalorder %s228, %s229
      %p238 = scmp.eq.s32.totalorder %s29, 0
      %p239 = por %p237, %p238
      %p240 = scmp.ne.s32.totalorder %s228, %s229
      %p241 = scmp.eq.s32.totalorder %s30, 1
      %p242 = por %p240, %p241
      %p244 = scmp.ne.s32.totalorder %s229, %s243
      %p245 = scmp.eq.s32.totalorder %s30, 0
      %p246 = por %p244, %p245
      %s248 = sadd.s32 %s247, 1
      %p251 = scmp.eq.s32.totalorder %s24, 1
      %p252 = scmp.ne.s32.totalorder %s247, %s249
      %p253 = scmp.eq.s32.totalorder %s24, 0
      %p254 = por %p252, %p253
      %p255 = scmp.ne.s32.totalorder %s247, %s249
      %p256 = scmp.eq.s32.totalorder %s29, 1
      %p257 = por %p255, %p256
      %p258 = scmp.ne.s32.totalorder %s249, %s250
      %p259 = scmp.eq.s32.totalorder %s29, 0
      %p260 = por %p258, %p259
      %p261 = scmp.ne.s32.totalorder %s249, %s250
      %p262 = scmp.eq.s32.totalorder %s30, 1
      %p263 = por %p261, %p262
      %p265 = scmp.ne.s32.totalorder %s250, %s264
      %p266 = scmp.eq.s32.totalorder %s30, 0
      %p267 = por %p265, %p266
      %s269 = sadd.s32 %s268, 1
      %p272 = scmp.eq.s32.totalorder %s24, 1
      %p273 = scmp.ne.s32.totalorder %s268, %s270
      %p274 = scmp.eq.s32.totalorder %s24, 0
      %p275 = por %p273, %p274
      %p276 = scmp.ne.s32.totalorder %s268, %s270
      %p277 = scmp.eq.s32.totalorder %s29, 1
      %p278 = por %p276, %p277
      %p279 = scmp.ne.s32.totalorder %s270, %s271
      %p280 = scmp.eq.s32.totalorder %s29, 0
      %p281 = por %p279, %p280
      %p282 = scmp.ne.s32.totalorder %s270, %s271
      %p283 = scmp.eq.s32.totalorder %s30, 1
      %p284 = por %p282, %p283
      %p286 = scmp.ne.s32.totalorder %s271, %s285
      %p287 = scmp.eq.s32.totalorder %s30, 0
      %p288 = por %p286, %p287
      %s289 = ssub.s32 %s24, %s31
      %p290 = scmp.eq.s32.totalorder %s289, 0
      %s292 = sadd.s32 %s291, 1
      %s293 = scalar_select %p290, %s291, %s292
      %p296 = pneg %p290
      %p297 = scmp.eq.s32.totalorder %s24, 1
      %p298 = por %p296, %p297
      %p299 = scmp.ne.s32.totalorder %s291, %s294
      %p300 = scmp.eq.s32.totalorder %s24, 0
      %p301 = por %p299, %p300
      %p302 = scmp.ne.s32.totalorder %s291, %s294
      %p303 = scmp.eq.s32.totalorder %s29, 1
      %p304 = por %p302, %p303
      %p305 = scmp.ne.s32.totalorder %s294, %s295
      %p306 = scmp.eq.s32.totalorder %s29, 0
      %p307 = por %p305, %p306
      %p308 = scmp.ne.s32.totalorder %s294, %s295
      %p309 = scmp.eq.s32.totalorder %s30, 1
      %p310 = por %p308, %p309
      %p312 = scmp.ne.s32.totalorder %s295, %s311
      %p313 = scmp.eq.s32.totalorder %s30, 0
      %p314 = por %p312, %p313
      %p315 = scmp.le.s32.totalorder 1, %s24
      %p316 = scmp.lt.s32.totalorder %s24, 3
      %p317 = pnand %p315, %p316
      %p318 = pneg %p317
      // Predicated region
      $region9: #{dtransformer_pallas.3} parent=5 // pred_check
        _
      $region10: #{dtransformer_pallas.3} parent=5 // pred_check_branch
        %320 = sbr.rel (%p317) target = $region12
      $region11: #{dtransformer_pallas.3} parent=5 // pred_region
        %s321 = ssub.s32 %s24, 1
        // Predicated region
        $region13: #{dtransformer_pallas.3} parent=11 // pred_check
          %p322 = pneg %p71
        $region14: #{dtransformer_pallas.3} parent=11 // pred_check_branch
          %324 = sbr.rel (%p322) target = $region16
        $region15: #{dtransformer_pallas.3} parent=11 // pred_region
          _
        $region16: #{dtransformer_pallas.3} parent=11 // pred_fallthru
          _
        // Predicated region
        $region17: #{dtransformer_pallas.3} parent=11 // pred_check
          %p325 = pneg %p92
        $region18: #{dtransformer_pallas.3} parent=11 // pred_check_branch
          %327 = sbr.rel (%p325) target = $region20
        $region19: #{dtransformer_pallas.3} parent=11 // pred_region
          _
        $region20: #{dtransformer_pallas.3} parent=11 // pred_fallthru
          _
        // Predicated region
        $region21: #{dtransformer_pallas.3} parent=11 // pred_check
          %p328 = pneg %p113
        $region22: #{dtransformer_pallas.3} parent=11 // pred_check_branch
          %330 = sbr.rel (%p328) target = $region24
        $region23: #{dtransformer_pallas.3} parent=11 // pred_region
          _
        $region24: #{dtransformer_pallas.3} parent=11 // pred_fallthru
          _
        // Predicated region
        $region25: #{dtransformer_pallas.3} parent=11 // pred_check
          %p331 = pneg %p134
        $region26: #{dtransformer_pallas.3} parent=11 // pred_check_branch
          %333 = sbr.rel (%p331) target = $region28
        $region27: #{dtransformer_pallas.3} parent=11 // pred_region
          _
        $region28: #{dtransformer_pallas.3} parent=11 // pred_fallthru
          _
        // Predicated region
        $region29: #{dtransformer_pallas.3} parent=11 // pred_check
          %p334 = pneg %p155
        $region30: #{dtransformer_pallas.3} parent=11 // pred_check_branch
          %336 = sbr.rel (%p334) target = $region32
        $region31: #{dtransformer_pallas.3} parent=11 // pred_region
          _
        $region32: #{dtransformer_pallas.3} parent=11 // pred_fallthru
          _
        // Predicated region
        $region33: #{dtransformer_pallas.3} parent=11 // pred_check
          %p337 = pneg %p176
        $region34: #{dtransformer_pallas.3} parent=11 // pred_check_branch
          %339 = sbr.rel (%p337) target = $region36
        $region35: #{dtransformer_pallas.3} parent=11 // pred_region
          _
        $region36: #{dtransformer_pallas.3} parent=11 // pred_fallthru
          _
        // Predicated region
        $region37: #{dtransformer_pallas.3} parent=11 // pred_check
          %p340 = pneg %p197
        $region38: #{dtransformer_pallas.3} parent=11 // pred_check_branch
          %342 = sbr.rel (%p340) target = $region40
        $region39: #{dtransformer_pallas.3} parent=11 // pred_region
          _
        $region40: #{dtransformer_pallas.3} parent=11 // pred_fallthru
          _
        // Predicated region
        $region41: #{dtransformer_pallas.3} parent=11 // pred_check
          %p343 = pneg %p218
        $region42: #{dtransformer_pallas.3} parent=11 // pred_check_branch
          %345 = sbr.rel (%p343) target = $region44
        $region43: #{dtransformer_pallas.3} parent=11 // pred_region
          _
        $region44: #{dtransformer_pallas.3} parent=11 // pred_fallthru
          _
        // Predicated region
        $region45: #{dtransformer_pallas.3} parent=11 // pred_check
          %p346 = pneg %p239
        $region46: #{dtransformer_pallas.3} parent=11 // pred_check_branch
          %348 = sbr.rel (%p346) target = $region48
        $region47: #{dtransformer_pallas.3} parent=11 // pred_region
          _
        $region48: #{dtransformer_pallas.3} parent=11 // pred_fallthru
          _
        // Predicated region
        $region49: #{dtransformer_pallas.3} parent=11 // pred_check
          %p349 = pneg %p260
        $region50: #{dtransformer_pallas.3} parent=11 // pred_check_branch
          %351 = sbr.rel (%p349) target = $region52
        $region51: #{dtransformer_pallas.3} parent=11 // pred_region
          _
        $region52: #{dtransformer_pallas.3} parent=11 // pred_fallthru
          _
        // Predicated region
        $region53: #{dtransformer_pallas.3} parent=11 // pred_check
          %p352 = pneg %p281
        $region54: #{dtransformer_pallas.3} parent=11 // pred_check_branch
          %354 = sbr.rel (%p352) target = $region56
        $region55: #{dtransformer_pallas.3} parent=11 // pred_region
          _
        $region56: #{dtransformer_pallas.3} parent=11 // pred_fallthru
          _
      $region12: #{dtransformer_pallas.3} parent=5 // pred_fallthru
        _
      %p355 = scmp.lt.s32.totalorder %s24, 2
      // Predicated region
      $region57: #{dtransformer_pallas.3} parent=5 // pred_check
        %p356 = pneg %p355
      $region58: #{dtransformer_pallas.3} parent=5 // pred_check_branch
        %358 = sbr.rel (%p356) target = $region60
      $region59: #{dtransformer_pallas.3} parent=5 // pred_region
        // Predicated region
        $region61: #{dtransformer_pallas.3} parent=59 // pred_check
          %p359 = pneg %p44
        $region62: #{dtransformer_pallas.3} parent=59 // pred_check_branch
          %361 = sbr.rel (%p359) target = $region64
        $region63: #{dtransformer_pallas.3} parent=59 // pred_region
          %s362 = sand.u32 %s34, 1
          %s363 = scalar_lea.sflag [#allocation4], %s362
          %s364 = sand.u32 %s34, 1
          %s365 = smul.addr %s364, 8
          %s366 = scalar_lea.vmem [#allocation3], %s365
          %s368 = ssub.s32 128, 128
          %369 = vsyncadd %s363, %s368
          %s370 = smul.addr %s24, 128
          %s371 = scalar_lea.hbm %s0, %s370
          %s373 = sshll.u32 %s366, 4
          %s374 = int_to_ptr.vmem [resolvable:$true] %s373
          %376 = dma.hbm_to_vmem [thread:$0]  %s371, 128, %s374, %s363
        $region64: #{dtransformer_pallas.3} parent=59 // pred_fallthru
          _
      $region60: #{dtransformer_pallas.3} parent=5 // pred_fallthru
        _
      %p377 = scmp.le.s32.totalorder 1, %s24
      %p378 = scmp.lt.s32.totalorder %s24, 3
      %p379 = pnand %p377, %p378
      %p380 = pneg %p379
      // Predicated region
      $region65: #{dtransformer_pallas.3} parent=5 // pred_check
        _
      $region66: #{dtransformer_pallas.3} parent=5 // pred_check_branch
        %382 = sbr.rel (%p379) target = $region68
      $region67: #{dtransformer_pallas.3} parent=5 // pred_region
        %s383 = ssub.s32 %s24, 1
        %s384 = sand.u32 %s37, 1
        %s385 = scalar_lea.sflag [#allocation4], %s384
        %s386 = sand.u32 %s37, 1
        %s387 = smul.addr %s386, 8
        %s388 = scalar_lea.vmem [#allocation3], %s387
        // Predicated region
        $region69: #{dtransformer_pallas.3} parent=67 // pred_check
          %p389 = pneg %p50
        $region70: #{dtransformer_pallas.3} parent=67 // pred_check_branch
          %391 = sbr.rel (%p389) target = $region72
        $region71: #{dtransformer_pallas.3} parent=67 // pred_region
          %392 = dma.done %s385, 128
        $region72: #{dtransformer_pallas.3} parent=67 // pred_fallthru
          _
        %s393 = sand.u32 %s37, 1
        %s394 = scalar_lea.sflag [#allocation4], %s393
        %s395 = sand.u32 %s37, 1
        %s396 = smul.addr %s395, 8
        %s397 = scalar_lea.vmem [#allocation3], %s396
        %p398 = pneg %p50
        %p399 = pneg %p47
        %p400 = pneg %p71
        %p401 = pneg %p68
        %p402 = pneg %p92
        %p403 = pneg %p89
        %p404 = pneg %p113
        %p405 = pneg %p110
        %p406 = pneg %p134
        %p407 = pneg %p131
        %p408 = pneg %p155
        %p409 = pneg %p152
        %p410 = pneg %p176
        %p411 = pneg %p173
        %p412 = pneg %p197
        %p413 = pneg %p194
        %p414 = pneg %p218
        %p415 = pneg %p215
        %p416 = pneg %p239
        %p417 = pneg %p236
        %p418 = pneg %p260
        %p419 = pneg %p257
        %p420 = pneg %p281
        %p421 = pneg %p278
        %p422 = pneg %p307
        %p423 = pneg %p304
        %s424 = sand.u32 %s294, 1
        %s425 = scalar_lea.sflag [#allocation5], %s424
        %s426 = sand.u32 %s294, 1
        %s427 = smul.addr %s426, 8
        %s428 = scalar_lea.vmem [#allocation6], %s427
        %v429 = vld [vmem:[%s388] sm:$0xff]
        %v430 = vld [vmem:[%s1] sm:$0x1]
        %v431 = vld [vmem:[%s2] sm:$0x1]
        %vm432 = vcmask 261120
        %v433 = vsel %vm432, %v429, 0.0
        %434 = vadd.xlane.f32.xlu0 %v433
        %v435 = vpop.xlane.xlu0 %434
        %v436 = vrcp.pop 32.0
        %v437 = vmul.f32 %v435, %v436
        %v438 = vsub.f32 %v429, %v437
        %v439 = vmul.f32 %v438, %v438
        %v440 = vsel %vm432, %v439, 0.0
        %441 = vadd.xlane.f32.xlu0 %v440
        %v442 = vpop.xlane.xlu0 %441
        %v443 = vmul.f32 %v442, %v436
        %v444 = vadd.f32 %v443, 1e-05
        %v445 = vrsqrt.pop %v444
        %v446 = vmul.f32 %v438, %v445
        %v448 = vlaneseq
        %v449 = vshrl.u32 %v448, 7
        %v450 = vsub.s32 0, %v449
        %v451 = vrot.slane %v430, %v450
        %v453 = vmul.f32 %v446, %v451
        %v455 = vlaneseq
        %v456 = vshrl.u32 %v455, 7
        %v457 = vsub.s32 0, %v456
        %v458 = vrot.slane %v431, %v457
        %v460 = vadd.f32 %v453, %v458
        %v461 = vld [vmem:[%s3] sm:$0xff]
        %v462 = vld [vmem:[%s3 + $0x8] sm:$0xff]
        %v463 = vld [vmem:[%s3 + $0x10] sm:$0xff]
        %v464 = vld [vmem:[%s3 + $0x18] sm:$0xff]
        %v466 = vsel %vm432, %v460, 0
        %468 = vmatprep.subr.mxu0 0.0
        %469 = vmatpush1.msra.mxu0 0.0
        %470 = vmatprep.subr.mxu0 0.0
        %471 = vmatpush1.msra.mxu0 0.0
        %472 = vmatprep.subr.mxu0 0.0
        %473 = vmatpush1.msra.mxu0 0.0
        %474 = vmatprep.subr.mxu0 0.0
        %475 = vmatpush1.msra.mxu0 0.0
        %476 = vmatprep.subr.mxu0 0.0
        %477 = vmatpush1.msra.mxu0 0.0
        %478 = vmatprep.subr.mxu0 0.0
        %479 = vmatpush1.msra.mxu0 0.0
        %480 = vmatprep.subr.mxu0 0.0
        %481 = vmatpush1.msra.mxu0 0.0
        %482 = vmatprep.subr.mxu0 0.0
        %483 = vmatpush1.msra.mxu0 0.0
        %484 = vmatprep.subr.mxu0 0.0
        %485 = vmatpush1.msra.mxu0 0.0
        %486 = vmatprep.subr.mxu0 0.0
        %487 = vmatpush1.msra.mxu0 0.0
        %488 = vmatprep.subr.mxu0 0.0
        %489 = vmatpush1.msra.mxu0 0.0
        %490 = vmatprep.subr.mxu0 0.0
        %491 = vmatpush1.msra.mxu0 0.0
        %492 = vmatprep.subr.mxu0 0.0
        %493 = vmatpush1.msra.mxu0 %v464
        %494 = vmatprep.subr.mxu0 0.0
        %495 = vmatpush1.msra.mxu0 %v463
        %496 = vmatprep.subr.mxu0 0.0
        %497 = vmatpush1.msra.mxu0 %v462
        %498 = vmatprep.subr.mxu0 0.0
        %499 = vmatpush1.msra.mxu0 %v461
        %500 = vmatprep.subr.mxu0 0.0
        %501 = vmatpush2.msra.mxu0 0.0
        %502 = vmatprep.subr.mxu0 0.0
        %503 = vmatpush2.msra.mxu0 0.0
        %504 = vmatprep.subr.mxu0 0.0
        %505 = vmatpush2.msra.mxu0 0.0
        %506 = vmatprep.subr.mxu0 0.0
        %507 = vmatpush2.msra.mxu0 0.0
        %508 = vmatprep.subr.mxu0 0.0
        %509 = vmatpush2.msra.mxu0 0.0
        %510 = vmatprep.subr.mxu0 0.0
        %511 = vmatpush2.msra.mxu0 0.0
        %512 = vmatprep.subr.mxu0 0.0
        %513 = vmatpush2.msra.mxu0 0.0
        %514 = vmatprep.subr.mxu0 0.0
        %515 = vmatpush2.msra.mxu0 0.0
        %516 = vmatprep.subr.mxu0 0.0
        %517 = vmatpush2.msra.mxu0 0.0
        %518 = vmatprep.subr.mxu0 0.0
        %519 = vmatpush2.msra.mxu0 0.0
        %520 = vmatprep.subr.mxu0 0.0
        %521 = vmatpush2.msra.mxu0 0.0
        %522 = vmatprep.subr.mxu0 0.0
        %523 = vmatpush2.msra.mxu0 0.0
        %524 = vmatprep.subr.mxu0 0.0
        %525 = vmatpush2.msra.mxu0 0.0
        %526 = vmatprep.subr.mxu0 0.0
        %527 = vmatpush2.msra.mxu0 0.0
        %528 = vmatprep.subr.mxu0 0.0
        %529 = vmatpush2.msra.mxu0 0.0
        %530 = vmatprep.subr.mxu0 0.0
        %531 = vmatpush2.msra.mxu0 0.0
        %532 = vmatprep.mubr.f32.mxu0 0.0
        %533 = vmatmul.mubr.f32.gmra.mxu0 %v466
        %v534 = vpop.f32.mrf.mxu0
        %v535 = vadd.f32 0.0, %v534
        %v536 = vpop.f32.mrf.mxu0
        %537 = vdwg.mxu0
        %539 = vrot.lane.b32.xlu0 %v535, 96
        %v540 = vpop.permute.xlu0 %539
        %vm541 = vcmask 31744
        %v542 = vsel %vm541, %v535, 0
        %v544 = vsel %vm541, %v540, 0
        %546 = vmatprep.subr.mxu0 0.0
        %547 = vmatpush1.xpose.msra.mxu0 0.0
        %548 = vmatprep.subr.mxu0 0.0
        %549 = vmatpush1.xpose.msra.mxu0 0.0
        %550 = vmatprep.subr.mxu0 0.0
        %551 = vmatpush1.xpose.msra.mxu0 0.0
        %552 = vmatprep.subr.mxu0 0.0
        %553 = vmatpush1.xpose.msra.mxu0 0.0
        %554 = vmatprep.subr.mxu0 0.0
        %555 = vmatpush1.xpose.msra.mxu0 0.0
        %556 = vmatprep.subr.mxu0 0.0
        %557 = vmatpush1.xpose.msra.mxu0 0.0
        %558 = vmatprep.subr.mxu0 0.0
        %559 = vmatpush1.xpose.msra.mxu0 0.0
        %560 = vmatprep.subr.mxu0 0.0
        %561 = vmatpush1.xpose.msra.mxu0 0.0
        %562 = vmatprep.subr.mxu0 0.0
        %563 = vmatpush1.xpose.msra.mxu0 0.0
        %564 = vmatprep.subr.mxu0 0.0
        %565 = vmatpush1.xpose.msra.mxu0 0.0
        %566 = vmatprep.subr.mxu0 0.0
        %567 = vmatpush1.xpose.msra.mxu0 0.0
        %568 = vmatprep.subr.mxu0 0.0
        %569 = vmatpush1.xpose.msra.mxu0 0.0
        %570 = vmatprep.subr.mxu0 0.0
        %571 = vmatpush1.xpose.msra.mxu0 0.0
        %572 = vmatprep.subr.mxu0 0.0
        %573 = vmatpush1.xpose.msra.mxu0 0.0
        %574 = vmatprep.subr.mxu0 0.0
        %575 = vmatpush1.xpose.msra.mxu0 0.0
        %576 = vmatprep.subr.mxu0 0.0
        %577 = vmatpush1.xpose.msra.mxu0 %v544
        %578 = vmatprep.subr.mxu0 0.0
        %579 = vmatpush2.xpose.msra.mxu0 0.0
        %580 = vmatprep.subr.mxu0 0.0
        %581 = vmatpush2.xpose.msra.mxu0 0.0
        %582 = vmatprep.subr.mxu0 0.0
        %583 = vmatpush2.xpose.msra.mxu0 0.0
        %584 = vmatprep.subr.mxu0 0.0
        %585 = vmatpush2.xpose.msra.mxu0 0.0
        %586 = vmatprep.subr.mxu0 0.0
        %587 = vmatpush2.xpose.msra.mxu0 0.0
        %588 = vmatprep.subr.mxu0 0.0
        %589 = vmatpush2.xpose.msra.mxu0 0.0
        %590 = vmatprep.subr.mxu0 0.0
        %591 = vmatpush2.xpose.msra.mxu0 0.0
        %592 = vmatprep.subr.mxu0 0.0
        %593 = vmatpush2.xpose.msra.mxu0 0.0
        %594 = vmatprep.subr.mxu0 0.0
        %595 = vmatpush2.xpose.msra.mxu0 0.0
        %596 = vmatprep.subr.mxu0 0.0
        %597 = vmatpush2.xpose.msra.mxu0 0.0
        %598 = vmatprep.subr.mxu0 0.0
        %599 = vmatpush2.xpose.msra.mxu0 0.0
        %600 = vmatprep.subr.mxu0 0.0
        %601 = vmatpush2.xpose.msra.mxu0 0.0
        %602 = vmatprep.subr.mxu0 0.0
        %603 = vmatpush2.xpose.msra.mxu0 0.0
        %604 = vmatprep.subr.mxu0 0.0
        %605 = vmatpush2.xpose.msra.mxu0 0.0
        %606 = vmatprep.subr.mxu0 0.0
        %607 = vmatpush2.xpose.msra.mxu0 0.0
        %608 = vmatprep.subr.mxu0 0.0
        %609 = vmatpush2.xpose.msra.mxu0 0.0
        %610 = vmatprep.mubr.f32.mxu0 0.0
        %611 = vmatmul.mubr.f32.gmra.mxu0 %v542
        %v612 = vpop.f32.mrf.mxu0
        %v613 = vadd.f32 0.0, %v612
        %v614 = vpop.f32.mrf.mxu0
        %615 = vdwg.mxu0
        %vm616 = vcmask 64512
        %v617 = vsel %vm616, %v613, -inf
        %618 = vmax.xlane.f32.xlu0 %v617
        %v619 = vpop.xlane.xlu0 %618
        %v620 = vsub.f32 %v613, %v619
        %v621 = vmul.f32 %v620, 1.442695
        %v622 = vpow.pop %v621
        %v623 = vsel %vm616, %v622, 0.0
        %624 = vadd.xlane.f32.xlu0 %v623
        %v625 = vpop.xlane.xlu0 %624
        %v626 = vrcp.pop %v625
        %v627 = vmul.f32 %v625, %v626
        %v628 = vsub.f32 2.0, %v627
        %v629 = vmul.f32 %v626, %v628
        %630 = vrot.lane.b32.xlu0 %v535, 64
        %v631 = vpop.permute.xlu0 %630
        %v634 = vsel %vm616, %v622, 0
        %636 = vmatprep.subr.mxu0 0.0
        %637 = vmatpush1.msra.mxu0 0.0
        %638 = vmatprep.subr.mxu0 0.0
        %639 = vmatpush1.msra.mxu0 0.0
        %640 = vmatprep.subr.mxu0 0.0
        %641 = vmatpush1.msra.mxu0 0.0
        %642 = vmatprep.subr.mxu0 0.0
        %643 = vmatpush1.msra.mxu0 0.0
        %644 = vmatprep.subr.mxu0 0.0
        %645 = vmatpush1.msra.mxu0 0.0
        %646 = vmatprep.subr.mxu0 0.0
        %647 = vmatpush1.msra.mxu0 0.0
        %648 = vmatprep.subr.mxu0 0.0
        %649 = vmatpush1.msra.mxu0 0.0
        %650 = vmatprep.subr.mxu0 0.0
        %651 = vmatpush1.msra.mxu0 0.0
        %652 = vmatprep.subr.mxu0 0.0
        %653 = vmatpush1.msra.mxu0 0.0
        %654 = vmatprep.subr.mxu0 0.0
        %655 = vmatpush1.msra.mxu0 0.0
        %656 = vmatprep.subr.mxu0 0.0
        %657 = vmatpush1.msra.mxu0 0.0
        %658 = vmatprep.subr.mxu0 0.0
        %659 = vmatpush1.msra.mxu0 0.0
        %660 = vmatprep.subr.mxu0 0.0
        %661 = vmatpush1.msra.mxu0 0.0
        %662 = vmatprep.subr.mxu0 0.0
        %663 = vmatpush1.msra.mxu0 0.0
        %664 = vmatprep.subr.mxu0 0.0
        %665 = vmatpush1.msra.mxu0 0.0
        %666 = vmatprep.subr.mxu0 0.0
        %667 = vmatpush1.msra.mxu0 %v631
        %668 = vmatprep.subr.mxu0 0.0
        %669 = vmatpush2.msra.mxu0 0.0
        %670 = vmatprep.subr.mxu0 0.0
        %671 = vmatpush2.msra.mxu0 0.0
        %672 = vmatprep.subr.mxu0 0.0
        %673 = vmatpush2.msra.mxu0 0.0
        %674 = vmatprep.subr.mxu0 0.0
        %675 = vmatpush2.msra.mxu0 0.0
        %676 = vmatprep.subr.mxu0 0.0
        %677 = vmatpush2.msra.mxu0 0.0
        %678 = vmatprep.subr.mxu0 0.0
        %679 = vmatpush2.msra.mxu0 0.0
        %680 = vmatprep.subr.mxu0 0.0
        %681 = vmatpush2.msra.mxu0 0.0
        %682 = vmatprep.subr.mxu0 0.0
        %683 = vmatpush2.msra.mxu0 0.0
        %684 = vmatprep.subr.mxu0 0.0
        %685 = vmatpush2.msra.mxu0 0.0
        %686 = vmatprep.subr.mxu0 0.0
        %687 = vmatpush2.msra.mxu0 0.0
        %688 = vmatprep.subr.mxu0 0.0
        %689 = vmatpush2.msra.mxu0 0.0
        %690 = vmatprep.subr.mxu0 0.0
        %691 = vmatpush2.msra.mxu0 0.0
        %692 = vmatprep.subr.mxu0 0.0
        %693 = vmatpush2.msra.mxu0 0.0
        %694 = vmatprep.subr.mxu0 0.0
        %695 = vmatpush2.msra.mxu0 0.0
        %696 = vmatprep.subr.mxu0 0.0
        %697 = vmatpush2.msra.mxu0 0.0
        %698 = vmatprep.subr.mxu0 0.0
        %699 = vmatpush2.msra.mxu0 0.0
        %700 = vmatprep.mubr.f32.mxu0 0.0
        %701 = vmatmul.mubr.f32.gmra.mxu0 %v634
        %v702 = vpop.f32.mrf.mxu0
        %v703 = vadd.f32 0.0, %v702
        %v704 = vpop.f32.mrf.mxu0
        %705 = vdwg.mxu0
        %v706 = vmul.f32 %v703, %v629
        %707 = vst.msk [vmem:[#allocation2] sm:$0xff] %vm541, %v706
        %708 = vrot.lane.b32.xlu0 %v535, 124
        %v709 = vpop.permute.xlu0 %708
        %710 = vrot.lane.b32.xlu0 %v535, 92
        %v711 = vpop.permute.xlu0 %710
        %v712 = vsel %vm541, %v709, 0
        %v714 = vsel %vm541, %v711, 0
        %716 = vmatprep.subr.mxu0 0.0
        %717 = vmatpush1.xpose.msra.mxu0 0.0
        %718 = vmatprep.subr.mxu0 0.0
        %719 = vmatpush1.xpose.msra.mxu0 0.0
        %720 = vmatprep.subr.mxu0 0.0
        %721 = vmatpush1.xpose.msra.mxu0 0.0
        %722 = vmatprep.subr.mxu0 0.0
        %723 = vmatpush1.xpose.msra.mxu0 0.0
        %724 = vmatprep.subr.mxu0 0.0
        %725 = vmatpush1.xpose.msra.mxu0 0.0
        %726 = vmatprep.subr.mxu0 0.0
        %727 = vmatpush1.xpose.msra.mxu0 0.0
        %728 = vmatprep.subr.mxu0 0.0
        %729 = vmatpush1.xpose.msra.mxu0 0.0
        %730 = vmatprep.subr.mxu0 0.0
        %731 = vmatpush1.xpose.msra.mxu0 0.0
        %732 = vmatprep.subr.mxu0 0.0
        %733 = vmatpush1.xpose.msra.mxu0 0.0
        %734 = vmatprep.subr.mxu0 0.0
        %735 = vmatpush1.xpose.msra.mxu0 0.0
        %736 = vmatprep.subr.mxu0 0.0
        %737 = vmatpush1.xpose.msra.mxu0 0.0
        %738 = vmatprep.subr.mxu0 0.0
        %739 = vmatpush1.xpose.msra.mxu0 0.0
        %740 = vmatprep.subr.mxu0 0.0
        %741 = vmatpush1.xpose.msra.mxu0 0.0
        %742 = vmatprep.subr.mxu0 0.0
        %743 = vmatpush1.xpose.msra.mxu0 0.0
        %744 = vmatprep.subr.mxu0 0.0
        %745 = vmatpush1.xpose.msra.mxu0 0.0
        %746 = vmatprep.subr.mxu0 0.0
        %747 = vmatpush1.xpose.msra.mxu0 %v714
        %748 = vmatprep.subr.mxu0 0.0
        %749 = vmatpush2.xpose.msra.mxu0 0.0
        %750 = vmatprep.subr.mxu0 0.0
        %751 = vmatpush2.xpose.msra.mxu0 0.0
        %752 = vmatprep.subr.mxu0 0.0
        %753 = vmatpush2.xpose.msra.mxu0 0.0
        %754 = vmatprep.subr.mxu0 0.0
        %755 = vmatpush2.xpose.msra.mxu0 0.0
        %756 = vmatprep.subr.mxu0 0.0
        %757 = vmatpush2.xpose.msra.mxu0 0.0
        %758 = vmatprep.subr.mxu0 0.0
        %759 = vmatpush2.xpose.msra.mxu0 0.0
        %760 = vmatprep.subr.mxu0 0.0
        %761 = vmatpush2.xpose.msra.mxu0 0.0
        %762 = vmatprep.subr.mxu0 0.0
        %763 = vmatpush2.xpose.msra.mxu0 0.0
        %764 = vmatprep.subr.mxu0 0.0
        %765 = vmatpush2.xpose.msra.mxu0 0.0
        %766 = vmatprep.subr.mxu0 0.0
        %767 = vmatpush2.xpose.msra.mxu0 0.0
        %768 = vmatprep.subr.mxu0 0.0
        %769 = vmatpush2.xpose.msra.mxu0 0.0
        %770 = vmatprep.subr.mxu0 0.0
        %771 = vmatpush2.xpose.msra.mxu0 0.0
        %772 = vmatprep.subr.mxu0 0.0
        %773 = vmatpush2.xpose.msra.mxu0 0.0
        %774 = vmatprep.subr.mxu0 0.0
        %775 = vmatpush2.xpose.msra.mxu0 0.0
        %776 = vmatprep.subr.mxu0 0.0
        %777 = vmatpush2.xpose.msra.mxu0 0.0
        %778 = vmatprep.subr.mxu0 0.0
        %779 = vmatpush2.xpose.msra.mxu0 0.0
        %780 = vmatprep.mubr.f32.mxu0 0.0
        %781 = vmatmul.mubr.f32.gmra.mxu0 %v712
        %v782 = vpop.f32.mrf.mxu0
        %v783 = vadd.f32 0.0, %v782
        %v784 = vpop.f32.mrf.mxu0
        %785 = vdwg.mxu0
        %v786 = vsel %vm616, %v783, -inf
        %787 = vmax.xlane.f32.xlu0 %v786
        %v788 = vpop.xlane.xlu0 %787
        %v789 = vsub.f32 %v783, %v788
        %v790 = vmul.f32 %v789, 1.442695
        %v791 = vpow.pop %v790
        %v792 = vsel %vm616, %v791, 0.0
        %793 = vadd.xlane.f32.xlu0 %v792
        %v794 = vpop.xlane.xlu0 %793
        %v795 = vrcp.pop %v794
        %v796 = vmul.f32 %v794, %v795
        %v797 = vsub.f32 2.0, %v796
        %v798 = vmul.f32 %v795, %v797
        %799 = vrot.lane.b32.xlu0 %v535, 60
        %v800 = vpop.permute.xlu0 %799
        %v803 = vsel %vm616, %v791, 0
        %805 = vmatprep.subr.mxu0 0.0
        %806 = vmatpush1.msra.mxu0 0.0
        %807 = vmatprep.subr.mxu0 0.0
        %808 = vmatpush1.msra.mxu0 0.0
        %809 = vmatprep.subr.mxu0 0.0
        %810 = vmatpush1.msra.mxu0 0.0
        %811 = vmatprep.subr.mxu0 0.0
        %812 = vmatpush1.msra.mxu0 0.0
        %813 = vmatprep.subr.mxu0 0.0
        %814 = vmatpush1.msra.mxu0 0.0
        %815 = vmatprep.subr.mxu0 0.0
        %816 = vmatpush1.msra.mxu0 0.0
        %817 = vmatprep.subr.mxu0 0.0
        %818 = vmatpush1.msra.mxu0 0.0
        %819 = vmatprep.subr.mxu0 0.0
        %820 = vmatpush1.msra.mxu0 0.0
        %821 = vmatprep.subr.mxu0 0.0
        %822 = vmatpush1.msra.mxu0 0.0
        %823 = vmatprep.subr.mxu0 0.0
        %824 = vmatpush1.msra.mxu0 0.0
        %825 = vmatprep.subr.mxu0 0.0
        %826 = vmatpush1.msra.mxu0 0.0
        %827 = vmatprep.subr.mxu0 0.0
        %828 = vmatpush1.msra.mxu0 0.0
        %829 = vmatprep.subr.mxu0 0.0
        %830 = vmatpush1.msra.mxu0 0.0
        %831 = vmatprep.subr.mxu0 0.0
        %832 = vmatpush1.msra.mxu0 0.0
        %833 = vmatprep.subr.mxu0 0.0
        %834 = vmatpush1.msra.mxu0 0.0
        %835 = vmatprep.subr.mxu0 0.0
        %836 = vmatpush1.msra.mxu0 %v800
        %837 = vmatprep.subr.mxu0 0.0
        %838 = vmatpush2.msra.mxu0 0.0
        %839 = vmatprep.subr.mxu0 0.0
        %840 = vmatpush2.msra.mxu0 0.0
        %841 = vmatprep.subr.mxu0 0.0
        %842 = vmatpush2.msra.mxu0 0.0
        %843 = vmatprep.subr.mxu0 0.0
        %844 = vmatpush2.msra.mxu0 0.0
        %845 = vmatprep.subr.mxu0 0.0
        %846 = vmatpush2.msra.mxu0 0.0
        %847 = vmatprep.subr.mxu0 0.0
        %848 = vmatpush2.msra.mxu0 0.0
        %849 = vmatprep.subr.mxu0 0.0
        %850 = vmatpush2.msra.mxu0 0.0
        %851 = vmatprep.subr.mxu0 0.0
        %852 = vmatpush2.msra.mxu0 0.0
        %853 = vmatprep.subr.mxu0 0.0
        %854 = vmatpush2.msra.mxu0 0.0
        %855 = vmatprep.subr.mxu0 0.0
        %856 = vmatpush2.msra.mxu0 0.0
        %857 = vmatprep.subr.mxu0 0.0
        %858 = vmatpush2.msra.mxu0 0.0
        %859 = vmatprep.subr.mxu0 0.0
        %860 = vmatpush2.msra.mxu0 0.0
        %861 = vmatprep.subr.mxu0 0.0
        %862 = vmatpush2.msra.mxu0 0.0
        %863 = vmatprep.subr.mxu0 0.0
        %864 = vmatpush2.msra.mxu0 0.0
        %865 = vmatprep.subr.mxu0 0.0
        %866 = vmatpush2.msra.mxu0 0.0
        %867 = vmatprep.subr.mxu0 0.0
        %868 = vmatpush2.msra.mxu0 0.0
        %869 = vmatprep.mubr.f32.mxu0 0.0
        %870 = vmatmul.mubr.f32.gmra.mxu0 %v803
        %v871 = vpop.f32.mrf.mxu0
        %v872 = vadd.f32 0.0, %v871
        %v873 = vpop.f32.mrf.mxu0
        %874 = vdwg.mxu0
        %v875 = vmul.f32 %v872, %v798
        %877 = vrot.lane.b32.xlu0 %v875, 4
        %v878 = vpop.permute.xlu0 %877
        %vm880 = vcmask 64544
        %881 = vst.msk [vmem:[#allocation2] sm:$0xff] %vm880, %v878
        %882 = vrot.lane.b32.xlu0 %v535, 120
        %v883 = vpop.permute.xlu0 %882
        %884 = vrot.lane.b32.xlu0 %v535, 88
        %v885 = vpop.permute.xlu0 %884
        %v886 = vsel %vm541, %v883, 0
        %v888 = vsel %vm541, %v885, 0
        %890 = vmatprep.subr.mxu0 0.0
        %891 = vmatpush1.xpose.msra.mxu0 0.0
        %892 = vmatprep.subr.mxu0 0.0
        %893 = vmatpush1.xpose.msra.mxu0 0.0
        %894 = vmatprep.subr.mxu0 0.0
        %895 = vmatpush1.xpose.msra.mxu0 0.0
        %896 = vmatprep.subr.mxu0 0.0
        %897 = vmatpush1.xpose.msra.mxu0 0.0
        %898 = vmatprep.subr.mxu0 0.0
        %899 = vmatpush1.xpose.msra.mxu0 0.0
        %900 = vmatprep.subr.mxu0 0.0
        %901 = vmatpush1.xpose.msra.mxu0 0.0
        %902 = vmatprep.subr.mxu0 0.0
        %903 = vmatpush1.xpose.msra.mxu0 0.0
        %904 = vmatprep.subr.mxu0 0.0
        %905 = vmatpush1.xpose.msra.mxu0 0.0
        %906 = vmatprep.subr.mxu0 0.0
        %907 = vmatpush1.xpose.msra.mxu0 0.0
        %908 = vmatprep.subr.mxu0 0.0
        %909 = vmatpush1.xpose.msra.mxu0 0.0
        %910 = vmatprep.subr.mxu0 0.0
        %911 = vmatpush1.xpose.msra.mxu0 0.0
        %912 = vmatprep.subr.mxu0 0.0
        %913 = vmatpush1.xpose.msra.mxu0 0.0
        %914 = vmatprep.subr.mxu0 0.0
        %915 = vmatpush1.xpose.msra.mxu0 0.0
        %916 = vmatprep.subr.mxu0 0.0
        %917 = vmatpush1.xpose.msra.mxu0 0.0
        %918 = vmatprep.subr.mxu0 0.0
        %919 = vmatpush1.xpose.msra.mxu0 0.0
        %920 = vmatprep.subr.mxu0 0.0
        %921 = vmatpush1.xpose.msra.mxu0 %v888
        %922 = vmatprep.subr.mxu0 0.0
        %923 = vmatpush2.xpose.msra.mxu0 0.0
        %924 = vmatprep.subr.mxu0 0.0
        %925 = vmatpush2.xpose.msra.mxu0 0.0
        %926 = vmatprep.subr.mxu0 0.0
        %927 = vmatpush2.xpose.msra.mxu0 0.0
        %928 = vmatprep.subr.mxu0 0.0
        %929 = vmatpush2.xpose.msra.mxu0 0.0
        %930 = vmatprep.subr.mxu0 0.0
        %931 = vmatpush2.xpose.msra.mxu0 0.0
        %932 = vmatprep.subr.mxu0 0.0
        %933 = vmatpush2.xpose.msra.mxu0 0.0
        %934 = vmatprep.subr.mxu0 0.0
        %935 = vmatpush2.xpose.msra.mxu0 0.0
        %936 = vmatprep.subr.mxu0 0.0
        %937 = vmatpush2.xpose.msra.mxu0 0.0
        %938 = vmatprep.subr.mxu0 0.0
        %939 = vmatpush2.xpose.msra.mxu0 0.0
        %940 = vmatprep.subr.mxu0 0.0
        %941 = vmatpush2.xpose.msra.mxu0 0.0
        %942 = vmatprep.subr.mxu0 0.0
        %943 = vmatpush2.xpose.msra.mxu0 0.0
        %944 = vmatprep.subr.mxu0 0.0
        %945 = vmatpush2.xpose.msra.mxu0 0.0
        %946 = vmatprep.subr.mxu0 0.0
        %947 = vmatpush2.xpose.msra.mxu0 0.0
        %948 = vmatprep.subr.mxu0 0.0
        %949 = vmatpush2.xpose.msra.mxu0 0.0
        %950 = vmatprep.subr.mxu0 0.0
        %951 = vmatpush2.xpose.msra.mxu0 0.0
        %952 = vmatprep.subr.mxu0 0.0
        %953 = vmatpush2.xpose.msra.mxu0 0.0
        %954 = vmatprep.mubr.f32.mxu0 0.0
        %955 = vmatmul.mubr.f32.gmra.mxu0 %v886
        %v956 = vpop.f32.mrf.mxu0
        %v957 = vadd.f32 0.0, %v956
        %v958 = vpop.f32.mrf.mxu0
        %959 = vdwg.mxu0
        %v960 = vsel %vm616, %v957, -inf
        %961 = vmax.xlane.f32.xlu0 %v960
        %v962 = vpop.xlane.xlu0 %961
        %v963 = vsub.f32 %v957, %v962
        %v964 = vmul.f32 %v963, 1.442695
        %v965 = vpow.pop %v964
        %v966 = vsel %vm616, %v965, 0.0
        %967 = vadd.xlane.f32.xlu0 %v966
        %v968 = vpop.xlane.xlu0 %967
        %v969 = vrcp.pop %v968
        %v970 = vmul.f32 %v968, %v969
        %v971 = vsub.f32 2.0, %v970
        %v972 = vmul.f32 %v969, %v971
        %973 = vrot.lane.b32.xlu0 %v535, 56
        %v974 = vpop.permute.xlu0 %973
        %v977 = vsel %vm616, %v965, 0
        %979 = vmatprep.subr.mxu0 0.0
        %980 = vmatpush1.msra.mxu0 0.0
        %981 = vmatprep.subr.mxu0 0.0
        %982 = vmatpush1.msra.mxu0 0.0
        %983 = vmatprep.subr.mxu0 0.0
        %984 = vmatpush1.msra.mxu0 0.0
        %985 = vmatprep.subr.mxu0 0.0
        %986 = vmatpush1.msra.mxu0 0.0
        %987 = vmatprep.subr.mxu0 0.0
        %988 = vmatpush1.msra.mxu0 0.0
        %989 = vmatprep.subr.mxu0 0.0
        %990 = vmatpush1.msra.mxu0 0.0
        %991 = vmatprep.subr.mxu0 0.0
        %992 = vmatpush1.msra.mxu0 0.0
        %993 = vmatprep.subr.mxu0 0.0
        %994 = vmatpush1.msra.mxu0 0.0
        %995 = vmatprep.subr.mxu0 0.0
        %996 = vmatpush1.msra.mxu0 0.0
        %997 = vmatprep.subr.mxu0 0.0
        %998 = vmatpush1.msra.mxu0 0.0
        %999 = vmatprep.subr.mxu0 0.0
        %1000 = vmatpush1.msra.mxu0 0.0
        %1001 = vmatprep.subr.mxu0 0.0
        %1002 = vmatpush1.msra.mxu0 0.0
        %1003 = vmatprep.subr.mxu0 0.0
        %1004 = vmatpush1.msra.mxu0 0.0
        %1005 = vmatprep.subr.mxu0 0.0
        %1006 = vmatpush1.msra.mxu0 0.0
        %1007 = vmatprep.subr.mxu0 0.0
        %1008 = vmatpush1.msra.mxu0 0.0
        %1009 = vmatprep.subr.mxu0 0.0
        %1010 = vmatpush1.msra.mxu0 %v974
        %1011 = vmatprep.subr.mxu0 0.0
        %1012 = vmatpush2.msra.mxu0 0.0
        %1013 = vmatprep.subr.mxu0 0.0
        %1014 = vmatpush2.msra.mxu0 0.0
        %1015 = vmatprep.subr.mxu0 0.0
        %1016 = vmatpush2.msra.mxu0 0.0
        %1017 = vmatprep.subr.mxu0 0.0
        %1018 = vmatpush2.msra.mxu0 0.0
        %1019 = vmatprep.subr.mxu0 0.0
        %1020 = vmatpush2.msra.mxu0 0.0
        %1021 = vmatprep.subr.mxu0 0.0
        %1022 = vmatpush2.msra.mxu0 0.0
        %1023 = vmatprep.subr.mxu0 0.0
        %1024 = vmatpush2.msra.mxu0 0.0
        %1025 = vmatprep.subr.mxu0 0.0
        %1026 = vmatpush2.msra.mxu0 0.0
        %1027 = vmatprep.subr.mxu0 0.0
        %1028 = vmatpush2.msra.mxu0 0.0
        %1029 = vmatprep.subr.mxu0 0.0
        %1030 = vmatpush2.msra.mxu0 0.0
        %1031 = vmatprep.subr.mxu0 0.0
        %1032 = vmatpush2.msra.mxu0 0.0
        %1033 = vmatprep.subr.mxu0 0.0
        %1034 = vmatpush2.msra.mxu0 0.0
        %1035 = vmatprep.subr.mxu0 0.0
        %1036 = vmatpush2.msra.mxu0 0.0
        %1037 = vmatprep.subr.mxu0 0.0
        %1038 = vmatpush2.msra.mxu0 0.0
        %1039 = vmatprep.subr.mxu0 0.0
        %1040 = vmatpush2.msra.mxu0 0.0
        %1041 = vmatprep.subr.mxu0 0.0
        %1042 = vmatpush2.msra.mxu0 0.0
        %1043 = vmatprep.mubr.f32.mxu0 0.0
        %1044 = vmatmul.mubr.f32.gmra.mxu0 %v977
        %v1045 = vpop.f32.mrf.mxu0
        %v1046 = vadd.f32 0.0, %v1045
        %v1047 = vpop.f32.mrf.mxu0
        %1048 = vdwg.mxu0
        %v1049 = vmul.f32 %v1046, %v972
        %1051 = vrot.lane.b32.xlu0 %v1049, 8
        %v1052 = vpop.permute.xlu0 %1051
        %vm1054 = vcmask 97344
        %1055 = vst.msk [vmem:[#allocation2] sm:$0xff] %vm1054, %v1052
        %1056 = vrot.lane.b32.xlu0 %v535, 116
        %v1057 = vpop.permute.xlu0 %1056
        %1058 = vrot.lane.b32.xlu0 %v535, 84
        %v1059 = vpop.permute.xlu0 %1058
        %v1060 = vsel %vm541, %v1057, 0
        %v1062 = vsel %vm541, %v1059, 0
        %1064 = vmatprep.subr.mxu0 0.0
        %1065 = vmatpush1.xpose.msra.mxu0 0.0
        %1066 = vmatprep.subr.mxu0 0.0
        %1067 = vmatpush1.xpose.msra.mxu0 0.0
        %1068 = vmatprep.subr.mxu0 0.0
        %1069 = vmatpush1.xpose.msra.mxu0 0.0
        %1070 = vmatprep.subr.mxu0 0.0
        %1071 = vmatpush1.xpose.msra.mxu0 0.0
        %1072 = vmatprep.subr.mxu0 0.0
        %1073 = vmatpush1.xpose.msra.mxu0 0.0
        %1074 = vmatprep.subr.mxu0 0.0
        %1075 = vmatpush1.xpose.msra.mxu0 0.0
        %1076 = vmatprep.subr.mxu0 0.0
        %1077 = vmatpush1.xpose.msra.mxu0 0.0
        %1078 = vmatprep.subr.mxu0 0.0
        %1079 = vmatpush1.xpose.msra.mxu0 0.0
        %1080 = vmatprep.subr.mxu0 0.0
        %1081 = vmatpush1.xpose.msra.mxu0 0.0
        %1082 = vmatprep.subr.mxu0 0.0
        %1083 = vmatpush1.xpose.msra.mxu0 0.0
        %1084 = vmatprep.subr.mxu0 0.0
        %1085 = vmatpush1.xpose.msra.mxu0 0.0
        %1086 = vmatprep.subr.mxu0 0.0
        %1087 = vmatpush1.xpose.msra.mxu0 0.0
        %1088 = vmatprep.subr.mxu0 0.0
        %1089 = vmatpush1.xpose.msra.mxu0 0.0
        %1090 = vmatprep.subr.mxu0 0.0
        %1091 = vmatpush1.xpose.msra.mxu0 0.0
        %1092 = vmatprep.subr.mxu0 0.0
        %1093 = vmatpush1.xpose.msra.mxu0 0.0
        %1094 = vmatprep.subr.mxu0 0.0
        %1095 = vmatpush1.xpose.msra.mxu0 %v1062
        %1096 = vmatprep.subr.mxu0 0.0
        %1097 = vmatpush2.xpose.msra.mxu0 0.0
        %1098 = vmatprep.subr.mxu0 0.0
        %1099 = vmatpush2.xpose.msra.mxu0 0.0
        %1100 = vmatprep.subr.mxu0 0.0
        %1101 = vmatpush2.xpose.msra.mxu0 0.0
        %1102 = vmatprep.subr.mxu0 0.0
        %1103 = vmatpush2.xpose.msra.mxu0 0.0
        %1104 = vmatprep.subr.mxu0 0.0
        %1105 = vmatpush2.xpose.msra.mxu0 0.0
        %1106 = vmatprep.subr.mxu0 0.0
        %1107 = vmatpush2.xpose.msra.mxu0 0.0
        %1108 = vmatprep.subr.mxu0 0.0
        %1109 = vmatpush2.xpose.msra.mxu0 0.0
        %1110 = vmatprep.subr.mxu0 0.0
        %1111 = vmatpush2.xpose.msra.mxu0 0.0
        %1112 = vmatprep.subr.mxu0 0.0
        %1113 = vmatpush2.xpose.msra.mxu0 0.0
        %1114 = vmatprep.subr.mxu0 0.0
        %1115 = vmatpush2.xpose.msra.mxu0 0.0
        %1116 = vmatprep.subr.mxu0 0.0
        %1117 = vmatpush2.xpose.msra.mxu0 0.0
        %1118 = vmatprep.subr.mxu0 0.0
        %1119 = vmatpush2.xpose.msra.mxu0 0.0
        %1120 = vmatprep.subr.mxu0 0.0
        %1121 = vmatpush2.xpose.msra.mxu0 0.0
        %1122 = vmatprep.subr.mxu0 0.0
        %1123 = vmatpush2.xpose.msra.mxu0 0.0
        %1124 = vmatprep.subr.mxu0 0.0
        %1125 = vmatpush2.xpose.msra.mxu0 0.0
        %1126 = vmatprep.subr.mxu0 0.0
        %1127 = vmatpush2.xpose.msra.mxu0 0.0
        %1128 = vmatprep.mubr.f32.mxu0 0.0
        %1129 = vmatmul.mubr.f32.gmra.mxu0 %v1060
        %v1130 = vpop.f32.mrf.mxu0
        %v1131 = vadd.f32 0.0, %v1130
        %v1132 = vpop.f32.mrf.mxu0
        %1133 = vdwg.mxu0
        %v1134 = vsel %vm616, %v1131, -inf
        %1135 = vmax.xlane.f32.xlu0 %v1134
        %v1136 = vpop.xlane.xlu0 %1135
        %v1137 = vsub.f32 %v1131, %v1136
        %v1138 = vmul.f32 %v1137, 1.442695
        %v1139 = vpow.pop %v1138
        %v1140 = vsel %vm616, %v1139, 0.0
        %1141 = vadd.xlane.f32.xlu0 %v1140
        %v1142 = vpop.xlane.xlu0 %1141
        %v1143 = vrcp.pop %v1142
        %v1144 = vmul.f32 %v1142, %v1143
        %v1145 = vsub.f32 2.0, %v1144
        %v1146 = vmul.f32 %v1143, %v1145
        %1147 = vrot.lane.b32.xlu0 %v535, 52
        %v1148 = vpop.permute.xlu0 %1147
        %v1151 = vsel %vm616, %v1139, 0
        %1153 = vmatprep.subr.mxu0 0.0
        %1154 = vmatpush1.msra.mxu0 0.0
        %1155 = vmatprep.subr.mxu0 0.0
        %1156 = vmatpush1.msra.mxu0 0.0
        %1157 = vmatprep.subr.mxu0 0.0
        %1158 = vmatpush1.msra.mxu0 0.0
        %1159 = vmatprep.subr.mxu0 0.0
        %1160 = vmatpush1.msra.mxu0 0.0
        %1161 = vmatprep.subr.mxu0 0.0
        %1162 = vmatpush1.msra.mxu0 0.0
        %1163 = vmatprep.subr.mxu0 0.0
        %1164 = vmatpush1.msra.mxu0 0.0
        %1165 = vmatprep.subr.mxu0 0.0
        %1166 = vmatpush1.msra.mxu0 0.0
        %1167 = vmatprep.subr.mxu0 0.0
        %1168 = vmatpush1.msra.mxu0 0.0
        %1169 = vmatprep.subr.mxu0 0.0
        %1170 = vmatpush1.msra.mxu0 0.0
        %1171 = vmatprep.subr.mxu0 0.0
        %1172 = vmatpush1.msra.mxu0 0.0
        %1173 = vmatprep.subr.mxu0 0.0
        %1174 = vmatpush1.msra.mxu0 0.0
        %1175 = vmatprep.subr.mxu0 0.0
        %1176 = vmatpush1.msra.mxu0 0.0
        %1177 = vmatprep.subr.mxu0 0.0
        %1178 = vmatpush1.msra.mxu0 0.0
        %1179 = vmatprep.subr.mxu0 0.0
        %1180 = vmatpush1.msra.mxu0 0.0
        %1181 = vmatprep.subr.mxu0 0.0
        %1182 = vmatpush1.msra.mxu0 0.0
        %1183 = vmatprep.subr.mxu0 0.0
        %1184 = vmatpush1.msra.mxu0 %v1148
        %1185 = vmatprep.subr.mxu0 0.0
        %1186 = vmatpush2.msra.mxu0 0.0
        %1187 = vmatprep.subr.mxu0 0.0
        %1188 = vmatpush2.msra.mxu0 0.0
        %1189 = vmatprep.subr.mxu0 0.0
        %1190 = vmatpush2.msra.mxu0 0.0
        %1191 = vmatprep.subr.mxu0 0.0
        %1192 = vmatpush2.msra.mxu0 0.0
        %1193 = vmatprep.subr.mxu0 0.0
        %1194 = vmatpush2.msra.mxu0 0.0
        %1195 = vmatprep.subr.mxu0 0.0
        %1196 = vmatpush2.msra.mxu0 0.0
        %1197 = vmatprep.subr.mxu0 0.0
        %1198 = vmatpush2.msra.mxu0 0.0
        %1199 = vmatprep.subr.mxu0 0.0
        %1200 = vmatpush2.msra.mxu0 0.0
        %1201 = vmatprep.subr.mxu0 0.0
        %1202 = vmatpush2.msra.mxu0 0.0
        %1203 = vmatprep.subr.mxu0 0.0
        %1204 = vmatpush2.msra.mxu0 0.0
        %1205 = vmatprep.subr.mxu0 0.0
        %1206 = vmatpush2.msra.mxu0 0.0
        %1207 = vmatprep.subr.mxu0 0.0
        %1208 = vmatpush2.msra.mxu0 0.0
        %1209 = vmatprep.subr.mxu0 0.0
        %1210 = vmatpush2.msra.mxu0 0.0
        %1211 = vmatprep.subr.mxu0 0.0
        %1212 = vmatpush2.msra.mxu0 0.0
        %1213 = vmatprep.subr.mxu0 0.0
        %1214 = vmatpush2.msra.mxu0 0.0
        %1215 = vmatprep.subr.mxu0 0.0
        %1216 = vmatpush2.msra.mxu0 0.0
        %1217 = vmatprep.mubr.f32.mxu0 0.0
        %1218 = vmatmul.mubr.f32.gmra.mxu0 %v1151
        %v1219 = vpop.f32.mrf.mxu0
        %v1220 = vadd.f32 0.0, %v1219
        %v1221 = vpop.f32.mrf.mxu0
        %1222 = vdwg.mxu0
        %v1223 = vmul.f32 %v1220, %v1146
        %1225 = vrot.lane.b32.xlu0 %v1223, 12
        %v1226 = vpop.permute.xlu0 %1225
        %vm1228 = vcmask 130144
        %1229 = vst.msk [vmem:[#allocation2] sm:$0xff] %vm1228, %v1226
        %1230 = vrot.lane.b32.xlu0 %v535, 112
        %v1231 = vpop.permute.xlu0 %1230
        %1232 = vrot.lane.b32.xlu0 %v535, 80
        %v1233 = vpop.permute.xlu0 %1232
        %v1234 = vsel %vm541, %v1231, 0
        %v1236 = vsel %vm541, %v1233, 0
        %1238 = vmatprep.subr.mxu0 0.0
        %1239 = vmatpush1.xpose.msra.mxu0 0.0
        %1240 = vmatprep.subr.mxu0 0.0
        %1241 = vmatpush1.xpose.msra.mxu0 0.0
        %1242 = vmatprep.subr.mxu0 0.0
        %1243 = vmatpush1.xpose.msra.mxu0 0.0
        %1244 = vmatprep.subr.mxu0 0.0
        %1245 = vmatpush1.xpose.msra.mxu0 0.0
        %1246 = vmatprep.subr.mxu0 0.0
        %1247 = vmatpush1.xpose.msra.mxu0 0.0
        %1248 = vmatprep.subr.mxu0 0.0
        %1249 = vmatpush1.xpose.msra.mxu0 0.0
        %1250 = vmatprep.subr.mxu0 0.0
        %1251 = vmatpush1.xpose.msra.mxu0 0.0
        %1252 = vmatprep.subr.mxu0 0.0
        %1253 = vmatpush1.xpose.msra.mxu0 0.0
        %1254 = vmatprep.subr.mxu0 0.0
        %1255 = vmatpush1.xpose.msra.mxu0 0.0
        %1256 = vmatprep.subr.mxu0 0.0
        %1257 = vmatpush1.xpose.msra.mxu0 0.0
        %1258 = vmatprep.subr.mxu0 0.0
        %1259 = vmatpush1.xpose.msra.mxu0 0.0
        %1260 = vmatprep.subr.mxu0 0.0
        %1261 = vmatpush1.xpose.msra.mxu0 0.0
        %1262 = vmatprep.subr.mxu0 0.0
        %1263 = vmatpush1.xpose.msra.mxu0 0.0
        %1264 = vmatprep.subr.mxu0 0.0
        %1265 = vmatpush1.xpose.msra.mxu0 0.0
        %1266 = vmatprep.subr.mxu0 0.0
        %1267 = vmatpush1.xpose.msra.mxu0 0.0
        %1268 = vmatprep.subr.mxu0 0.0
        %1269 = vmatpush1.xpose.msra.mxu0 %v1236
        %1270 = vmatprep.subr.mxu0 0.0
        %1271 = vmatpush2.xpose.msra.mxu0 0.0
        %1272 = vmatprep.subr.mxu0 0.0
        %1273 = vmatpush2.xpose.msra.mxu0 0.0
        %1274 = vmatprep.subr.mxu0 0.0
        %1275 = vmatpush2.xpose.msra.mxu0 0.0
        %1276 = vmatprep.subr.mxu0 0.0
        %1277 = vmatpush2.xpose.msra.mxu0 0.0
        %1278 = vmatprep.subr.mxu0 0.0
        %1279 = vmatpush2.xpose.msra.mxu0 0.0
        %1280 = vmatprep.subr.mxu0 0.0
        %1281 = vmatpush2.xpose.msra.mxu0 0.0
        %1282 = vmatprep.subr.mxu0 0.0
        %1283 = vmatpush2.xpose.msra.mxu0 0.0
        %1284 = vmatprep.subr.mxu0 0.0
        %1285 = vmatpush2.xpose.msra.mxu0 0.0
        %1286 = vmatprep.subr.mxu0 0.0
        %1287 = vmatpush2.xpose.msra.mxu0 0.0
        %1288 = vmatprep.subr.mxu0 0.0
        %1289 = vmatpush2.xpose.msra.mxu0 0.0
        %1290 = vmatprep.subr.mxu0 0.0
        %1291 = vmatpush2.xpose.msra.mxu0 0.0
        %1292 = vmatprep.subr.mxu0 0.0
        %1293 = vmatpush2.xpose.msra.mxu0 0.0
        %1294 = vmatprep.subr.mxu0 0.0
        %1295 = vmatpush2.xpose.msra.mxu0 0.0
        %1296 = vmatprep.subr.mxu0 0.0
        %1297 = vmatpush2.xpose.msra.mxu0 0.0
        %1298 = vmatprep.subr.mxu0 0.0
        %1299 = vmatpush2.xpose.msra.mxu0 0.0
        %1300 = vmatprep.subr.mxu0 0.0
        %1301 = vmatpush2.xpose.msra.mxu0 0.0
        %1302 = vmatprep.mubr.f32.mxu0 0.0
        %1303 = vmatmul.mubr.f32.gmra.mxu0 %v1234
        %v1304 = vpop.f32.mrf.mxu0
        %v1305 = vadd.f32 0.0, %v1304
        %v1306 = vpop.f32.mrf.mxu0
        %1307 = vdwg.mxu0
        %v1308 = vsel %vm616, %v1305, -inf
        %1309 = vmax.xlane.f32.xlu0 %v1308
        %v1310 = vpop.xlane.xlu0 %1309
        %v1311 = vsub.f32 %v1305, %v1310
        %v1312 = vmul.f32 %v1311, 1.442695
        %v1313 = vpow.pop %v1312
        %v1314 = vsel %vm616, %v1313, 0.0
        %1315 = vadd.xlane.f32.xlu0 %v1314
        %v1316 = vpop.xlane.xlu0 %1315
        %v1317 = vrcp.pop %v1316
        %v1318 = vmul.f32 %v1316, %v1317
        %v1319 = vsub.f32 2.0, %v1318
        %v1320 = vmul.f32 %v1317, %v1319
        %1321 = vrot.lane.b32.xlu0 %v535, 48
        %v1322 = vpop.permute.xlu0 %1321
        %v1325 = vsel %vm616, %v1313, 0
        %1327 = vmatprep.subr.mxu0 0.0
        %1328 = vmatpush1.msra.mxu0 0.0
        %1329 = vmatprep.subr.mxu0 0.0
        %1330 = vmatpush1.msra.mxu0 0.0
        %1331 = vmatprep.subr.mxu0 0.0
        %1332 = vmatpush1.msra.mxu0 0.0
        %1333 = vmatprep.subr.mxu0 0.0
        %1334 = vmatpush1.msra.mxu0 0.0
        %1335 = vmatprep.subr.mxu0 0.0
        %1336 = vmatpush1.msra.mxu0 0.0
        %1337 = vmatprep.subr.mxu0 0.0
        %1338 = vmatpush1.msra.mxu0 0.0
        %1339 = vmatprep.subr.mxu0 0.0
        %1340 = vmatpush1.msra.mxu0 0.0
        %1341 = vmatprep.subr.mxu0 0.0
        %1342 = vmatpush1.msra.mxu0 0.0
        %1343 = vmatprep.subr.mxu0 0.0
        %1344 = vmatpush1.msra.mxu0 0.0
        %1345 = vmatprep.subr.mxu0 0.0
        %1346 = vmatpush1.msra.mxu0 0.0
        %1347 = vmatprep.subr.mxu0 0.0
        %1348 = vmatpush1.msra.mxu0 0.0
        %1349 = vmatprep.subr.mxu0 0.0
        %1350 = vmatpush1.msra.mxu0 0.0
        %1351 = vmatprep.subr.mxu0 0.0
        %1352 = vmatpush1.msra.mxu0 0.0
        %1353 = vmatprep.subr.mxu0 0.0
        %1354 = vmatpush1.msra.mxu0 0.0
        %1355 = vmatprep.subr.mxu0 0.0
        %1356 = vmatpush1.msra.mxu0 0.0
        %1357 = vmatprep.subr.mxu0 0.0
        %1358 = vmatpush1.msra.mxu0 %v1322
        %1359 = vmatprep.subr.mxu0 0.0
        %1360 = vmatpush2.msra.mxu0 0.0
        %1361 = vmatprep.subr.mxu0 0.0
        %1362 = vmatpush2.msra.mxu0 0.0
        %1363 = vmatprep.subr.mxu0 0.0
        %1364 = vmatpush2.msra.mxu0 0.0
        %1365 = vmatprep.subr.mxu0 0.0
        %1366 = vmatpush2.msra.mxu0 0.0
        %1367 = vmatprep.subr.mxu0 0.0
        %1368 = vmatpush2.msra.mxu0 0.0
        %1369 = vmatprep.subr.mxu0 0.0
        %1370 = vmatpush2.msra.mxu0 0.0
        %1371 = vmatprep.subr.mxu0 0.0
        %1372 = vmatpush2.msra.mxu0 0.0
        %1373 = vmatprep.subr.mxu0 0.0
        %1374 = vmatpush2.msra.mxu0 0.0
        %1375 = vmatprep.subr.mxu0 0.0
        %1376 = vmatpush2.msra.mxu0 0.0
        %1377 = vmatprep.subr.mxu0 0.0
        %1378 = vmatpush2.msra.mxu0 0.0
        %1379 = vmatprep.subr.mxu0 0.0
        %1380 = vmatpush2.msra.mxu0 0.0
        %1381 = vmatprep.subr.mxu0 0.0
        %1382 = vmatpush2.msra.mxu0 0.0
        %1383 = vmatprep.subr.mxu0 0.0
        %1384 = vmatpush2.msra.mxu0 0.0
        %1385 = vmatprep.subr.mxu0 0.0
        %1386 = vmatpush2.msra.mxu0 0.0
        %1387 = vmatprep.subr.mxu0 0.0
        %1388 = vmatpush2.msra.mxu0 0.0
        %1389 = vmatprep.subr.mxu0 0.0
        %1390 = vmatpush2.msra.mxu0 0.0
        %1391 = vmatprep.mubr.f32.mxu0 0.0
        %1392 = vmatmul.mubr.f32.gmra.mxu0 %v1325
        %v1393 = vpop.f32.mrf.mxu0
        %v1394 = vadd.f32 0.0, %v1393
        %v1395 = vpop.f32.mrf.mxu0
        %1396 = vdwg.mxu0
        %v1397 = vmul.f32 %v1394, %v1320
        %1399 = vrot.lane.b32.xlu0 %v1397, 16
        %v1400 = vpop.permute.xlu0 %1399
        %vm1402 = vcmask 162944
        %1403 = vst.msk [vmem:[#allocation2] sm:$0xff] %vm1402, %v1400
        %1404 = vrot.lane.b32.xlu0 %v535, 108
        %v1405 = vpop.permute.xlu0 %1404
        %1406 = vrot.lane.b32.xlu0 %v535, 76
        %v1407 = vpop.permute.xlu0 %1406
        %v1408 = vsel %vm541, %v1405, 0
        %v1410 = vsel %vm541, %v1407, 0
        %1412 = vmatprep.subr.mxu0 0.0
        %1413 = vmatpush1.xpose.msra.mxu0 0.0
        %1414 = vmatprep.subr.mxu0 0.0
        %1415 = vmatpush1.xpose.msra.mxu0 0.0
        %1416 = vmatprep.subr.mxu0 0.0
        %1417 = vmatpush1.xpose.msra.mxu0 0.0
        %1418 = vmatprep.subr.mxu0 0.0
        %1419 = vmatpush1.xpose.msra.mxu0 0.0
        %1420 = vmatprep.subr.mxu0 0.0
        %1421 = vmatpush1.xpose.msra.mxu0 0.0
        %1422 = vmatprep.subr.mxu0 0.0
        %1423 = vmatpush1.xpose.msra.mxu0 0.0
        %1424 = vmatprep.subr.mxu0 0.0
        %1425 = vmatpush1.xpose.msra.mxu0 0.0
        %1426 = vmatprep.subr.mxu0 0.0
        %1427 = vmatpush1.xpose.msra.mxu0 0.0
        %1428 = vmatprep.subr.mxu0 0.0
        %1429 = vmatpush1.xpose.msra.mxu0 0.0
        %1430 = vmatprep.subr.mxu0 0.0
        %1431 = vmatpush1.xpose.msra.mxu0 0.0
        %1432 = vmatprep.subr.mxu0 0.0
        %1433 = vmatpush1.xpose.msra.mxu0 0.0
        %1434 = vmatprep.subr.mxu0 0.0
        %1435 = vmatpush1.xpose.msra.mxu0 0.0
        %1436 = vmatprep.subr.mxu0 0.0
        %1437 = vmatpush1.xpose.msra.mxu0 0.0
        %1438 = vmatprep.subr.mxu0 0.0
        %1439 = vmatpush1.xpose.msra.mxu0 0.0
        %1440 = vmatprep.subr.mxu0 0.0
        %1441 = vmatpush1.xpose.msra.mxu0 0.0
        %1442 = vmatprep.subr.mxu0 0.0
        %1443 = vmatpush1.xpose.msra.mxu0 %v1410
        %1444 = vmatprep.subr.mxu0 0.0
        %1445 = vmatpush2.xpose.msra.mxu0 0.0
        %1446 = vmatprep.subr.mxu0 0.0
        %1447 = vmatpush2.xpose.msra.mxu0 0.0
        %1448 = vmatprep.subr.mxu0 0.0
        %1449 = vmatpush2.xpose.msra.mxu0 0.0
        %1450 = vmatprep.subr.mxu0 0.0
        %1451 = vmatpush2.xpose.msra.mxu0 0.0
        %1452 = vmatprep.subr.mxu0 0.0
        %1453 = vmatpush2.xpose.msra.mxu0 0.0
        %1454 = vmatprep.subr.mxu0 0.0
        %1455 = vmatpush2.xpose.msra.mxu0 0.0
        %1456 = vmatprep.subr.mxu0 0.0
        %1457 = vmatpush2.xpose.msra.mxu0 0.0
        %1458 = vmatprep.subr.mxu0 0.0
        %1459 = vmatpush2.xpose.msra.mxu0 0.0
        %1460 = vmatprep.subr.mxu0 0.0
        %1461 = vmatpush2.xpose.msra.mxu0 0.0
        %1462 = vmatprep.subr.mxu0 0.0
        %1463 = vmatpush2.xpose.msra.mxu0 0.0
        %1464 = vmatprep.subr.mxu0 0.0
        %1465 = vmatpush2.xpose.msra.mxu0 0.0
        %1466 = vmatprep.subr.mxu0 0.0
        %1467 = vmatpush2.xpose.msra.mxu0 0.0
        %1468 = vmatprep.subr.mxu0 0.0
        %1469 = vmatpush2.xpose.msra.mxu0 0.0
        %1470 = vmatprep.subr.mxu0 0.0
        %1471 = vmatpush2.xpose.msra.mxu0 0.0
        %1472 = vmatprep.subr.mxu0 0.0
        %1473 = vmatpush2.xpose.msra.mxu0 0.0
        %1474 = vmatprep.subr.mxu0 0.0
        %1475 = vmatpush2.xpose.msra.mxu0 0.0
        %1476 = vmatprep.mubr.f32.mxu0 0.0
        %1477 = vmatmul.mubr.f32.gmra.mxu0 %v1408
        %v1478 = vpop.f32.mrf.mxu0
        %v1479 = vadd.f32 0.0, %v1478
        %v1480 = vpop.f32.mrf.mxu0
        %1481 = vdwg.mxu0
        %v1482 = vsel %vm616, %v1479, -inf
        %1483 = vmax.xlane.f32.xlu0 %v1482
        %v1484 = vpop.xlane.xlu0 %1483
        %v1485 = vsub.f32 %v1479, %v1484
        %v1486 = vmul.f32 %v1485, 1.442695
        %v1487 = vpow.pop %v1486
        %v1488 = vsel %vm616, %v1487, 0.0
        %1489 = vadd.xlane.f32.xlu0 %v1488
        %v1490 = vpop.xlane.xlu0 %1489
        %v1491 = vrcp.pop %v1490
        %v1492 = vmul.f32 %v1490, %v1491
        %v1493 = vsub.f32 2.0, %v1492
        %v1494 = vmul.f32 %v1491, %v1493
        %1495 = vrot.lane.b32.xlu0 %v535, 44
        %v1496 = vpop.permute.xlu0 %1495
        %v1499 = vsel %vm616, %v1487, 0
        %1501 = vmatprep.subr.mxu0 0.0
        %1502 = vmatpush1.msra.mxu0 0.0
        %1503 = vmatprep.subr.mxu0 0.0
        %1504 = vmatpush1.msra.mxu0 0.0
        %1505 = vmatprep.subr.mxu0 0.0
        %1506 = vmatpush1.msra.mxu0 0.0
        %1507 = vmatprep.subr.mxu0 0.0
        %1508 = vmatpush1.msra.mxu0 0.0
        %1509 = vmatprep.subr.mxu0 0.0
        %1510 = vmatpush1.msra.mxu0 0.0
        %1511 = vmatprep.subr.mxu0 0.0
        %1512 = vmatpush1.msra.mxu0 0.0
        %1513 = vmatprep.subr.mxu0 0.0
        %1514 = vmatpush1.msra.mxu0 0.0
        %1515 = vmatprep.subr.mxu0 0.0
        %1516 = vmatpush1.msra.mxu0 0.0
        %1517 = vmatprep.subr.mxu0 0.0
        %1518 = vmatpush1.msra.mxu0 0.0
        %1519 = vmatprep.subr.mxu0 0.0
        %1520 = vmatpush1.msra.mxu0 0.0
        %1521 = vmatprep.subr.mxu0 0.0
        %1522 = vmatpush1.msra.mxu0 0.0
        %1523 = vmatprep.subr.mxu0 0.0
        %1524 = vmatpush1.msra.mxu0 0.0
        %1525 = vmatprep.subr.mxu0 0.0
        %1526 = vmatpush1.msra.mxu0 0.0
        %1527 = vmatprep.subr.mxu0 0.0
        %1528 = vmatpush1.msra.mxu0 0.0
        %1529 = vmatprep.subr.mxu0 0.0
        %1530 = vmatpush1.msra.mxu0 0.0
        %1531 = vmatprep.subr.mxu0 0.0
        %1532 = vmatpush1.msra.mxu0 %v1496
        %1533 = vmatprep.subr.mxu0 0.0
        %1534 = vmatpush2.msra.mxu0 0.0
        %1535 = vmatprep.subr.mxu0 0.0
        %1536 = vmatpush2.msra.mxu0 0.0
        %1537 = vmatprep.subr.mxu0 0.0
        %1538 = vmatpush2.msra.mxu0 0.0
        %1539 = vmatprep.subr.mxu0 0.0
        %1540 = vmatpush2.msra.mxu0 0.0
        %1541 = vmatprep.subr.mxu0 0.0
        %1542 = vmatpush2.msra.mxu0 0.0
        %1543 = vmatprep.subr.mxu0 0.0
        %1544 = vmatpush2.msra.mxu0 0.0
        %1545 = vmatprep.subr.mxu0 0.0
        %1546 = vmatpush2.msra.mxu0 0.0
        %1547 = vmatprep.subr.mxu0 0.0
        %1548 = vmatpush2.msra.mxu0 0.0
        %1549 = vmatprep.subr.mxu0 0.0
        %1550 = vmatpush2.msra.mxu0 0.0
        %1551 = vmatprep.subr.mxu0 0.0
        %1552 = vmatpush2.msra.mxu0 0.0
        %1553 = vmatprep.subr.mxu0 0.0
        %1554 = vmatpush2.msra.mxu0 0.0
        %1555 = vmatprep.subr.mxu0 0.0
        %1556 = vmatpush2.msra.mxu0 0.0
        %1557 = vmatprep.subr.mxu0 0.0
        %1558 = vmatpush2.msra.mxu0 0.0
        %1559 = vmatprep.subr.mxu0 0.0
        %1560 = vmatpush2.msra.mxu0 0.0
        %1561 = vmatprep.subr.mxu0 0.0
        %1562 = vmatpush2.msra.mxu0 0.0
        %1563 = vmatprep.subr.mxu0 0.0
        %1564 = vmatpush2.msra.mxu0 0.0
        %1565 = vmatprep.mubr.f32.mxu0 0.0
        %1566 = vmatmul.mubr.f32.gmra.mxu0 %v1499
        %v1567 = vpop.f32.mrf.mxu0
        %v1568 = vadd.f32 0.0, %v1567
        %v1569 = vpop.f32.mrf.mxu0
        %1570 = vdwg.mxu0
        %v1571 = vmul.f32 %v1568, %v1494
        %1573 = vrot.lane.b32.xlu0 %v1571, 20
        %v1574 = vpop.permute.xlu0 %1573
        %vm1576 = vcmask 195744
        %1577 = vst.msk [vmem:[#allocation2] sm:$0xff] %vm1576, %v1574
        %1578 = vrot.lane.b32.xlu0 %v535, 104
        %v1579 = vpop.permute.xlu0 %1578
        %1580 = vrot.lane.b32.xlu0 %v535, 72
        %v1581 = vpop.permute.xlu0 %1580
        %v1582 = vsel %vm541, %v1579, 0
        %v1584 = vsel %vm541, %v1581, 0
        %1586 = vmatprep.subr.mxu0 0.0
        %1587 = vmatpush1.xpose.msra.mxu0 0.0
        %1588 = vmatprep.subr.mxu0 0.0
        %1589 = vmatpush1.xpose.msra.mxu0 0.0
        %1590 = vmatprep.subr.mxu0 0.0
        %1591 = vmatpush1.xpose.msra.mxu0 0.0
        %1592 = vmatprep.subr.mxu0 0.0
        %1593 = vmatpush1.xpose.msra.mxu0 0.0
        %1594 = vmatprep.subr.mxu0 0.0
        %1595 = vmatpush1.xpose.msra.mxu0 0.0
        %1596 = vmatprep.subr.mxu0 0.0
        %1597 = vmatpush1.xpose.msra.mxu0 0.0
        %1598 = vmatprep.subr.mxu0 0.0
        %1599 = vmatpush1.xpose.msra.mxu0 0.0
        %1600 = vmatprep.subr.mxu0 0.0
        %1601 = vmatpush1.xpose.msra.mxu0 0.0
        %1602 = vmatprep.subr.mxu0 0.0
        %1603 = vmatpush1.xpose.msra.mxu0 0.0
        %1604 = vmatprep.subr.mxu0 0.0
        %1605 = vmatpush1.xpose.msra.mxu0 0.0
        %1606 = vmatprep.subr.mxu0 0.0
        %1607 = vmatpush1.xpose.msra.mxu0 0.0
        %1608 = vmatprep.subr.mxu0 0.0
        %1609 = vmatpush1.xpose.msra.mxu0 0.0
        %1610 = vmatprep.subr.mxu0 0.0
        %1611 = vmatpush1.xpose.msra.mxu0 0.0
        %1612 = vmatprep.subr.mxu0 0.0
        %1613 = vmatpush1.xpose.msra.mxu0 0.0
        %1614 = vmatprep.subr.mxu0 0.0
        %1615 = vmatpush1.xpose.msra.mxu0 0.0
        %1616 = vmatprep.subr.mxu0 0.0
        %1617 = vmatpush1.xpose.msra.mxu0 %v1584
        %1618 = vmatprep.subr.mxu0 0.0
        %1619 = vmatpush2.xpose.msra.mxu0 0.0
        %1620 = vmatprep.subr.mxu0 0.0
        %1621 = vmatpush2.xpose.msra.mxu0 0.0
        %1622 = vmatprep.subr.mxu0 0.0
        %1623 = vmatpush2.xpose.msra.mxu0 0.0
        %1624 = vmatprep.subr.mxu0 0.0
        %1625 = vmatpush2.xpose.msra.mxu0 0.0
        %1626 = vmatprep.subr.mxu0 0.0
        %1627 = vmatpush2.xpose.msra.mxu0 0.0
        %1628 = vmatprep.subr.mxu0 0.0
        %1629 = vmatpush2.xpose.msra.mxu0 0.0
        %1630 = vmatprep.subr.mxu0 0.0
        %1631 = vmatpush2.xpose.msra.mxu0 0.0
        %1632 = vmatprep.subr.mxu0 0.0
        %1633 = vmatpush2.xpose.msra.mxu0 0.0
        %1634 = vmatprep.subr.mxu0 0.0
        %1635 = vmatpush2.xpose.msra.mxu0 0.0
        %1636 = vmatprep.subr.mxu0 0.0
        %1637 = vmatpush2.xpose.msra.mxu0 0.0
        %1638 = vmatprep.subr.mxu0 0.0
        %1639 = vmatpush2.xpose.msra.mxu0 0.0
        %1640 = vmatprep.subr.mxu0 0.0
        %1641 = vmatpush2.xpose.msra.mxu0 0.0
        %1642 = vmatprep.subr.mxu0 0.0
        %1643 = vmatpush2.xpose.msra.mxu0 0.0
        %1644 = vmatprep.subr.mxu0 0.0
        %1645 = vmatpush2.xpose.msra.mxu0 0.0
        %1646 = vmatprep.subr.mxu0 0.0
        %1647 = vmatpush2.xpose.msra.mxu0 0.0
        %1648 = vmatprep.subr.mxu0 0.0
        %1649 = vmatpush2.xpose.msra.mxu0 0.0
        %1650 = vmatprep.mubr.f32.mxu0 0.0
        %1651 = vmatmul.mubr.f32.gmra.mxu0 %v1582
        %v1652 = vpop.f32.mrf.mxu0
        %v1653 = vadd.f32 0.0, %v1652
        %v1654 = vpop.f32.mrf.mxu0
        %1655 = vdwg.mxu0
        %v1656 = vsel %vm616, %v1653, -inf
        %1657 = vmax.xlane.f32.xlu0 %v1656
        %v1658 = vpop.xlane.xlu0 %1657
        %v1659 = vsub.f32 %v1653, %v1658
        %v1660 = vmul.f32 %v1659, 1.442695
        %v1661 = vpow.pop %v1660
        %v1662 = vsel %vm616, %v1661, 0.0
        %1663 = vadd.xlane.f32.xlu0 %v1662
        %v1664 = vpop.xlane.xlu0 %1663
        %v1665 = vrcp.pop %v1664
        %v1666 = vmul.f32 %v1664, %v1665
        %v1667 = vsub.f32 2.0, %v1666
        %v1668 = vmul.f32 %v1665, %v1667
        %1669 = vrot.lane.b32.xlu0 %v535, 40
        %v1670 = vpop.permute.xlu0 %1669
        %v1673 = vsel %vm616, %v1661, 0
        %1675 = vmatprep.subr.mxu0 0.0
        %1676 = vmatpush1.msra.mxu0 0.0
        %1677 = vmatprep.subr.mxu0 0.0
        %1678 = vmatpush1.msra.mxu0 0.0
        %1679 = vmatprep.subr.mxu0 0.0
        %1680 = vmatpush1.msra.mxu0 0.0
        %1681 = vmatprep.subr.mxu0 0.0
        %1682 = vmatpush1.msra.mxu0 0.0
        %1683 = vmatprep.subr.mxu0 0.0
        %1684 = vmatpush1.msra.mxu0 0.0
        %1685 = vmatprep.subr.mxu0 0.0
        %1686 = vmatpush1.msra.mxu0 0.0
        %1687 = vmatprep.subr.mxu0 0.0
        %1688 = vmatpush1.msra.mxu0 0.0
        %1689 = vmatprep.subr.mxu0 0.0
        %1690 = vmatpush1.msra.mxu0 0.0
        %1691 = vmatprep.subr.mxu0 0.0
        %1692 = vmatpush1.msra.mxu0 0.0
        %1693 = vmatprep.subr.mxu0 0.0
        %1694 = vmatpush1.msra.mxu0 0.0
        %1695 = vmatprep.subr.mxu0 0.0
        %1696 = vmatpush1.msra.mxu0 0.0
        %1697 = vmatprep.subr.mxu0 0.0
        %1698 = vmatpush1.msra.mxu0 0.0
        %1699 = vmatprep.subr.mxu0 0.0
        %1700 = vmatpush1.msra.mxu0 0.0
        %1701 = vmatprep.subr.mxu0 0.0
        %1702 = vmatpush1.msra.mxu0 0.0
        %1703 = vmatprep.subr.mxu0 0.0
        %1704 = vmatpush1.msra.mxu0 0.0
        %1705 = vmatprep.subr.mxu0 0.0
        %1706 = vmatpush1.msra.mxu0 %v1670
        %1707 = vmatprep.subr.mxu0 0.0
        %1708 = vmatpush2.msra.mxu0 0.0
        %1709 = vmatprep.subr.mxu0 0.0
        %1710 = vmatpush2.msra.mxu0 0.0
        %1711 = vmatprep.subr.mxu0 0.0
        %1712 = vmatpush2.msra.mxu0 0.0
        %1713 = vmatprep.subr.mxu0 0.0
        %1714 = vmatpush2.msra.mxu0 0.0
        %1715 = vmatprep.subr.mxu0 0.0
        %1716 = vmatpush2.msra.mxu0 0.0
        %1717 = vmatprep.subr.mxu0 0.0
        %1718 = vmatpush2.msra.mxu0 0.0
        %1719 = vmatprep.subr.mxu0 0.0
        %1720 = vmatpush2.msra.mxu0 0.0
        %1721 = vmatprep.subr.mxu0 0.0
        %1722 = vmatpush2.msra.mxu0 0.0
        %1723 = vmatprep.subr.mxu0 0.0
        %1724 = vmatpush2.msra.mxu0 0.0
        %1725 = vmatprep.subr.mxu0 0.0
        %1726 = vmatpush2.msra.mxu0 0.0
        %1727 = vmatprep.subr.mxu0 0.0
        %1728 = vmatpush2.msra.mxu0 0.0
        %1729 = vmatprep.subr.mxu0 0.0
        %1730 = vmatpush2.msra.mxu0 0.0
        %1731 = vmatprep.subr.mxu0 0.0
        %1732 = vmatpush2.msra.mxu0 0.0
        %1733 = vmatprep.subr.mxu0 0.0
        %1734 = vmatpush2.msra.mxu0 0.0
        %1735 = vmatprep.subr.mxu0 0.0
        %1736 = vmatpush2.msra.mxu0 0.0
        %1737 = vmatprep.subr.mxu0 0.0
        %1738 = vmatpush2.msra.mxu0 0.0
        %1739 = vmatprep.mubr.f32.mxu0 0.0
        %1740 = vmatmul.mubr.f32.gmra.mxu0 %v1673
        %v1741 = vpop.f32.mrf.mxu0
        %v1742 = vadd.f32 0.0, %v1741
        %v1743 = vpop.f32.mrf.mxu0
        %1744 = vdwg.mxu0
        %v1745 = vmul.f32 %v1742, %v1668
        %1747 = vrot.lane.b32.xlu0 %v1745, 24
        %v1748 = vpop.permute.xlu0 %1747
        %vm1750 = vcmask 228544
        %1751 = vst.msk [vmem:[#allocation2] sm:$0xff] %vm1750, %v1748
        %1752 = vrot.lane.b32.xlu0 %v535, 100
        %v1753 = vpop.permute.xlu0 %1752
        %1754 = vrot.lane.b32.xlu0 %v535, 68
        %v1755 = vpop.permute.xlu0 %1754
        %v1756 = vsel %vm541, %v1753, 0
        %v1758 = vsel %vm541, %v1755, 0
        %1760 = vmatprep.subr.mxu0 0.0
        %1761 = vmatpush1.xpose.msra.mxu0 0.0
        %1762 = vmatprep.subr.mxu0 0.0
        %1763 = vmatpush1.xpose.msra.mxu0 0.0
        %1764 = vmatprep.subr.mxu0 0.0
        %1765 = vmatpush1.xpose.msra.mxu0 0.0
        %1766 = vmatprep.subr.mxu0 0.0
        %1767 = vmatpush1.xpose.msra.mxu0 0.0
        %1768 = vmatprep.subr.mxu0 0.0
        %1769 = vmatpush1.xpose.msra.mxu0 0.0
        %1770 = vmatprep.subr.mxu0 0.0
        %1771 = vmatpush1.xpose.msra.mxu0 0.0
        %1772 = vmatprep.subr.mxu0 0.0
        %1773 = vmatpush1.xpose.msra.mxu0 0.0
        %1774 = vmatprep.subr.mxu0 0.0
        %1775 = vmatpush1.xpose.msra.mxu0 0.0
        %1776 = vmatprep.subr.mxu0 0.0
        %1777 = vmatpush1.xpose.msra.mxu0 0.0
        %1778 = vmatprep.subr.mxu0 0.0
        %1779 = vmatpush1.xpose.msra.mxu0 0.0
        %1780 = vmatprep.subr.mxu0 0.0
        %1781 = vmatpush1.xpose.msra.mxu0 0.0
        %1782 = vmatprep.subr.mxu0 0.0
        %1783 = vmatpush1.xpose.msra.mxu0 0.0
        %1784 = vmatprep.subr.mxu0 0.0
        %1785 = vmatpush1.xpose.msra.mxu0 0.0
        %1786 = vmatprep.subr.mxu0 0.0
        %1787 = vmatpush1.xpose.msra.mxu0 0.0
        %1788 = vmatprep.subr.mxu0 0.0
        %1789 = vmatpush1.xpose.msra.mxu0 0.0
        %1790 = vmatprep.subr.mxu0 0.0
        %1791 = vmatpush1.xpose.msra.mxu0 %v1758
        %1792 = vmatprep.subr.mxu0 0.0
        %1793 = vmatpush2.xpose.msra.mxu0 0.0
        %1794 = vmatprep.subr.mxu0 0.0
        %1795 = vmatpush2.xpose.msra.mxu0 0.0
        %1796 = vmatprep.subr.mxu0 0.0
        %1797 = vmatpush2.xpose.msra.mxu0 0.0
        %1798 = vmatprep.subr.mxu0 0.0
        %1799 = vmatpush2.xpose.msra.mxu0 0.0
        %1800 = vmatprep.subr.mxu0 0.0
        %1801 = vmatpush2.xpose.msra.mxu0 0.0
        %1802 = vmatprep.subr.mxu0 0.0
        %1803 = vmatpush2.xpose.msra.mxu0 0.0
        %1804 = vmatprep.subr.mxu0 0.0
        %1805 = vmatpush2.xpose.msra.mxu0 0.0
        %1806 = vmatprep.subr.mxu0 0.0
        %1807 = vmatpush2.xpose.msra.mxu0 0.0
        %1808 = vmatprep.subr.mxu0 0.0
        %1809 = vmatpush2.xpose.msra.mxu0 0.0
        %1810 = vmatprep.subr.mxu0 0.0
        %1811 = vmatpush2.xpose.msra.mxu0 0.0
        %1812 = vmatprep.subr.mxu0 0.0
        %1813 = vmatpush2.xpose.msra.mxu0 0.0
        %1814 = vmatprep.subr.mxu0 0.0
        %1815 = vmatpush2.xpose.msra.mxu0 0.0
        %1816 = vmatprep.subr.mxu0 0.0
        %1817 = vmatpush2.xpose.msra.mxu0 0.0
        %1818 = vmatprep.subr.mxu0 0.0
        %1819 = vmatpush2.xpose.msra.mxu0 0.0
        %1820 = vmatprep.subr.mxu0 0.0
        %1821 = vmatpush2.xpose.msra.mxu0 0.0
        %1822 = vmatprep.subr.mxu0 0.0
        %1823 = vmatpush2.xpose.msra.mxu0 0.0
        %1824 = vmatprep.mubr.f32.mxu0 0.0
        %1825 = vmatmul.mubr.f32.gmra.mxu0 %v1756
        %v1826 = vpop.f32.mrf.mxu0
        %v1827 = vadd.f32 0.0, %v1826
        %v1828 = vpop.f32.mrf.mxu0
        %1829 = vdwg.mxu0
        %v1830 = vsel %vm616, %v1827, -inf
        %1831 = vmax.xlane.f32.xlu0 %v1830
        %v1832 = vpop.xlane.xlu0 %1831
        %v1833 = vsub.f32 %v1827, %v1832
        %v1834 = vmul.f32 %v1833, 1.442695
        %v1835 = vpow.pop %v1834
        %v1836 = vsel %vm616, %v1835, 0.0
        %1837 = vadd.xlane.f32.xlu0 %v1836
        %v1838 = vpop.xlane.xlu0 %1837
        %v1839 = vrcp.pop %v1838
        %v1840 = vmul.f32 %v1838, %v1839
        %v1841 = vsub.f32 2.0, %v1840
        %v1842 = vmul.f32 %v1839, %v1841
        %1843 = vrot.lane.b32.xlu0 %v535, 36
        %v1844 = vpop.permute.xlu0 %1843
        %v1847 = vsel %vm616, %v1835, 0
        %1849 = vmatprep.subr.mxu0 0.0
        %1850 = vmatpush1.msra.mxu0 0.0
        %1851 = vmatprep.subr.mxu0 0.0
        %1852 = vmatpush1.msra.mxu0 0.0
        %1853 = vmatprep.subr.mxu0 0.0
        %1854 = vmatpush1.msra.mxu0 0.0
        %1855 = vmatprep.subr.mxu0 0.0
        %1856 = vmatpush1.msra.mxu0 0.0
        %1857 = vmatprep.subr.mxu0 0.0
        %1858 = vmatpush1.msra.mxu0 0.0
        %1859 = vmatprep.subr.mxu0 0.0
        %1860 = vmatpush1.msra.mxu0 0.0
        %1861 = vmatprep.subr.mxu0 0.0
        %1862 = vmatpush1.msra.mxu0 0.0
        %1863 = vmatprep.subr.mxu0 0.0
        %1864 = vmatpush1.msra.mxu0 0.0
        %1865 = vmatprep.subr.mxu0 0.0
        %1866 = vmatpush1.msra.mxu0 0.0
        %1867 = vmatprep.subr.mxu0 0.0
        %1868 = vmatpush1.msra.mxu0 0.0
        %1869 = vmatprep.subr.mxu0 0.0
        %1870 = vmatpush1.msra.mxu0 0.0
        %1871 = vmatprep.subr.mxu0 0.0
        %1872 = vmatpush1.msra.mxu0 0.0
        %1873 = vmatprep.subr.mxu0 0.0
        %1874 = vmatpush1.msra.mxu0 0.0
        %1875 = vmatprep.subr.mxu0 0.0
        %1876 = vmatpush1.msra.mxu0 0.0
        %1877 = vmatprep.subr.mxu0 0.0
        %1878 = vmatpush1.msra.mxu0 0.0
        %1879 = vmatprep.subr.mxu0 0.0
        %1880 = vmatpush1.msra.mxu0 %v1844
        %1881 = vmatprep.subr.mxu0 0.0
        %1882 = vmatpush2.msra.mxu0 0.0
        %1883 = vmatprep.subr.mxu0 0.0
        %1884 = vmatpush2.msra.mxu0 0.0
        %1885 = vmatprep.subr.mxu0 0.0
        %1886 = vmatpush2.msra.mxu0 0.0
        %1887 = vmatprep.subr.mxu0 0.0
        %1888 = vmatpush2.msra.mxu0 0.0
        %1889 = vmatprep.subr.mxu0 0.0
        %1890 = vmatpush2.msra.mxu0 0.0
        %1891 = vmatprep.subr.mxu0 0.0
        %1892 = vmatpush2.msra.mxu0 0.0
        %1893 = vmatprep.subr.mxu0 0.0
        %1894 = vmatpush2.msra.mxu0 0.0
        %1895 = vmatprep.subr.mxu0 0.0
        %1896 = vmatpush2.msra.mxu0 0.0
        %1897 = vmatprep.subr.mxu0 0.0
        %1898 = vmatpush2.msra.mxu0 0.0
        %1899 = vmatprep.subr.mxu0 0.0
        %1900 = vmatpush2.msra.mxu0 0.0
        %1901 = vmatprep.subr.mxu0 0.0
        %1902 = vmatpush2.msra.mxu0 0.0
        %1903 = vmatprep.subr.mxu0 0.0
        %1904 = vmatpush2.msra.mxu0 0.0
        %1905 = vmatprep.subr.mxu0 0.0
        %1906 = vmatpush2.msra.mxu0 0.0
        %1907 = vmatprep.subr.mxu0 0.0
        %1908 = vmatpush2.msra.mxu0 0.0
        %1909 = vmatprep.subr.mxu0 0.0
        %1910 = vmatpush2.msra.mxu0 0.0
        %1911 = vmatprep.subr.mxu0 0.0
        %1912 = vmatpush2.msra.mxu0 0.0
        %1913 = vmatprep.mubr.f32.mxu0 0.0
        %1914 = vmatmul.mubr.f32.gmra.mxu0 %v1847
        %v1915 = vpop.f32.mrf.mxu0
        %v1916 = vadd.f32 0.0, %v1915
        %v1917 = vpop.f32.mrf.mxu0
        %1918 = vdwg.mxu0
        %v1919 = vmul.f32 %v1916, %v1842
        %1921 = vrot.lane.b32.xlu0 %v1919, 28
        %v1922 = vpop.permute.xlu0 %1921
        %vm1924 = vcmask 261344
        %1925 = vst.msk [vmem:[#allocation2] sm:$0xff] %vm1924, %v1922
        %v1926 = vld [vmem:[#allocation2] sm:$0xff]
        %v1927 = vld [vmem:[%s4] sm:$0xff]
        %v1928 = vld [vmem:[%s4 + $0x8] sm:$0xff]
        %v1929 = vld [vmem:[%s4 + $0x10] sm:$0xff]
        %v1930 = vld [vmem:[%s4 + $0x18] sm:$0xff]
        %v1931 = vld [vmem:[%s5] sm:$0x1]
        %v1933 = vlaneseq
        %v1934 = vshrl.u32 %v1933, 7
        %v1935 = vsub.s32 0, %v1934
        %v1936 = vrot.slane %v1931, %v1935
        %v1939 = vsel %vm432, %v1926, 0
        %1941 = vmatprep.subr.mxu0 0.0
        %1942 = vmatpush1.msra.mxu0 0.0
        %1943 = vmatprep.subr.mxu0 0.0
        %1944 = vmatpush1.msra.mxu0 0.0
        %1945 = vmatprep.subr.mxu0 0.0
        %1946 = vmatpush1.msra.mxu0 0.0
        %1947 = vmatprep.subr.mxu0 0.0
        %1948 = vmatpush1.msra.mxu0 0.0
        %1949 = vmatprep.subr.mxu0 0.0
        %1950 = vmatpush1.msra.mxu0 0.0
        %1951 = vmatprep.subr.mxu0 0.0
        %1952 = vmatpush1.msra.mxu0 0.0
        %1953 = vmatprep.subr.mxu0 0.0
        %1954 = vmatpush1.msra.mxu0 0.0
        %1955 = vmatprep.subr.mxu0 0.0
        %1956 = vmatpush1.msra.mxu0 0.0
        %1957 = vmatprep.subr.mxu0 0.0
        %1958 = vmatpush1.msra.mxu0 0.0
        %1959 = vmatprep.subr.mxu0 0.0
        %1960 = vmatpush1.msra.mxu0 0.0
        %1961 = vmatprep.subr.mxu0 0.0
        %1962 = vmatpush1.msra.mxu0 0.0
        %1963 = vmatprep.subr.mxu0 0.0
        %1964 = vmatpush1.msra.mxu0 0.0
        %1965 = vmatprep.subr.mxu0 0.0
        %1966 = vmatpush1.msra.mxu0 %v1930
        %1967 = vmatprep.subr.mxu0 0.0
        %1968 = vmatpush1.msra.mxu0 %v1929
        %1969 = vmatprep.subr.mxu0 0.0
        %1970 = vmatpush1.msra.mxu0 %v1928
        %1971 = vmatprep.subr.mxu0 0.0
        %1972 = vmatpush1.msra.mxu0 %v1927
        %1973 = vmatprep.subr.mxu0 0.0
        %1974 = vmatpush2.msra.mxu0 0.0
        %1975 = vmatprep.subr.mxu0 0.0
        %1976 = vmatpush2.msra.mxu0 0.0
        %1977 = vmatprep.subr.mxu0 0.0
        %1978 = vmatpush2.msra.mxu0 0.0
        %1979 = vmatprep.subr.mxu0 0.0
        %1980 = vmatpush2.msra.mxu0 0.0
        %1981 = vmatprep.subr.mxu0 0.0
        %1982 = vmatpush2.msra.mxu0 0.0
        %1983 = vmatprep.subr.mxu0 0.0
        %1984 = vmatpush2.msra.mxu0 0.0
        %1985 = vmatprep.subr.mxu0 0.0
        %1986 = vmatpush2.msra.mxu0 0.0
        %1987 = vmatprep.subr.mxu0 0.0
        %1988 = vmatpush2.msra.mxu0 0.0
        %1989 = vmatprep.subr.mxu0 0.0
        %1990 = vmatpush2.msra.mxu0 0.0
        %1991 = vmatprep.subr.mxu0 0.0
        %1992 = vmatpush2.msra.mxu0 0.0
        %1993 = vmatprep.subr.mxu0 0.0
        %1994 = vmatpush2.msra.mxu0 0.0
        %1995 = vmatprep.subr.mxu0 0.0
        %1996 = vmatpush2.msra.mxu0 0.0
        %1997 = vmatprep.subr.mxu0 0.0
        %1998 = vmatpush2.msra.mxu0 0.0
        %1999 = vmatprep.subr.mxu0 0.0
        %2000 = vmatpush2.msra.mxu0 0.0
        %2001 = vmatprep.subr.mxu0 0.0
        %2002 = vmatpush2.msra.mxu0 0.0
        %2003 = vmatprep.subr.mxu0 0.0
        %2004 = vmatpush2.msra.mxu0 0.0
        %2005 = vmatprep.mubr.f32.mxu0 0.0
        %2006 = vmatmul.mubr.f32.gmra.mxu0 %v1939
        %v2007 = vpop.f32.mrf.mxu0
        %v2008 = vadd.f32 %v1936, %v2007
        %v2009 = vpop.f32.mrf.mxu0
        %2010 = vdwg.mxu0
        %v2011 = vadd.f32 %v429, %v2008
        %v2012 = vld [vmem:[%s6] sm:$0x1]
        %v2013 = vld [vmem:[%s7] sm:$0x1]
        %v2014 = vsel %vm432, %v2011, 0.0
        %2015 = vadd.xlane.f32.xlu0 %v2014
        %v2016 = vpop.xlane.xlu0 %2015
        %v2017 = vmul.f32 %v2016, %v436
        %v2018 = vsub.f32 %v2011, %v2017
        %v2019 = vmul.f32 %v2018, %v2018
        %v2020 = vsel %vm432, %v2019, 0.0
        %2021 = vadd.xlane.f32.xlu0 %v2020
        %v2022 = vpop.xlane.xlu0 %2021
        %v2023 = vmul.f32 %v2022, %v436
        %v2024 = vadd.f32 %v2023, 1e-05
        %v2025 = vrsqrt.pop %v2024
        %v2026 = vmul.f32 %v2018, %v2025
        %v2028 = vlaneseq
        %v2029 = vshrl.u32 %v2028, 7
        %v2030 = vsub.s32 0, %v2029
        %v2031 = vrot.slane %v2012, %v2030
        %v2033 = vmul.f32 %v2026, %v2031
        %v2035 = vlaneseq
        %v2036 = vshrl.u32 %v2035, 7
        %v2037 = vsub.s32 0, %v2036
        %v2038 = vrot.slane %v2013, %v2037
        %v2040 = vadd.f32 %v2033, %v2038
        %v2041 = vld [vmem:[%s8] sm:$0xff]
        %v2042 = vld [vmem:[%s8 + $0x8] sm:$0xff]
        %v2043 = vld [vmem:[%s8 + $0x10] sm:$0xff]
        %v2044 = vld [vmem:[%s8 + $0x18] sm:$0xff]
        %v2045 = vld [vmem:[%s9] sm:$0x1]
        %v2047 = vlaneseq
        %v2048 = vshrl.u32 %v2047, 7
        %v2049 = vsub.s32 0, %v2048
        %v2050 = vrot.slane %v2045, %v2049
        %v2053 = vsel %vm432, %v2040, 0
        %2055 = vmatprep.subr.mxu0 0.0
        %2056 = vmatpush1.msra.mxu0 0.0
        %2057 = vmatprep.subr.mxu0 0.0
        %2058 = vmatpush1.msra.mxu0 0.0
        %2059 = vmatprep.subr.mxu0 0.0
        %2060 = vmatpush1.msra.mxu0 0.0
        %2061 = vmatprep.subr.mxu0 0.0
        %2062 = vmatpush1.msra.mxu0 0.0
        %2063 = vmatprep.subr.mxu0 0.0
        %2064 = vmatpush1.msra.mxu0 0.0
        %2065 = vmatprep.subr.mxu0 0.0
        %2066 = vmatpush1.msra.mxu0 0.0
        %2067 = vmatprep.subr.mxu0 0.0
        %2068 = vmatpush1.msra.mxu0 0.0
        %2069 = vmatprep.subr.mxu0 0.0
        %2070 = vmatpush1.msra.mxu0 0.0
        %2071 = vmatprep.subr.mxu0 0.0
        %2072 = vmatpush1.msra.mxu0 0.0
        %2073 = vmatprep.subr.mxu0 0.0
        %2074 = vmatpush1.msra.mxu0 0.0
        %2075 = vmatprep.subr.mxu0 0.0
        %2076 = vmatpush1.msra.mxu0 0.0
        %2077 = vmatprep.subr.mxu0 0.0
        %2078 = vmatpush1.msra.mxu0 0.0
        %2079 = vmatprep.subr.mxu0 0.0
        %2080 = vmatpush1.msra.mxu0 %v2044
        %2081 = vmatprep.subr.mxu0 0.0
        %2082 = vmatpush1.msra.mxu0 %v2043
        %2083 = vmatprep.subr.mxu0 0.0
        %2084 = vmatpush1.msra.mxu0 %v2042
        %2085 = vmatprep.subr.mxu0 0.0
        %2086 = vmatpush1.msra.mxu0 %v2041
        %2087 = vmatprep.subr.mxu0 0.0
        %2088 = vmatpush2.msra.mxu0 0.0
        %2089 = vmatprep.subr.mxu0 0.0
        %2090 = vmatpush2.msra.mxu0 0.0
        %2091 = vmatprep.subr.mxu0 0.0
        %2092 = vmatpush2.msra.mxu0 0.0
        %2093 = vmatprep.subr.mxu0 0.0
        %2094 = vmatpush2.msra.mxu0 0.0
        %2095 = vmatprep.subr.mxu0 0.0
        %2096 = vmatpush2.msra.mxu0 0.0
        %2097 = vmatprep.subr.mxu0 0.0
        %2098 = vmatpush2.msra.mxu0 0.0
        %2099 = vmatprep.subr.mxu0 0.0
        %2100 = vmatpush2.msra.mxu0 0.0
        %2101 = vmatprep.subr.mxu0 0.0
        %2102 = vmatpush2.msra.mxu0 0.0
        %2103 = vmatprep.subr.mxu0 0.0
        %2104 = vmatpush2.msra.mxu0 0.0
        %2105 = vmatprep.subr.mxu0 0.0
        %2106 = vmatpush2.msra.mxu0 0.0
        %2107 = vmatprep.subr.mxu0 0.0
        %2108 = vmatpush2.msra.mxu0 0.0
        %2109 = vmatprep.subr.mxu0 0.0
        %2110 = vmatpush2.msra.mxu0 0.0
        %2111 = vmatprep.subr.mxu0 0.0
        %2112 = vmatpush2.msra.mxu0 0.0
        %2113 = vmatprep.subr.mxu0 0.0
        %2114 = vmatpush2.msra.mxu0 0.0
        %2115 = vmatprep.subr.mxu0 0.0
        %2116 = vmatpush2.msra.mxu0 0.0
        %2117 = vmatprep.subr.mxu0 0.0
        %2118 = vmatpush2.msra.mxu0 0.0
        %2119 = vmatprep.mubr.f32.mxu0 0.0
        %2120 = vmatmul.mubr.f32.gmra.mxu0 %v2053
        %v2121 = vpop.f32.mrf.mxu0
        %v2122 = vadd.f32 %v2050, %v2121
        %v2123 = vpop.f32.mrf.mxu0
        %2124 = vdwg.mxu0
        %v2125 = vmul.f32 %v2122, 0.5
        %v2126 = vmul.f32 %v2122, 0.70710677
        %v2127 = vand.u32 2147483647, %v2126
        %v2128 = vmul.f32 %v2127, 0.3275911
        %v2129 = vadd.f32 %v2128, 1.0
        %v2130 = vrcp.pop %v2129
        %v2131 = vmul.f32 %v2129, %v2130
        %v2132 = vsub.f32 2.0, %v2131
        %v2133 = vmul.f32 %v2130, %v2132
        %v2134 = vmul.f32 %v2133, 1.0614054
        %v2135 = vadd.f32 %v2134, -1.4531521
        %v2136 = vmul.f32 %v2135, %v2133
        %v2137 = vadd.f32 %v2136, 1.4214138
        %v2138 = vmul.f32 %v2137, %v2133
        %v2139 = vadd.f32 %v2138, -0.28449672
        %v2140 = vmul.f32 %v2139, %v2133
        %v2141 = vadd.f32 %v2140, 0.2548296
        %v2142 = vmul.f32 %v2141, %v2133
        %v2143 = vsub.f32 0.0, %v2127
        %v2144 = vmul.f32 %v2143, %v2127
        %v2145 = vmul.f32 %v2144, 1.442695
        %v2146 = vpow.pop %v2145
        %v2147 = vmul.f32 %v2142, %v2146
        %v2148 = vsub.f32 1.0, %v2147
        %vm2149 = vcmp.ge.f32.partialorder %v2126, 0.0
        %v2150 = vsub.f32 0.0, %v2148
        %v2151 = vsel %vm2149, %v2148, %v2150
        %v2152 = vadd.f32 %v2151, 1.0
        %v2153 = vmul.f32 %v2125, %v2152
        %v2154 = vld [vmem:[%s10] sm:$0xff]
        %v2155 = vld [vmem:[%s10 + $0x8] sm:$0xff]
        %v2156 = vld [vmem:[%s10 + $0x10] sm:$0xff]
        %v2157 = vld [vmem:[%s10 + $0x18] sm:$0xff]
        %v2158 = vld [vmem:[%s10 + $0x20] sm:$0xff]
        %v2159 = vld [vmem:[%s10 + $0x28] sm:$0xff]
        %v2160 = vld [vmem:[%s10 + $0x30] sm:$0xff]
        %v2161 = vld [vmem:[%s10 + $0x38] sm:$0xff]
        %v2162 = vld [vmem:[%s11] sm:$0x1]
        %v2164 = vlaneseq
        %v2165 = vshrl.u32 %v2164, 7
        %v2166 = vsub.s32 0, %v2165
        %v2167 = vrot.slane %v2162, %v2166
        %vm2169 = vcmask 523264
        %v2171 = vsel %vm2169, %v2153, 0
        %2173 = vmatprep.subr.mxu0 0.0
        %2174 = vmatpush1.msra.mxu0 0.0
        %2175 = vmatprep.subr.mxu0 0.0
        %2176 = vmatpush1.msra.mxu0 0.0
        %2177 = vmatprep.subr.mxu0 0.0
        %2178 = vmatpush1.msra.mxu0 0.0
        %2179 = vmatprep.subr.mxu0 0.0
        %2180 = vmatpush1.msra.mxu0 0.0
        %2181 = vmatprep.subr.mxu0 0.0
        %2182 = vmatpush1.msra.mxu0 0.0
        %2183 = vmatprep.subr.mxu0 0.0
        %2184 = vmatpush1.msra.mxu0 0.0
        %2185 = vmatprep.subr.mxu0 0.0
        %2186 = vmatpush1.msra.mxu0 0.0
        %2187 = vmatprep.subr.mxu0 0.0
        %2188 = vmatpush1.msra.mxu0 0.0
        %2189 = vmatprep.subr.mxu0 0.0
        %2190 = vmatpush1.msra.mxu0 %v2161
        %2191 = vmatprep.subr.mxu0 0.0
        %2192 = vmatpush1.msra.mxu0 %v2160
        %2193 = vmatprep.subr.mxu0 0.0
        %2194 = vmatpush1.msra.mxu0 %v2159
        %2195 = vmatprep.subr.mxu0 0.0
        %2196 = vmatpush1.msra.mxu0 %v2158
        %2197 = vmatprep.subr.mxu0 0.0
        %2198 = vmatpush1.msra.mxu0 %v2157
        %2199 = vmatprep.subr.mxu0 0.0
        %2200 = vmatpush1.msra.mxu0 %v2156
        %2201 = vmatprep.subr.mxu0 0.0
        %2202 = vmatpush1.msra.mxu0 %v2155
        %2203 = vmatprep.subr.mxu0 0.0
        %2204 = vmatpush1.msra.mxu0 %v2154
        %2205 = vmatprep.subr.mxu0 0.0
        %2206 = vmatpush2.msra.mxu0 0.0
        %2207 = vmatprep.subr.mxu0 0.0
        %2208 = vmatpush2.msra.mxu0 0.0
        %2209 = vmatprep.subr.mxu0 0.0
        %2210 = vmatpush2.msra.mxu0 0.0
        %2211 = vmatprep.subr.mxu0 0.0
        %2212 = vmatpush2.msra.mxu0 0.0
        %2213 = vmatprep.subr.mxu0 0.0
        %2214 = vmatpush2.msra.mxu0 0.0
        %2215 = vmatprep.subr.mxu0 0.0
        %2216 = vmatpush2.msra.mxu0 0.0
        %2217 = vmatprep.subr.mxu0 0.0
        %2218 = vmatpush2.msra.mxu0 0.0
        %2219 = vmatprep.subr.mxu0 0.0
        %2220 = vmatpush2.msra.mxu0 0.0
        %2221 = vmatprep.subr.mxu0 0.0
        %2222 = vmatpush2.msra.mxu0 0.0
        %2223 = vmatprep.subr.mxu0 0.0
        %2224 = vmatpush2.msra.mxu0 0.0
        %2225 = vmatprep.subr.mxu0 0.0
        %2226 = vmatpush2.msra.mxu0 0.0
        %2227 = vmatprep.subr.mxu0 0.0
        %2228 = vmatpush2.msra.mxu0 0.0
        %2229 = vmatprep.subr.mxu0 0.0
        %2230 = vmatpush2.msra.mxu0 0.0
        %2231 = vmatprep.subr.mxu0 0.0
        %2232 = vmatpush2.msra.mxu0 0.0
        %2233 = vmatprep.subr.mxu0 0.0
        %2234 = vmatpush2.msra.mxu0 0.0
        %2235 = vmatprep.subr.mxu0 0.0
        %2236 = vmatpush2.msra.mxu0 0.0
        %2237 = vmatprep.mubr.f32.mxu0 0.0
        %2238 = vmatmul.mubr.f32.gmra.mxu0 %v2171
        %v2239 = vpop.f32.mrf.mxu0
        %v2240 = vadd.f32 %v2167, %v2239
        %v2241 = vpop.f32.mrf.mxu0
        %2242 = vdwg.mxu0
        %v2243 = vadd.f32 %v2011, %v2240
        %2244 = vst.msk [vmem:[%s428] sm:$0xff] %vm432, %v2243
        %s2245 = sand.u32 %s294, 1
        %s2246 = scalar_lea.sflag [#allocation5], %s2245
        %s2247 = sand.u32 %s294, 1
        %s2248 = smul.addr %s2247, 8
        %s2249 = scalar_lea.vmem [#allocation6], %s2248
        // Predicated region
        $region73: #{dtransformer_pallas.3} parent=67 // pred_check
          %p2250 = pneg %p304
        $region74: #{dtransformer_pallas.3} parent=67 // pred_check_branch
          %2252 = sbr.rel (%p2250) target = $region76
        $region75: #{dtransformer_pallas.3} parent=67 // pred_region
          %s2254 = ssub.s32 128, 128
          %2255 = vsyncadd %s2246, %s2254
          %s2256 = smul.addr %s29, 128
          %s2257 = scalar_lea.hbm %s12, %s2256
          %s2259 = sshll.u32 %s2249, 4
          %s2260 = int_to_ptr.vmem [resolvable:$true] %s2259
          %2262 = dma.vmem_to_hbm [thread:$0]  %s2260, 128, %s2257, %s2246
        $region76: #{dtransformer_pallas.3} parent=67 // pred_fallthru
          _
      $region68: #{dtransformer_pallas.3} parent=5 // pred_fallthru
        _
      %p2263 = scmp.le.s32.totalorder 2, %s24
      // Predicated region
      $region77: #{dtransformer_pallas.3} parent=5 // pred_check
        %p2264 = pneg %p2263
      $region78: #{dtransformer_pallas.3} parent=5 // pred_check_branch
        %2266 = sbr.rel (%p2264) target = $region80
      $region79: #{dtransformer_pallas.3} parent=5 // pred_region
        %s2267 = ssub.s32 %s24, 2
        // Predicated region
        $region81: #{dtransformer_pallas.3} parent=79 // pred_check
          %p2268 = pneg %p310
        $region82: #{dtransformer_pallas.3} parent=79 // pred_check_branch
          %2270 = sbr.rel (%p2268) target = $region84
        $region83: #{dtransformer_pallas.3} parent=79 // pred_region
          %s2271 = sand.u32 %s295, 1
          %s2272 = scalar_lea.sflag [#allocation5], %s2271
          %s2273 = sand.u32 %s295, 1
          %s2274 = smul.addr %s2273, 8
          %s2275 = scalar_lea.vmem [#allocation6], %s2274
          %2276 = dma.done %s2272, 128
        $region84: #{dtransformer_pallas.3} parent=79 // pred_fallthru
          _
      $region80: #{dtransformer_pallas.3} parent=5 // pred_fallthru
        _
    $region6: #{dtransformer_pallas.3} parent=1 // loop_footer
      %s28 = sadd.s32 1, %s24
    $region7: #{dtransformer_pallas.3} parent=1 // loop_footer_branch
      %23 = sbr.rel target = $region3
    $region8: #{dtransformer_pallas.3} parent=1 // loop_exit
      _
    %2277 = vsyncpa [#allocation4], 1
    %s2278 = scalar_lea.sflag [#allocation4], 1
    %2279 = vsyncpa %s2278, 1
    %2280 = vsyncpa [#allocation5], 1
    %s2281 = scalar_lea.sflag [#allocation5], 1
    %2282 = vsyncpa %s2281, 1

// kernel: dtransformer_pallas.2
$region0: #{dtransformer_pallas.2}
  #allocation0 [shape = 'u32[]', space=smem, size = 0x4, offset = 0x4, fixed_abs, tag = 'smem constant byte address 0x4 - core index']
  #allocation1 [shape = 'u32[144,128]{1,0:T(1,128)}', space=vmem, size = 0x12000, scoped, tag = 'internal scratch']
  #allocation2 [shape = 'f32[8,32]{1,0:T(8,128)}', space=vmem, size = 0x1000, scoped, tag = 'scratch operand']
  %s0 = inlined_call_operand.vmem [shape: f32[2,8,32], index: 0, kind: input, shape index: {}, may-alias: {0,12}]
  %s1 = inlined_call_operand.hbm [shape: f32[1,32], index: 1, kind: input, shape index: {}]
  %s2 = inlined_call_operand.hbm [shape: f32[1,32], index: 2, kind: input, shape index: {}]
  %s3 = inlined_call_operand.vmem [shape: f32[32,96], index: 3, kind: input, shape index: {}]
  %s4 = inlined_call_operand.vmem [shape: f32[32,32], index: 4, kind: input, shape index: {}]
  %s5 = inlined_call_operand.hbm [shape: f32[1,32], index: 5, kind: input, shape index: {}]
  %s6 = inlined_call_operand.hbm [shape: f32[1,32], index: 6, kind: input, shape index: {}]
  %s7 = inlined_call_operand.hbm [shape: f32[1,32], index: 7, kind: input, shape index: {}]
  %s8 = inlined_call_operand.vmem [shape: f32[32,64], index: 8, kind: input, shape index: {}]
  %s9 = inlined_call_operand.hbm [shape: f32[1,64], index: 9, kind: input, shape index: {}]
  %s10 = inlined_call_operand.vmem [shape: f32[64,32], index: 10, kind: input, shape index: {}]
  %s11 = inlined_call_operand.hbm [shape: f32[1,32], index: 11, kind: input, shape index: {}]
  %s12 = inlined_call_operand.vmem [shape: f32[2,8,32], index: 12, kind: output, shape index: {}, may-alias: {0,12}]
  %s13 = sld [smem:[#allocation0]]
  $region109: #{dtransformer_pallas.2} parent=0
    _
  %s15 = ssub.s32 1, %s13
  %s16 = scalar_select 0, %s15, %s13
  $region1: #{dtransformer_pallas.2} parent=0
    #allocation3 [shape = 'u8[512]{0}', space=vmem, size = 0x400, scoped, tag = 'input window, operand 1, single buffered']
    #allocation4 [shape = 's32[2]{0}', space=sflag, size = 0x8, scoped, tag = 'scoped memory for dtransformer_pallas.2']
    #allocation5 [shape = 'u8[512]{0}', space=vmem, size = 0x400, scoped, tag = 'input window, operand 2, single buffered']
    #allocation6 [shape = 's32[1]{0}', space=sflag, size = 0x4, scoped, tag = 'scoped memory for dtransformer_pallas.2']
    #allocation7 [shape = 'u8[512]{0}', space=vmem, size = 0x400, scoped, tag = 'input window, operand 5, single buffered']
    #allocation8 [shape = 'u8[512]{0}', space=vmem, size = 0x400, scoped, tag = 'input window, operand 6, single buffered']
    #allocation9 [shape = 's32[1]{0}', space=sflag, size = 0x4, scoped, tag = 'scoped memory for dtransformer_pallas.2']
    #allocation10 [shape = 'u8[512]{0}', space=vmem, size = 0x400, scoped, tag = 'input window, operand 7, single buffered']
    #allocation11 [shape = 'u8[512]{0}', space=vmem, size = 0x400, scoped, tag = 'input window, operand 9, single buffered']
    #allocation12 [shape = 's32[1]{0}', space=sflag, size = 0x4, scoped, tag = 'scoped memory for dtransformer_pallas.2']
    #allocation13 [shape = 'u8[512]{0}', space=vmem, size = 0x400, scoped, tag = 'input window, operand 11, single buffered']
    %17 = vsyncpa [#allocation4], 0
    %18 = vsyncpa [#allocation6], 0
    %19 = vsyncpa [#allocation9], 0
    %20 = vsyncpa [#allocation12], 0
    loop: start=0, step=1, limit=4
    $region2: #{dtransformer_pallas.2} parent=1 // loop_pre_header
      _
    $region3: #{dtransformer_pallas.2} parent=1 // loop_header
      %s22 = sphi 0, %s26
      %p23 = scmp.ge.s32.totalorder %s22, 4
      %s32 = sphi 0, %s34
      %s35 = sphi 0, %s32
      %s36 = sphi 0, %s35
      %s52 = sphi 0, %s36
      %s56 = sphi 0, %s56
      %s58 = sphi 0, %s56
      %s59 = sphi 0, %s58
      %s73 = sphi 0, %s59
      %s77 = sphi 0, %s77
      %s79 = sphi 0, %s77
      %s80 = sphi 0, %s79
      %s94 = sphi 0, %s80
      %s98 = sphi 0, %s98
      %s100 = sphi 0, %s98
      %s101 = sphi 0, %s100
      %s115 = sphi 0, %s101
      %s119 = sphi 0, %s119
      %s121 = sphi 0, %s119
      %s122 = sphi 0, %s121
      %s136 = sphi 0, %s122
      %s140 = sphi 0, %s140
      %s142 = sphi 0, %s140
      %s143 = sphi 0, %s142
      %s157 = sphi 0, %s143
      %s161 = sphi 0, %s161
      %s163 = sphi 0, %s161
      %s164 = sphi 0, %s163
      %s178 = sphi 0, %s164
      %s182 = sphi 0, %s182
      %s184 = sphi 0, %s182
      %s185 = sphi 0, %s184
      %s199 = sphi 0, %s185
      %s203 = sphi 0, %s203
      %s205 = sphi 0, %s203
      %s206 = sphi 0, %s205
      %s220 = sphi 0, %s206
      %s224 = sphi 0, %s224
      %s226 = sphi 0, %s224
      %s227 = sphi 0, %s226
      %s241 = sphi 0, %s227
      %s245 = sphi 0, %s245
      %s247 = sphi 0, %s245
      %s248 = sphi 0, %s247
      %s262 = sphi 0, %s248
      %s266 = sphi 0, %s266
      %s268 = sphi 0, %s266
      %s269 = sphi 0, %s268
      %s283 = sphi 0, %s269
      %s289 = sphi 0, %s291
      %s292 = sphi 0, %s289
      %s293 = sphi 0, %s292
      %s309 = sphi 0, %s293
    $region4: #{dtransformer_pallas.2} parent=1 // loop_header_branch
      %25 = sbr.rel (%p23) target = $region8
    $region5: #{dtransformer_pallas.2} parent=1 // loop_body
      %s27 = ssub.s32 %s22, 1
      %s28 = ssub.s32 %s22, 2
      %s29 = sadd.s32 %s22, 1
      %s30 = ssub.s32 %s22, %s29
      %p31 = scmp.eq.s32.totalorder %s30, 0
      %s33 = sadd.s32 %s32, 1
      %s34 = scalar_select %p31, %s32, %s33
      %p37 = pneg %p31
      %p38 = scmp.eq.s32.totalorder %s22, 1
      %p39 = por %p37, %p38
      %p40 = scmp.ne.s32.totalorder %s32, %s35
      %p41 = scmp.eq.s32.totalorder %s22, 0
      %p42 = por %p40, %p41
      %p43 = scmp.ne.s32.totalorder %s32, %s35
      %p44 = scmp.eq.s32.totalorder %s27, 1
      %p45 = por %p43, %p44
      %p46 = scmp.ne.s32.totalorder %s35, %s36
      %p47 = scmp.eq.s32.totalorder %s27, 0
      %p48 = por %p46, %p47
      %p49 = scmp.ne.s32.totalorder %s35, %s36
      %p50 = scmp.eq.s32.totalorder %s28, 1
      %p51 = por %p49, %p50
      %p53 = scmp.ne.s32.totalorder %s36, %s52
      %p54 = scmp.eq.s32.totalorder %s28, 0
      %p55 = por %p53, %p54
      %s57 = sadd.s32 %s56, 1
      %p60 = scmp.eq.s32.totalorder %s22, 1
      %p61 = scmp.ne.s32.totalorder %s56, %s58
      %p62 = scmp.eq.s32.totalorder %s22, 0
      %p63 = por %p61, %p62
      %p64 = scmp.ne.s32.totalorder %s56, %s58
      %p65 = scmp.eq.s32.totalorder %s27, 1
      %p66 = por %p64, %p65
      %p67 = scmp.ne.s32.totalorder %s58, %s59
      %p68 = scmp.eq.s32.totalorder %s27, 0
      %p69 = por %p67, %p68
      %p70 = scmp.ne.s32.totalorder %s58, %s59
      %p71 = scmp.eq.s32.totalorder %s28, 1
      %p72 = por %p70, %p71
      %p74 = scmp.ne.s32.totalorder %s59, %s73
      %p75 = scmp.eq.s32.totalorder %s28, 0
      %p76 = por %p74, %p75
      %s78 = sadd.s32 %s77, 1
      %p81 = scmp.eq.s32.totalorder %s22, 1
      %p82 = scmp.ne.s32.totalorder %s77, %s79
      %p83 = scmp.eq.s32.totalorder %s22, 0
      %p84 = por %p82, %p83
      %p85 = scmp.ne.s32.totalorder %s77, %s79
      %p86 = scmp.eq.s32.totalorder %s27, 1
      %p87 = por %p85, %p86
      %p88 = scmp.ne.s32.totalorder %s79, %s80
      %p89 = scmp.eq.s32.totalorder %s27, 0
      %p90 = por %p88, %p89
      %p91 = scmp.ne.s32.totalorder %s79, %s80
      %p92 = scmp.eq.s32.totalorder %s28, 1
      %p93 = por %p91, %p92
      %p95 = scmp.ne.s32.totalorder %s80, %s94
      %p96 = scmp.eq.s32.totalorder %s28, 0
      %p97 = por %p95, %p96
      %s99 = sadd.s32 %s98, 1
      %p102 = scmp.eq.s32.totalorder %s22, 1
      %p103 = scmp.ne.s32.totalorder %s98, %s100
      %p104 = scmp.eq.s32.totalorder %s22, 0
      %p105 = por %p103, %p104
      %p106 = scmp.ne.s32.totalorder %s98, %s100
      %p107 = scmp.eq.s32.totalorder %s27, 1
      %p108 = por %p106, %p107
      %p109 = scmp.ne.s32.totalorder %s100, %s101
      %p110 = scmp.eq.s32.totalorder %s27, 0
      %p111 = por %p109, %p110
      %p112 = scmp.ne.s32.totalorder %s100, %s101
      %p113 = scmp.eq.s32.totalorder %s28, 1
      %p114 = por %p112, %p113
      %p116 = scmp.ne.s32.totalorder %s101, %s115
      %p117 = scmp.eq.s32.totalorder %s28, 0
      %p118 = por %p116, %p117
      %s120 = sadd.s32 %s119, 1
      %p123 = scmp.eq.s32.totalorder %s22, 1
      %p124 = scmp.ne.s32.totalorder %s119, %s121
      %p125 = scmp.eq.s32.totalorder %s22, 0
      %p126 = por %p124, %p125
      %p127 = scmp.ne.s32.totalorder %s119, %s121
      %p128 = scmp.eq.s32.totalorder %s27, 1
      %p129 = por %p127, %p128
      %p130 = scmp.ne.s32.totalorder %s121, %s122
      %p131 = scmp.eq.s32.totalorder %s27, 0
      %p132 = por %p130, %p131
      %p133 = scmp.ne.s32.totalorder %s121, %s122
      %p134 = scmp.eq.s32.totalorder %s28, 1
      %p135 = por %p133, %p134
      %p137 = scmp.ne.s32.totalorder %s122, %s136
      %p138 = scmp.eq.s32.totalorder %s28, 0
      %p139 = por %p137, %p138
      %s141 = sadd.s32 %s140, 1
      %p144 = scmp.eq.s32.totalorder %s22, 1
      %p145 = scmp.ne.s32.totalorder %s140, %s142
      %p146 = scmp.eq.s32.totalorder %s22, 0
      %p147 = por %p145, %p146
      %p148 = scmp.ne.s32.totalorder %s140, %s142
      %p149 = scmp.eq.s32.totalorder %s27, 1
      %p150 = por %p148, %p149
      %p151 = scmp.ne.s32.totalorder %s142, %s143
      %p152 = scmp.eq.s32.totalorder %s27, 0
      %p153 = por %p151, %p152
      %p154 = scmp.ne.s32.totalorder %s142, %s143
      %p155 = scmp.eq.s32.totalorder %s28, 1
      %p156 = por %p154, %p155
      %p158 = scmp.ne.s32.totalorder %s143, %s157
      %p159 = scmp.eq.s32.totalorder %s28, 0
      %p160 = por %p158, %p159
      %s162 = sadd.s32 %s161, 1
      %p165 = scmp.eq.s32.totalorder %s22, 1
      %p166 = scmp.ne.s32.totalorder %s161, %s163
      %p167 = scmp.eq.s32.totalorder %s22, 0
      %p168 = por %p166, %p167
      %p169 = scmp.ne.s32.totalorder %s161, %s163
      %p170 = scmp.eq.s32.totalorder %s27, 1
      %p171 = por %p169, %p170
      %p172 = scmp.ne.s32.totalorder %s163, %s164
      %p173 = scmp.eq.s32.totalorder %s27, 0
      %p174 = por %p172, %p173
      %p175 = scmp.ne.s32.totalorder %s163, %s164
      %p176 = scmp.eq.s32.totalorder %s28, 1
      %p177 = por %p175, %p176
      %p179 = scmp.ne.s32.totalorder %s164, %s178
      %p180 = scmp.eq.s32.totalorder %s28, 0
      %p181 = por %p179, %p180
      %s183 = sadd.s32 %s182, 1
      %p186 = scmp.eq.s32.totalorder %s22, 1
      %p187 = scmp.ne.s32.totalorder %s182, %s184
      %p188 = scmp.eq.s32.totalorder %s22, 0
      %p189 = por %p187, %p188
      %p190 = scmp.ne.s32.totalorder %s182, %s184
      %p191 = scmp.eq.s32.totalorder %s27, 1
      %p192 = por %p190, %p191
      %p193 = scmp.ne.s32.totalorder %s184, %s185
      %p194 = scmp.eq.s32.totalorder %s27, 0
      %p195 = por %p193, %p194
      %p196 = scmp.ne.s32.totalorder %s184, %s185
      %p197 = scmp.eq.s32.totalorder %s28, 1
      %p198 = por %p196, %p197
      %p200 = scmp.ne.s32.totalorder %s185, %s199
      %p201 = scmp.eq.s32.totalorder %s28, 0
      %p202 = por %p200, %p201
      %s204 = sadd.s32 %s203, 1
      %p207 = scmp.eq.s32.totalorder %s22, 1
      %p208 = scmp.ne.s32.totalorder %s203, %s205
      %p209 = scmp.eq.s32.totalorder %s22, 0
      %p210 = por %p208, %p209
      %p211 = scmp.ne.s32.totalorder %s203, %s205
      %p212 = scmp.eq.s32.totalorder %s27, 1
      %p213 = por %p211, %p212
      %p214 = scmp.ne.s32.totalorder %s205, %s206
      %p215 = scmp.eq.s32.totalorder %s27, 0
      %p216 = por %p214, %p215
      %p217 = scmp.ne.s32.totalorder %s205, %s206
      %p218 = scmp.eq.s32.totalorder %s28, 1
      %p219 = por %p217, %p218
      %p221 = scmp.ne.s32.totalorder %s206, %s220
      %p222 = scmp.eq.s32.totalorder %s28, 0
      %p223 = por %p221, %p222
      %s225 = sadd.s32 %s224, 1
      %p228 = scmp.eq.s32.totalorder %s22, 1
      %p229 = scmp.ne.s32.totalorder %s224, %s226
      %p230 = scmp.eq.s32.totalorder %s22, 0
      %p231 = por %p229, %p230
      %p232 = scmp.ne.s32.totalorder %s224, %s226
      %p233 = scmp.eq.s32.totalorder %s27, 1
      %p234 = por %p232, %p233
      %p235 = scmp.ne.s32.totalorder %s226, %s227
      %p236 = scmp.eq.s32.totalorder %s27, 0
      %p237 = por %p235, %p236
      %p238 = scmp.ne.s32.totalorder %s226, %s227
      %p239 = scmp.eq.s32.totalorder %s28, 1
      %p240 = por %p238, %p239
      %p242 = scmp.ne.s32.totalorder %s227, %s241
      %p243 = scmp.eq.s32.totalorder %s28, 0
      %p244 = por %p242, %p243
      %s246 = sadd.s32 %s245, 1
      %p249 = scmp.eq.s32.totalorder %s22, 1
      %p250 = scmp.ne.s32.totalorder %s245, %s247
      %p251 = scmp.eq.s32.totalorder %s22, 0
      %p252 = por %p250, %p251
      %p253 = scmp.ne.s32.totalorder %s245, %s247
      %p254 = scmp.eq.s32.totalorder %s27, 1
      %p255 = por %p253, %p254
      %p256 = scmp.ne.s32.totalorder %s247, %s248
      %p257 = scmp.eq.s32.totalorder %s27, 0
      %p258 = por %p256, %p257
      %p259 = scmp.ne.s32.totalorder %s247, %s248
      %p260 = scmp.eq.s32.totalorder %s28, 1
      %p261 = por %p259, %p260
      %p263 = scmp.ne.s32.totalorder %s248, %s262
      %p264 = scmp.eq.s32.totalorder %s28, 0
      %p265 = por %p263, %p264
      %s267 = sadd.s32 %s266, 1
      %p270 = scmp.eq.s32.totalorder %s22, 1
      %p271 = scmp.ne.s32.totalorder %s266, %s268
      %p272 = scmp.eq.s32.totalorder %s22, 0
      %p273 = por %p271, %p272
      %p274 = scmp.ne.s32.totalorder %s266, %s268
      %p275 = scmp.eq.s32.totalorder %s27, 1
      %p276 = por %p274, %p275
      %p277 = scmp.ne.s32.totalorder %s268, %s269
      %p278 = scmp.eq.s32.totalorder %s27, 0
      %p279 = por %p277, %p278
      %p280 = scmp.ne.s32.totalorder %s268, %s269
      %p281 = scmp.eq.s32.totalorder %s28, 1
      %p282 = por %p280, %p281
      %p284 = scmp.ne.s32.totalorder %s269, %s283
      %p285 = scmp.eq.s32.totalorder %s28, 0
      %p286 = por %p284, %p285
      %s287 = ssub.s32 %s22, %s29
      %p288 = scmp.eq.s32.totalorder %s287, 0
      %s290 = sadd.s32 %s289, 1
      %s291 = scalar_select %p288, %s289, %s290
      %p294 = pneg %p288
      %p295 = scmp.eq.s32.totalorder %s22, 1
      %p296 = por %p294, %p295
      %p297 = scmp.ne.s32.totalorder %s289, %s292
      %p298 = scmp.eq.s32.totalorder %s22, 0
      %p299 = por %p297, %p298
      %p300 = scmp.ne.s32.totalorder %s289, %s292
      %p301 = scmp.eq.s32.totalorder %s27, 1
      %p302 = por %p300, %p301
      %p303 = scmp.ne.s32.totalorder %s292, %s293
      %p304 = scmp.eq.s32.totalorder %s27, 0
      %p305 = por %p303, %p304
      %p306 = scmp.ne.s32.totalorder %s292, %s293
      %p307 = scmp.eq.s32.totalorder %s28, 1
      %p308 = por %p306, %p307
      %p310 = scmp.ne.s32.totalorder %s293, %s309
      %p311 = scmp.eq.s32.totalorder %s28, 0
      %p312 = por %p310, %p311
      %p313 = scmp.le.s32.totalorder 1, %s22
      %p314 = scmp.lt.s32.totalorder %s22, 3
      %p315 = pnand %p313, %p314
      %p316 = pneg %p315
      // Predicated region
      $region9: #{dtransformer_pallas.2} parent=5 // pred_check
        _
      $region10: #{dtransformer_pallas.2} parent=5 // pred_check_branch
        %318 = sbr.rel (%p315) target = $region12
      $region11: #{dtransformer_pallas.2} parent=5 // pred_region
        %s319 = ssub.s32 %s22, 1
        // Predicated region
        $region13: #{dtransformer_pallas.2} parent=11 // pred_check
          %p320 = pneg %p69
        $region14: #{dtransformer_pallas.2} parent=11 // pred_check_branch
          %322 = sbr.rel (%p320) target = $region16
        $region15: #{dtransformer_pallas.2} parent=11 // pred_region
          %s324 = ssub.s32 16, 16
          %325 = vsyncadd [#allocation4], %s324
          %s327 = sshll.u32 [#allocation3], 4
          %s328 = int_to_ptr.vmem [resolvable:$true] %s327
          %330 = dma.hbm_to_vmem [thread:$0]  %s1, 16, %s328, [#allocation4]
        $region16: #{dtransformer_pallas.2} parent=11 // pred_fallthru
          _
        // Predicated region
        $region17: #{dtransformer_pallas.2} parent=11 // pred_check
          %p331 = pneg %p90
        $region18: #{dtransformer_pallas.2} parent=11 // pred_check_branch
          %333 = sbr.rel (%p331) target = $region20
        $region19: #{dtransformer_pallas.2} parent=11 // pred_region
          %s335 = ssub.s32 16, 16
          %336 = vsyncadd [#allocation6], %s335
          %s338 = sshll.u32 [#allocation5], 4
          %s339 = int_to_ptr.vmem [resolvable:$true] %s338
          %341 = dma.hbm_to_vmem [thread:$0]  %s2, 16, %s339, [#allocation6]
        $region20: #{dtransformer_pallas.2} parent=11 // pred_fallthru
          _
        // Predicated region
        $region21: #{dtransformer_pallas.2} parent=11 // pred_check
          %p342 = pneg %p111
        $region22: #{dtransformer_pallas.2} parent=11 // pred_check_branch
          %344 = sbr.rel (%p342) target = $region24
        $region23: #{dtransformer_pallas.2} parent=11 // pred_region
          _
        $region24: #{dtransformer_pallas.2} parent=11 // pred_fallthru
          _
        // Predicated region
        $region25: #{dtransformer_pallas.2} parent=11 // pred_check
          %p345 = pneg %p132
        $region26: #{dtransformer_pallas.2} parent=11 // pred_check_branch
          %347 = sbr.rel (%p345) target = $region28
        $region27: #{dtransformer_pallas.2} parent=11 // pred_region
          _
        $region28: #{dtransformer_pallas.2} parent=11 // pred_fallthru
          _
        // Predicated region
        $region29: #{dtransformer_pallas.2} parent=11 // pred_check
          %p348 = pneg %p153
        $region30: #{dtransformer_pallas.2} parent=11 // pred_check_branch
          %350 = sbr.rel (%p348) target = $region32
        $region31: #{dtransformer_pallas.2} parent=11 // pred_region
          %s352 = ssub.s32 16, 16
          %353 = vsyncadd [#allocation6], %s352
          %s355 = sshll.u32 [#allocation7], 4
          %s356 = int_to_ptr.vmem [resolvable:$true] %s355
          %358 = dma.hbm_to_vmem [thread:$0]  %s5, 16, %s356, [#allocation6]
        $region32: #{dtransformer_pallas.2} parent=11 // pred_fallthru
          _
        // Predicated region
        $region33: #{dtransformer_pallas.2} parent=11 // pred_check
          %p359 = pneg %p174
        $region34: #{dtransformer_pallas.2} parent=11 // pred_check_branch
          %361 = sbr.rel (%p359) target = $region36
        $region35: #{dtransformer_pallas.2} parent=11 // pred_region
          %s363 = ssub.s32 16, 16
          %364 = vsyncadd [#allocation9], %s363
          %s366 = sshll.u32 [#allocation8], 4
          %s367 = int_to_ptr.vmem [resolvable:$true] %s366
          %369 = dma.hbm_to_vmem [thread:$0]  %s6, 16, %s367, [#allocation9]
        $region36: #{dtransformer_pallas.2} parent=11 // pred_fallthru
          _
        // Predicated region
        $region37: #{dtransformer_pallas.2} parent=11 // pred_check
          %p370 = pneg %p195
        $region38: #{dtransformer_pallas.2} parent=11 // pred_check_branch
          %372 = sbr.rel (%p370) target = $region40
        $region39: #{dtransformer_pallas.2} parent=11 // pred_region
          %s374 = ssub.s32 16, 16
          %375 = vsyncadd [#allocation9], %s374
          %s377 = sshll.u32 [#allocation10], 4
          %s378 = int_to_ptr.vmem [resolvable:$true] %s377
          %380 = dma.hbm_to_vmem [thread:$0]  %s7, 16, %s378, [#allocation9]
        $region40: #{dtransformer_pallas.2} parent=11 // pred_fallthru
          _
        // Predicated region
        $region41: #{dtransformer_pallas.2} parent=11 // pred_check
          %p381 = pneg %p216
        $region42: #{dtransformer_pallas.2} parent=11 // pred_check_branch
          %383 = sbr.rel (%p381) target = $region44
        $region43: #{dtransformer_pallas.2} parent=11 // pred_region
          _
        $region44: #{dtransformer_pallas.2} parent=11 // pred_fallthru
          _
        // Predicated region
        $region45: #{dtransformer_pallas.2} parent=11 // pred_check
          %p384 = pneg %p237
        $region46: #{dtransformer_pallas.2} parent=11 // pred_check_branch
          %386 = sbr.rel (%p384) target = $region48
        $region47: #{dtransformer_pallas.2} parent=11 // pred_region
          %s388 = ssub.s32 16, 16
          %389 = vsyncadd [#allocation12], %s388
          %s391 = sshll.u32 [#allocation11], 4
          %s392 = int_to_ptr.vmem [resolvable:$true] %s391
          %394 = dma.hbm_to_vmem [thread:$0]  %s9, 16, %s392, [#allocation12]
        $region48: #{dtransformer_pallas.2} parent=11 // pred_fallthru
          _
        // Predicated region
        $region49: #{dtransformer_pallas.2} parent=11 // pred_check
          %p395 = pneg %p258
        $region50: #{dtransformer_pallas.2} parent=11 // pred_check_branch
          %397 = sbr.rel (%p395) target = $region52
        $region51: #{dtransformer_pallas.2} parent=11 // pred_region
          _
        $region52: #{dtransformer_pallas.2} parent=11 // pred_fallthru
          _
        // Predicated region
        $region53: #{dtransformer_pallas.2} parent=11 // pred_check
          %p398 = pneg %p279
        $region54: #{dtransformer_pallas.2} parent=11 // pred_check_branch
          %400 = sbr.rel (%p398) target = $region56
        $region55: #{dtransformer_pallas.2} parent=11 // pred_region
          %s402 = ssub.s32 16, 16
          %403 = vsyncadd [#allocation12], %s402
          %s405 = sshll.u32 [#allocation13], 4
          %s406 = int_to_ptr.vmem [resolvable:$true] %s405
          %408 = dma.hbm_to_vmem [thread:$0]  %s11, 16, %s406, [#allocation12]
        $region56: #{dtransformer_pallas.2} parent=11 // pred_fallthru
          _
      $region12: #{dtransformer_pallas.2} parent=5 // pred_fallthru
        _
      %p409 = scmp.lt.s32.totalorder %s22, 2
      // Predicated region
      $region57: #{dtransformer_pallas.2} parent=5 // pred_check
        %p410 = pneg %p409
      $region58: #{dtransformer_pallas.2} parent=5 // pred_check_branch
        %412 = sbr.rel (%p410) target = $region60
      $region59: #{dtransformer_pallas.2} parent=5 // pred_region
        // Predicated region
        $region61: #{dtransformer_pallas.2} parent=59 // pred_check
          %p413 = pneg %p42
        $region62: #{dtransformer_pallas.2} parent=59 // pred_check_branch
          %415 = sbr.rel (%p413) target = $region64
        $region63: #{dtransformer_pallas.2} parent=59 // pred_region
          %p416 = scmp.lt.s32.totalorder %s22, 1
          %s417 = scalar_select %p416, %s22, 1
          %s418 = smul.addr %s417, 8
          %s419 = scalar_lea.vmem %s0, %s418
        $region64: #{dtransformer_pallas.2} parent=59 // pred_fallthru
          _
      $region60: #{dtransformer_pallas.2} parent=5 // pred_fallthru
        _
      %p420 = scmp.le.s32.totalorder 1, %s22
      %p421 = scmp.lt.s32.totalorder %s22, 3
      %p422 = pnand %p420, %p421
      %p423 = pneg %p422
      // Predicated region
      $region65: #{dtransformer_pallas.2} parent=5 // pred_check
        _
      $region66: #{dtransformer_pallas.2} parent=5 // pred_check_branch
        %425 = sbr.rel (%p422) target = $region68
      $region67: #{dtransformer_pallas.2} parent=5 // pred_region
        %s426 = ssub.s32 %s22, 1
        // Predicated region
        $region69: #{dtransformer_pallas.2} parent=67 // pred_check
          %p427 = pneg %p69
        $region70: #{dtransformer_pallas.2} parent=67 // pred_check_branch
          %429 = sbr.rel (%p427) target = $region72
        $region71: #{dtransformer_pallas.2} parent=67 // pred_region
          %430 = dma.done [#allocation4], 16
        $region72: #{dtransformer_pallas.2} parent=67 // pred_fallthru
          _
        // Predicated region
        $region73: #{dtransformer_pallas.2} parent=67 // pred_check
          %p431 = pneg %p90
        $region74: #{dtransformer_pallas.2} parent=67 // pred_check_branch
          %433 = sbr.rel (%p431) target = $region76
        $region75: #{dtransformer_pallas.2} parent=67 // pred_region
          %434 = dma.done [#allocation6], 16
        $region76: #{dtransformer_pallas.2} parent=67 // pred_fallthru
          _
        // Predicated region
        $region77: #{dtransformer_pallas.2} parent=67 // pred_check
          %p435 = pneg %p153
        $region78: #{dtransformer_pallas.2} parent=67 // pred_check_branch
          %437 = sbr.rel (%p435) target = $region80
        $region79: #{dtransformer_pallas.2} parent=67 // pred_region
          %438 = dma.done [#allocation6], 16
        $region80: #{dtransformer_pallas.2} parent=67 // pred_fallthru
          _
        // Predicated region
        $region81: #{dtransformer_pallas.2} parent=67 // pred_check
          %p439 = pneg %p174
        $region82: #{dtransformer_pallas.2} parent=67 // pred_check_branch
          %441 = sbr.rel (%p439) target = $region84
        $region83: #{dtransformer_pallas.2} parent=67 // pred_region
          %442 = dma.done [#allocation9], 16
        $region84: #{dtransformer_pallas.2} parent=67 // pred_fallthru
          _
        // Predicated region
        $region85: #{dtransformer_pallas.2} parent=67 // pred_check
          %p443 = pneg %p195
        $region86: #{dtransformer_pallas.2} parent=67 // pred_check_branch
          %445 = sbr.rel (%p443) target = $region88
        $region87: #{dtransformer_pallas.2} parent=67 // pred_region
          %446 = dma.done [#allocation9], 16
        $region88: #{dtransformer_pallas.2} parent=67 // pred_fallthru
          _
        // Predicated region
        $region89: #{dtransformer_pallas.2} parent=67 // pred_check
          %p447 = pneg %p237
        $region90: #{dtransformer_pallas.2} parent=67 // pred_check_branch
          %449 = sbr.rel (%p447) target = $region92
        $region91: #{dtransformer_pallas.2} parent=67 // pred_region
          %450 = dma.done [#allocation12], 16
        $region92: #{dtransformer_pallas.2} parent=67 // pred_fallthru
          _
        // Predicated region
        $region93: #{dtransformer_pallas.2} parent=67 // pred_check
          %p451 = pneg %p279
        $region94: #{dtransformer_pallas.2} parent=67 // pred_check_branch
          %453 = sbr.rel (%p451) target = $region96
        $region95: #{dtransformer_pallas.2} parent=67 // pred_region
          %454 = dma.done [#allocation12], 16
        $region96: #{dtransformer_pallas.2} parent=67 // pred_fallthru
          _
        %p455 = scmp.lt.s32.totalorder %s27, 1
        %s456 = scalar_select %p455, %s27, 1
        %s457 = smul.addr %s456, 8
        %s458 = scalar_lea.vmem %s0, %s457
        %p459 = pneg %p48
        %p460 = pneg %p45
        %p461 = pneg %p69
        %p462 = pneg %p66
        %p463 = pneg %p90
        %p464 = pneg %p87
        %p465 = pneg %p111
        %p466 = pneg %p108
        %p467 = pneg %p132
        %p468 = pneg %p129
        %p469 = pneg %p153
        %p470 = pneg %p150
        %p471 = pneg %p174
        %p472 = pneg %p171
        %p473 = pneg %p195
        %p474 = pneg %p192
        %p475 = pneg %p216
        %p476 = pneg %p213
        %p477 = pneg %p237
        %p478 = pneg %p234
        %p479 = pneg %p258
        %p480 = pneg %p255
        %p481 = pneg %p279
        %p482 = pneg %p276
        %p483 = pneg %p305
        %p484 = pneg %p302
        %p485 = scmp.lt.s32.totalorder %s27, 1
        %s486 = scalar_select %p485, %s27, 1
        %s487 = smul.addr %s486, 8
        %s488 = scalar_lea.vmem %s12, %s487
        %p489 = scmp.lt.s32.totalorder %s27, 1
        %s490 = scalar_select %p489, %s27, 1
        %s491 = smul.addr %s490, 8
        %s492 = scalar_lea.vmem %s0, %s491
        %p493 = scmp.lt.s32.totalorder %s27, 1
        %s494 = scalar_select %p493, %s27, 1
        %s495 = smul.addr %s494, 8
        %s496 = scalar_lea.vmem %s12, %s495
        %v497 = vld [vmem:[%s492] sm:$0xff]
        %v498 = vld [vmem:[#allocation3] sm:$0x1]
        %v499 = vld [vmem:[#allocation5] sm:$0x1]
        %vm500 = vcmask 261120
        %v501 = vsel %vm500, %v497, 0.0
        %502 = vadd.xlane.f32.xlu0 %v501
        %v503 = vpop.xlane.xlu0 %502
        %v504 = vrcp.pop 32.0
        %v505 = vmul.f32 %v503, %v504
        %v506 = vsub.f32 %v497, %v505
        %v507 = vmul.f32 %v506, %v506
        %v508 = vsel %vm500, %v507, 0.0
        %509 = vadd.xlane.f32.xlu0 %v508
        %v510 = vpop.xlane.xlu0 %509
        %v511 = vmul.f32 %v510, %v504
        %v512 = vadd.f32 %v511, 1e-05
        %v513 = vrsqrt.pop %v512
        %v514 = vmul.f32 %v506, %v513
        %v516 = vlaneseq
        %v517 = vshrl.u32 %v516, 7
        %v518 = vsub.s32 0, %v517
        %v519 = vrot.slane %v498, %v518
        %v521 = vmul.f32 %v514, %v519
        %v523 = vlaneseq
        %v524 = vshrl.u32 %v523, 7
        %v525 = vsub.s32 0, %v524
        %v526 = vrot.slane %v499, %v525
        %v528 = vadd.f32 %v521, %v526
        %v529 = vld [vmem:[%s3] sm:$0xff]
        %v530 = vld [vmem:[%s3 + $0x8] sm:$0xff]
        %v531 = vld [vmem:[%s3 + $0x10] sm:$0xff]
        %v532 = vld [vmem:[%s3 + $0x18] sm:$0xff]
        %v534 = vsel %vm500, %v528, 0
        %536 = vmatprep.subr.mxu0 0.0
        %537 = vmatpush1.msra.mxu0 0.0
        %538 = vmatprep.subr.mxu0 0.0
        %539 = vmatpush1.msra.mxu0 0.0
        %540 = vmatprep.subr.mxu0 0.0
        %541 = vmatpush1.msra.mxu0 0.0
        %542 = vmatprep.subr.mxu0 0.0
        %543 = vmatpush1.msra.mxu0 0.0
        %544 = vmatprep.subr.mxu0 0.0
        %545 = vmatpush1.msra.mxu0 0.0
        %546 = vmatprep.subr.mxu0 0.0
        %547 = vmatpush1.msra.mxu0 0.0
        %548 = vmatprep.subr.mxu0 0.0
        %549 = vmatpush1.msra.mxu0 0.0
        %550 = vmatprep.subr.mxu0 0.0
        %551 = vmatpush1.msra.mxu0 0.0
        %552 = vmatprep.subr.mxu0 0.0
        %553 = vmatpush1.msra.mxu0 0.0
        %554 = vmatprep.subr.mxu0 0.0
        %555 = vmatpush1.msra.mxu0 0.0
        %556 = vmatprep.subr.mxu0 0.0
        %557 = vmatpush1.msra.mxu0 0.0
        %558 = vmatprep.subr.mxu0 0.0
        %559 = vmatpush1.msra.mxu0 0.0
        %560 = vmatprep.subr.mxu0 0.0
        %561 = vmatpush1.msra.mxu0 %v532
        %562 = vmatprep.subr.mxu0 0.0
        %563 = vmatpush1.msra.mxu0 %v531
        %564 = vmatprep.subr.mxu0 0.0
        %565 = vmatpush1.msra.mxu0 %v530
        %566 = vmatprep.subr.mxu0 0.0
        %567 = vmatpush1.msra.mxu0 %v529
        %568 = vmatprep.subr.mxu0 0.0
        %569 = vmatpush2.msra.mxu0 0.0
        %570 = vmatprep.subr.mxu0 0.0
        %571 = vmatpush2.msra.mxu0 0.0
        %572 = vmatprep.subr.mxu0 0.0
        %573 = vmatpush2.msra.mxu0 0.0
        %574 = vmatprep.subr.mxu0 0.0
        %575 = vmatpush2.msra.mxu0 0.0
        %576 = vmatprep.subr.mxu0 0.0
        %577 = vmatpush2.msra.mxu0 0.0
        %578 = vmatprep.subr.mxu0 0.0
        %579 = vmatpush2.msra.mxu0 0.0
        %580 = vmatprep.subr.mxu0 0.0
        %581 = vmatpush2.msra.mxu0 0.0
        %582 = vmatprep.subr.mxu0 0.0
        %583 = vmatpush2.msra.mxu0 0.0
        %584 = vmatprep.subr.mxu0 0.0
        %585 = vmatpush2.msra.mxu0 0.0
        %586 = vmatprep.subr.mxu0 0.0
        %587 = vmatpush2.msra.mxu0 0.0
        %588 = vmatprep.subr.mxu0 0.0
        %589 = vmatpush2.msra.mxu0 0.0
        %590 = vmatprep.subr.mxu0 0.0
        %591 = vmatpush2.msra.mxu0 0.0
        %592 = vmatprep.subr.mxu0 0.0
        %593 = vmatpush2.msra.mxu0 0.0
        %594 = vmatprep.subr.mxu0 0.0
        %595 = vmatpush2.msra.mxu0 0.0
        %596 = vmatprep.subr.mxu0 0.0
        %597 = vmatpush2.msra.mxu0 0.0
        %598 = vmatprep.subr.mxu0 0.0
        %599 = vmatpush2.msra.mxu0 0.0
        %600 = vmatprep.mubr.f32.mxu0 0.0
        %601 = vmatmul.mubr.f32.gmra.mxu0 %v534
        %v602 = vpop.f32.mrf.mxu0
        %v603 = vadd.f32 0.0, %v602
        %v604 = vpop.f32.mrf.mxu0
        %605 = vdwg.mxu0
        %607 = vrot.lane.b32.xlu0 %v603, 96
        %v608 = vpop.permute.xlu0 %607
        %vm609 = vcmask 31744
        %v610 = vsel %vm609, %v603, 0
        %v612 = vsel %vm609, %v608, 0
        %614 = vmatprep.subr.mxu0 0.0
        %615 = vmatpush1.xpose.msra.mxu0 0.0
        %616 = vmatprep.subr.mxu0 0.0
        %617 = vmatpush1.xpose.msra.mxu0 0.0
        %618 = vmatprep.subr.mxu0 0.0
        %619 = vmatpush1.xpose.msra.mxu0 0.0
        %620 = vmatprep.subr.mxu0 0.0
        %621 = vmatpush1.xpose.msra.mxu0 0.0
        %622 = vmatprep.subr.mxu0 0.0
        %623 = vmatpush1.xpose.msra.mxu0 0.0
        %624 = vmatprep.subr.mxu0 0.0
        %625 = vmatpush1.xpose.msra.mxu0 0.0
        %626 = vmatprep.subr.mxu0 0.0
        %627 = vmatpush1.xpose.msra.mxu0 0.0
        %628 = vmatprep.subr.mxu0 0.0
        %629 = vmatpush1.xpose.msra.mxu0 0.0
        %630 = vmatprep.subr.mxu0 0.0
        %631 = vmatpush1.xpose.msra.mxu0 0.0
        %632 = vmatprep.subr.mxu0 0.0
        %633 = vmatpush1.xpose.msra.mxu0 0.0
        %634 = vmatprep.subr.mxu0 0.0
        %635 = vmatpush1.xpose.msra.mxu0 0.0
        %636 = vmatprep.subr.mxu0 0.0
        %637 = vmatpush1.xpose.msra.mxu0 0.0
        %638 = vmatprep.subr.mxu0 0.0
        %639 = vmatpush1.xpose.msra.mxu0 0.0
        %640 = vmatprep.subr.mxu0 0.0
        %641 = vmatpush1.xpose.msra.mxu0 0.0
        %642 = vmatprep.subr.mxu0 0.0
        %643 = vmatpush1.xpose.msra.mxu0 0.0
        %644 = vmatprep.subr.mxu0 0.0
        %645 = vmatpush1.xpose.msra.mxu0 %v612
        %646 = vmatprep.subr.mxu0 0.0
        %647 = vmatpush2.xpose.msra.mxu0 0.0
        %648 = vmatprep.subr.mxu0 0.0
        %649 = vmatpush2.xpose.msra.mxu0 0.0
        %650 = vmatprep.subr.mxu0 0.0
        %651 = vmatpush2.xpose.msra.mxu0 0.0
        %652 = vmatprep.subr.mxu0 0.0
        %653 = vmatpush2.xpose.msra.mxu0 0.0
        %654 = vmatprep.subr.mxu0 0.0
        %655 = vmatpush2.xpose.msra.mxu0 0.0
        %656 = vmatprep.subr.mxu0 0.0
        %657 = vmatpush2.xpose.msra.mxu0 0.0
        %658 = vmatprep.subr.mxu0 0.0
        %659 = vmatpush2.xpose.msra.mxu0 0.0
        %660 = vmatprep.subr.mxu0 0.0
        %661 = vmatpush2.xpose.msra.mxu0 0.0
        %662 = vmatprep.subr.mxu0 0.0
        %663 = vmatpush2.xpose.msra.mxu0 0.0
        %664 = vmatprep.subr.mxu0 0.0
        %665 = vmatpush2.xpose.msra.mxu0 0.0
        %666 = vmatprep.subr.mxu0 0.0
        %667 = vmatpush2.xpose.msra.mxu0 0.0
        %668 = vmatprep.subr.mxu0 0.0
        %669 = vmatpush2.xpose.msra.mxu0 0.0
        %670 = vmatprep.subr.mxu0 0.0
        %671 = vmatpush2.xpose.msra.mxu0 0.0
        %672 = vmatprep.subr.mxu0 0.0
        %673 = vmatpush2.xpose.msra.mxu0 0.0
        %674 = vmatprep.subr.mxu0 0.0
        %675 = vmatpush2.xpose.msra.mxu0 0.0
        %676 = vmatprep.subr.mxu0 0.0
        %677 = vmatpush2.xpose.msra.mxu0 0.0
        %678 = vmatprep.mubr.f32.mxu0 0.0
        %679 = vmatmul.mubr.f32.gmra.mxu0 %v610
        %v680 = vpop.f32.mrf.mxu0
        %v681 = vadd.f32 0.0, %v680
        %v682 = vpop.f32.mrf.mxu0
        %683 = vdwg.mxu0
        %vm684 = vcmask 64512
        %v685 = vsel %vm684, %v681, -inf
        %686 = vmax.xlane.f32.xlu0 %v685
        %v687 = vpop.xlane.xlu0 %686
        %v688 = vsub.f32 %v681, %v687
        %v689 = vmul.f32 %v688, 1.442695
        %v690 = vpow.pop %v689
        %v691 = vsel %vm684, %v690, 0.0
        %692 = vadd.xlane.f32.xlu0 %v691
        %v693 = vpop.xlane.xlu0 %692
        %v694 = vrcp.pop %v693
        %v695 = vmul.f32 %v693, %v694
        %v696 = vsub.f32 2.0, %v695
        %v697 = vmul.f32 %v694, %v696
        %698 = vrot.lane.b32.xlu0 %v603, 64
        %v699 = vpop.permute.xlu0 %698
        %v702 = vsel %vm684, %v690, 0
        %704 = vmatprep.subr.mxu0 0.0
        %705 = vmatpush1.msra.mxu0 0.0
        %706 = vmatprep.subr.mxu0 0.0
        %707 = vmatpush1.msra.mxu0 0.0
        %708 = vmatprep.subr.mxu0 0.0
        %709 = vmatpush1.msra.mxu0 0.0
        %710 = vmatprep.subr.mxu0 0.0
        %711 = vmatpush1.msra.mxu0 0.0
        %712 = vmatprep.subr.mxu0 0.0
        %713 = vmatpush1.msra.mxu0 0.0
        %714 = vmatprep.subr.mxu0 0.0
        %715 = vmatpush1.msra.mxu0 0.0
        %716 = vmatprep.subr.mxu0 0.0
        %717 = vmatpush1.msra.mxu0 0.0
        %718 = vmatprep.subr.mxu0 0.0
        %719 = vmatpush1.msra.mxu0 0.0
        %720 = vmatprep.subr.mxu0 0.0
        %721 = vmatpush1.msra.mxu0 0.0
        %722 = vmatprep.subr.mxu0 0.0
        %723 = vmatpush1.msra.mxu0 0.0
        %724 = vmatprep.subr.mxu0 0.0
        %725 = vmatpush1.msra.mxu0 0.0
        %726 = vmatprep.subr.mxu0 0.0
        %727 = vmatpush1.msra.mxu0 0.0
        %728 = vmatprep.subr.mxu0 0.0
        %729 = vmatpush1.msra.mxu0 0.0
        %730 = vmatprep.subr.mxu0 0.0
        %731 = vmatpush1.msra.mxu0 0.0
        %732 = vmatprep.subr.mxu0 0.0
        %733 = vmatpush1.msra.mxu0 0.0
        %734 = vmatprep.subr.mxu0 0.0
        %735 = vmatpush1.msra.mxu0 %v699
        %736 = vmatprep.subr.mxu0 0.0
        %737 = vmatpush2.msra.mxu0 0.0
        %738 = vmatprep.subr.mxu0 0.0
        %739 = vmatpush2.msra.mxu0 0.0
        %740 = vmatprep.subr.mxu0 0.0
        %741 = vmatpush2.msra.mxu0 0.0
        %742 = vmatprep.subr.mxu0 0.0
        %743 = vmatpush2.msra.mxu0 0.0
        %744 = vmatprep.subr.mxu0 0.0
        %745 = vmatpush2.msra.mxu0 0.0
        %746 = vmatprep.subr.mxu0 0.0
        %747 = vmatpush2.msra.mxu0 0.0
        %748 = vmatprep.subr.mxu0 0.0
        %749 = vmatpush2.msra.mxu0 0.0
        %750 = vmatprep.subr.mxu0 0.0
        %751 = vmatpush2.msra.mxu0 0.0
        %752 = vmatprep.subr.mxu0 0.0
        %753 = vmatpush2.msra.mxu0 0.0
        %754 = vmatprep.subr.mxu0 0.0
        %755 = vmatpush2.msra.mxu0 0.0
        %756 = vmatprep.subr.mxu0 0.0
        %757 = vmatpush2.msra.mxu0 0.0
        %758 = vmatprep.subr.mxu0 0.0
        %759 = vmatpush2.msra.mxu0 0.0
        %760 = vmatprep.subr.mxu0 0.0
        %761 = vmatpush2.msra.mxu0 0.0
        %762 = vmatprep.subr.mxu0 0.0
        %763 = vmatpush2.msra.mxu0 0.0
        %764 = vmatprep.subr.mxu0 0.0
        %765 = vmatpush2.msra.mxu0 0.0
        %766 = vmatprep.subr.mxu0 0.0
        %767 = vmatpush2.msra.mxu0 0.0
        %768 = vmatprep.mubr.f32.mxu0 0.0
        %769 = vmatmul.mubr.f32.gmra.mxu0 %v702
        %v770 = vpop.f32.mrf.mxu0
        %v771 = vadd.f32 0.0, %v770
        %v772 = vpop.f32.mrf.mxu0
        %773 = vdwg.mxu0
        %v774 = vmul.f32 %v771, %v697
        %775 = vst.msk [vmem:[#allocation2] sm:$0xff] %vm609, %v774
        %776 = vrot.lane.b32.xlu0 %v603, 124
        %v777 = vpop.permute.xlu0 %776
        %778 = vrot.lane.b32.xlu0 %v603, 92
        %v779 = vpop.permute.xlu0 %778
        %v780 = vsel %vm609, %v777, 0
        %v782 = vsel %vm609, %v779, 0
        %784 = vmatprep.subr.mxu0 0.0
        %785 = vmatpush1.xpose.msra.mxu0 0.0
        %786 = vmatprep.subr.mxu0 0.0
        %787 = vmatpush1.xpose.msra.mxu0 0.0
        %788 = vmatprep.subr.mxu0 0.0
        %789 = vmatpush1.xpose.msra.mxu0 0.0
        %790 = vmatprep.subr.mxu0 0.0
        %791 = vmatpush1.xpose.msra.mxu0 0.0
        %792 = vmatprep.subr.mxu0 0.0
        %793 = vmatpush1.xpose.msra.mxu0 0.0
        %794 = vmatprep.subr.mxu0 0.0
        %795 = vmatpush1.xpose.msra.mxu0 0.0
        %796 = vmatprep.subr.mxu0 0.0
        %797 = vmatpush1.xpose.msra.mxu0 0.0
        %798 = vmatprep.subr.mxu0 0.0
        %799 = vmatpush1.xpose.msra.mxu0 0.0
        %800 = vmatprep.subr.mxu0 0.0
        %801 = vmatpush1.xpose.msra.mxu0 0.0
        %802 = vmatprep.subr.mxu0 0.0
        %803 = vmatpush1.xpose.msra.mxu0 0.0
        %804 = vmatprep.subr.mxu0 0.0
        %805 = vmatpush1.xpose.msra.mxu0 0.0
        %806 = vmatprep.subr.mxu0 0.0
        %807 = vmatpush1.xpose.msra.mxu0 0.0
        %808 = vmatprep.subr.mxu0 0.0
        %809 = vmatpush1.xpose.msra.mxu0 0.0
        %810 = vmatprep.subr.mxu0 0.0
        %811 = vmatpush1.xpose.msra.mxu0 0.0
        %812 = vmatprep.subr.mxu0 0.0
        %813 = vmatpush1.xpose.msra.mxu0 0.0
        %814 = vmatprep.subr.mxu0 0.0
        %815 = vmatpush1.xpose.msra.mxu0 %v782
        %816 = vmatprep.subr.mxu0 0.0
        %817 = vmatpush2.xpose.msra.mxu0 0.0
        %818 = vmatprep.subr.mxu0 0.0
        %819 = vmatpush2.xpose.msra.mxu0 0.0
        %820 = vmatprep.subr.mxu0 0.0
        %821 = vmatpush2.xpose.msra.mxu0 0.0
        %822 = vmatprep.subr.mxu0 0.0
        %823 = vmatpush2.xpose.msra.mxu0 0.0
        %824 = vmatprep.subr.mxu0 0.0
        %825 = vmatpush2.xpose.msra.mxu0 0.0
        %826 = vmatprep.subr.mxu0 0.0
        %827 = vmatpush2.xpose.msra.mxu0 0.0
        %828 = vmatprep.subr.mxu0 0.0
        %829 = vmatpush2.xpose.msra.mxu0 0.0
        %830 = vmatprep.subr.mxu0 0.0
        %831 = vmatpush2.xpose.msra.mxu0 0.0
        %832 = vmatprep.subr.mxu0 0.0
        %833 = vmatpush2.xpose.msra.mxu0 0.0
        %834 = vmatprep.subr.mxu0 0.0
        %835 = vmatpush2.xpose.msra.mxu0 0.0
        %836 = vmatprep.subr.mxu0 0.0
        %837 = vmatpush2.xpose.msra.mxu0 0.0
        %838 = vmatprep.subr.mxu0 0.0
        %839 = vmatpush2.xpose.msra.mxu0 0.0
        %840 = vmatprep.subr.mxu0 0.0
        %841 = vmatpush2.xpose.msra.mxu0 0.0
        %842 = vmatprep.subr.mxu0 0.0
        %843 = vmatpush2.xpose.msra.mxu0 0.0
        %844 = vmatprep.subr.mxu0 0.0
        %845 = vmatpush2.xpose.msra.mxu0 0.0
        %846 = vmatprep.subr.mxu0 0.0
        %847 = vmatpush2.xpose.msra.mxu0 0.0
        %848 = vmatprep.mubr.f32.mxu0 0.0
        %849 = vmatmul.mubr.f32.gmra.mxu0 %v780
        %v850 = vpop.f32.mrf.mxu0
        %v851 = vadd.f32 0.0, %v850
        %v852 = vpop.f32.mrf.mxu0
        %853 = vdwg.mxu0
        %v854 = vsel %vm684, %v851, -inf
        %855 = vmax.xlane.f32.xlu0 %v854
        %v856 = vpop.xlane.xlu0 %855
        %v857 = vsub.f32 %v851, %v856
        %v858 = vmul.f32 %v857, 1.442695
        %v859 = vpow.pop %v858
        %v860 = vsel %vm684, %v859, 0.0
        %861 = vadd.xlane.f32.xlu0 %v860
        %v862 = vpop.xlane.xlu0 %861
        %v863 = vrcp.pop %v862
        %v864 = vmul.f32 %v862, %v863
        %v865 = vsub.f32 2.0, %v864
        %v866 = vmul.f32 %v863, %v865
        %867 = vrot.lane.b32.xlu0 %v603, 60
        %v868 = vpop.permute.xlu0 %867
        %v871 = vsel %vm684, %v859, 0
        %873 = vmatprep.subr.mxu0 0.0
        %874 = vmatpush1.msra.mxu0 0.0
        %875 = vmatprep.subr.mxu0 0.0
        %876 = vmatpush1.msra.mxu0 0.0
        %877 = vmatprep.subr.mxu0 0.0
        %878 = vmatpush1.msra.mxu0 0.0
        %879 = vmatprep.subr.mxu0 0.0
        %880 = vmatpush1.msra.mxu0 0.0
        %881 = vmatprep.subr.mxu0 0.0
        %882 = vmatpush1.msra.mxu0 0.0
        %883 = vmatprep.subr.mxu0 0.0
        %884 = vmatpush1.msra.mxu0 0.0
        %885 = vmatprep.subr.mxu0 0.0
        %886 = vmatpush1.msra.mxu0 0.0
        %887 = vmatprep.subr.mxu0 0.0
        %888 = vmatpush1.msra.mxu0 0.0
        %889 = vmatprep.subr.mxu0 0.0
        %890 = vmatpush1.msra.mxu0 0.0
        %891 = vmatprep.subr.mxu0 0.0
        %892 = vmatpush1.msra.mxu0 0.0
        %893 = vmatprep.subr.mxu0 0.0
        %894 = vmatpush1.msra.mxu0 0.0
        %895 = vmatprep.subr.mxu0 0.0
        %896 = vmatpush1.msra.mxu0 0.0
        %897 = vmatprep.subr.mxu0 0.0
        %898 = vmatpush1.msra.mxu0 0.0
        %899 = vmatprep.subr.mxu0 0.0
        %900 = vmatpush1.msra.mxu0 0.0
        %901 = vmatprep.subr.mxu0 0.0
        %902 = vmatpush1.msra.mxu0 0.0
        %903 = vmatprep.subr.mxu0 0.0
        %904 = vmatpush1.msra.mxu0 %v868
        %905 = vmatprep.subr.mxu0 0.0
        %906 = vmatpush2.msra.mxu0 0.0
        %907 = vmatprep.subr.mxu0 0.0
        %908 = vmatpush2.msra.mxu0 0.0
        %909 = vmatprep.subr.mxu0 0.0
        %910 = vmatpush2.msra.mxu0 0.0
        %911 = vmatprep.subr.mxu0 0.0
        %912 = vmatpush2.msra.mxu0 0.0
        %913 = vmatprep.subr.mxu0 0.0
        %914 = vmatpush2.msra.mxu0 0.0
        %915 = vmatprep.subr.mxu0 0.0
        %916 = vmatpush2.msra.mxu0 0.0
        %917 = vmatprep.subr.mxu0 0.0
        %918 = vmatpush2.msra.mxu0 0.0
        %919 = vmatprep.subr.mxu0 0.0
        %920 = vmatpush2.msra.mxu0 0.0
        %921 = vmatprep.subr.mxu0 0.0
        %922 = vmatpush2.msra.mxu0 0.0
        %923 = vmatprep.subr.mxu0 0.0
        %924 = vmatpush2.msra.mxu0 0.0
        %925 = vmatprep.subr.mxu0 0.0
        %926 = vmatpush2.msra.mxu0 0.0
        %927 = vmatprep.subr.mxu0 0.0
        %928 = vmatpush2.msra.mxu0 0.0
        %929 = vmatprep.subr.mxu0 0.0
        %930 = vmatpush2.msra.mxu0 0.0
        %931 = vmatprep.subr.mxu0 0.0
        %932 = vmatpush2.msra.mxu0 0.0
        %933 = vmatprep.subr.mxu0 0.0
        %934 = vmatpush2.msra.mxu0 0.0
        %935 = vmatprep.subr.mxu0 0.0
        %936 = vmatpush2.msra.mxu0 0.0
        %937 = vmatprep.mubr.f32.mxu0 0.0
        %938 = vmatmul.mubr.f32.gmra.mxu0 %v871
        %v939 = vpop.f32.mrf.mxu0
        %v940 = vadd.f32 0.0, %v939
        %v941 = vpop.f32.mrf.mxu0
        %942 = vdwg.mxu0
        %v943 = vmul.f32 %v940, %v866
        %945 = vrot.lane.b32.xlu0 %v943, 4
        %v946 = vpop.permute.xlu0 %945
        %vm948 = vcmask 64544
        %949 = vst.msk [vmem:[#allocation2] sm:$0xff] %vm948, %v946
        %950 = vrot.lane.b32.xlu0 %v603, 120
        %v951 = vpop.permute.xlu0 %950
        %952 = vrot.lane.b32.xlu0 %v603, 88
        %v953 = vpop.permute.xlu0 %952
        %v954 = vsel %vm609, %v951, 0
        %v956 = vsel %vm609, %v953, 0
        %958 = vmatprep.subr.mxu0 0.0
        %959 = vmatpush1.xpose.msra.mxu0 0.0
        %960 = vmatprep.subr.mxu0 0.0
        %961 = vmatpush1.xpose.msra.mxu0 0.0
        %962 = vmatprep.subr.mxu0 0.0
        %963 = vmatpush1.xpose.msra.mxu0 0.0
        %964 = vmatprep.subr.mxu0 0.0
        %965 = vmatpush1.xpose.msra.mxu0 0.0
        %966 = vmatprep.subr.mxu0 0.0
        %967 = vmatpush1.xpose.msra.mxu0 0.0
        %968 = vmatprep.subr.mxu0 0.0
        %969 = vmatpush1.xpose.msra.mxu0 0.0
        %970 = vmatprep.subr.mxu0 0.0
        %971 = vmatpush1.xpose.msra.mxu0 0.0
        %972 = vmatprep.subr.mxu0 0.0
        %973 = vmatpush1.xpose.msra.mxu0 0.0
        %974 = vmatprep.subr.mxu0 0.0
        %975 = vmatpush1.xpose.msra.mxu0 0.0
        %976 = vmatprep.subr.mxu0 0.0
        %977 = vmatpush1.xpose.msra.mxu0 0.0
        %978 = vmatprep.subr.mxu0 0.0
        %979 = vmatpush1.xpose.msra.mxu0 0.0
        %980 = vmatprep.subr.mxu0 0.0
        %981 = vmatpush1.xpose.msra.mxu0 0.0
        %982 = vmatprep.subr.mxu0 0.0
        %983 = vmatpush1.xpose.msra.mxu0 0.0
        %984 = vmatprep.subr.mxu0 0.0
        %985 = vmatpush1.xpose.msra.mxu0 0.0
        %986 = vmatprep.subr.mxu0 0.0
        %987 = vmatpush1.xpose.msra.mxu0 0.0
        %988 = vmatprep.subr.mxu0 0.0
        %989 = vmatpush1.xpose.msra.mxu0 %v956
        %990 = vmatprep.subr.mxu0 0.0
        %991 = vmatpush2.xpose.msra.mxu0 0.0
        %992 = vmatprep.subr.mxu0 0.0
        %993 = vmatpush2.xpose.msra.mxu0 0.0
        %994 = vmatprep.subr.mxu0 0.0
        %995 = vmatpush2.xpose.msra.mxu0 0.0
        %996 = vmatprep.subr.mxu0 0.0
        %997 = vmatpush2.xpose.msra.mxu0 0.0
        %998 = vmatprep.subr.mxu0 0.0
        %999 = vmatpush2.xpose.msra.mxu0 0.0
        %1000 = vmatprep.subr.mxu0 0.0
        %1001 = vmatpush2.xpose.msra.mxu0 0.0
        %1002 = vmatprep.subr.mxu0 0.0
        %1003 = vmatpush2.xpose.msra.mxu0 0.0
        %1004 = vmatprep.subr.mxu0 0.0
        %1005 = vmatpush2.xpose.msra.mxu0 0.0
        %1006 = vmatprep.subr.mxu0 0.0
        %1007 = vmatpush2.xpose.msra.mxu0 0.0
        %1008 = vmatprep.subr.mxu0 0.0
        %1009 = vmatpush2.xpose.msra.mxu0 0.0
        %1010 = vmatprep.subr.mxu0 0.0
        %1011 = vmatpush2.xpose.msra.mxu0 0.0
        %1012 = vmatprep.subr.mxu0 0.0
        %1013 = vmatpush2.xpose.msra.mxu0 0.0
        %1014 = vmatprep.subr.mxu0 0.0
        %1015 = vmatpush2.xpose.msra.mxu0 0.0
        %1016 = vmatprep.subr.mxu0 0.0
        %1017 = vmatpush2.xpose.msra.mxu0 0.0
        %1018 = vmatprep.subr.mxu0 0.0
        %1019 = vmatpush2.xpose.msra.mxu0 0.0
        %1020 = vmatprep.subr.mxu0 0.0
        %1021 = vmatpush2.xpose.msra.mxu0 0.0
        %1022 = vmatprep.mubr.f32.mxu0 0.0
        %1023 = vmatmul.mubr.f32.gmra.mxu0 %v954
        %v1024 = vpop.f32.mrf.mxu0
        %v1025 = vadd.f32 0.0, %v1024
        %v1026 = vpop.f32.mrf.mxu0
        %1027 = vdwg.mxu0
        %v1028 = vsel %vm684, %v1025, -inf
        %1029 = vmax.xlane.f32.xlu0 %v1028
        %v1030 = vpop.xlane.xlu0 %1029
        %v1031 = vsub.f32 %v1025, %v1030
        %v1032 = vmul.f32 %v1031, 1.442695
        %v1033 = vpow.pop %v1032
        %v1034 = vsel %vm684, %v1033, 0.0
        %1035 = vadd.xlane.f32.xlu0 %v1034
        %v1036 = vpop.xlane.xlu0 %1035
        %v1037 = vrcp.pop %v1036
        %v1038 = vmul.f32 %v1036, %v1037
        %v1039 = vsub.f32 2.0, %v1038
        %v1040 = vmul.f32 %v1037, %v1039
        %1041 = vrot.lane.b32.xlu0 %v603, 56
        %v1042 = vpop.permute.xlu0 %1041
        %v1045 = vsel %vm684, %v1033, 0
        %1047 = vmatprep.subr.mxu0 0.0
        %1048 = vmatpush1.msra.mxu0 0.0
        %1049 = vmatprep.subr.mxu0 0.0
        %1050 = vmatpush1.msra.mxu0 0.0
        %1051 = vmatprep.subr.mxu0 0.0
        %1052 = vmatpush1.msra.mxu0 0.0
        %1053 = vmatprep.subr.mxu0 0.0
        %1054 = vmatpush1.msra.mxu0 0.0
        %1055 = vmatprep.subr.mxu0 0.0
        %1056 = vmatpush1.msra.mxu0 0.0
        %1057 = vmatprep.subr.mxu0 0.0
        %1058 = vmatpush1.msra.mxu0 0.0
        %1059 = vmatprep.subr.mxu0 0.0
        %1060 = vmatpush1.msra.mxu0 0.0
        %1061 = vmatprep.subr.mxu0 0.0
        %1062 = vmatpush1.msra.mxu0 0.0
        %1063 = vmatprep.subr.mxu0 0.0
        %1064 = vmatpush1.msra.mxu0 0.0
        %1065 = vmatprep.subr.mxu0 0.0
        %1066 = vmatpush1.msra.mxu0 0.0
        %1067 = vmatprep.subr.mxu0 0.0
        %1068 = vmatpush1.msra.mxu0 0.0
        %1069 = vmatprep.subr.mxu0 0.0
        %1070 = vmatpush1.msra.mxu0 0.0
        %1071 = vmatprep.subr.mxu0 0.0
        %1072 = vmatpush1.msra.mxu0 0.0
        %1073 = vmatprep.subr.mxu0 0.0
        %1074 = vmatpush1.msra.mxu0 0.0
        %1075 = vmatprep.subr.mxu0 0.0
        %1076 = vmatpush1.msra.mxu0 0.0
        %1077 = vmatprep.subr.mxu0 0.0
        %1078 = vmatpush1.msra.mxu0 %v1042
        %1079 = vmatprep.subr.mxu0 0.0
        %1080 = vmatpush2.msra.mxu0 0.0
        %1081 = vmatprep.subr.mxu0 0.0
        %1082 = vmatpush2.msra.mxu0 0.0
        %1083 = vmatprep.subr.mxu0 0.0
        %1084 = vmatpush2.msra.mxu0 0.0
        %1085 = vmatprep.subr.mxu0 0.0
        %1086 = vmatpush2.msra.mxu0 0.0
        %1087 = vmatprep.subr.mxu0 0.0
        %1088 = vmatpush2.msra.mxu0 0.0
        %1089 = vmatprep.subr.mxu0 0.0
        %1090 = vmatpush2.msra.mxu0 0.0
        %1091 = vmatprep.subr.mxu0 0.0
        %1092 = vmatpush2.msra.mxu0 0.0
        %1093 = vmatprep.subr.mxu0 0.0
        %1094 = vmatpush2.msra.mxu0 0.0
        %1095 = vmatprep.subr.mxu0 0.0
        %1096 = vmatpush2.msra.mxu0 0.0
        %1097 = vmatprep.subr.mxu0 0.0
        %1098 = vmatpush2.msra.mxu0 0.0
        %1099 = vmatprep.subr.mxu0 0.0
        %1100 = vmatpush2.msra.mxu0 0.0
        %1101 = vmatprep.subr.mxu0 0.0
        %1102 = vmatpush2.msra.mxu0 0.0
        %1103 = vmatprep.subr.mxu0 0.0
        %1104 = vmatpush2.msra.mxu0 0.0
        %1105 = vmatprep.subr.mxu0 0.0
        %1106 = vmatpush2.msra.mxu0 0.0
        %1107 = vmatprep.subr.mxu0 0.0
        %1108 = vmatpush2.msra.mxu0 0.0
        %1109 = vmatprep.subr.mxu0 0.0
        %1110 = vmatpush2.msra.mxu0 0.0
        %1111 = vmatprep.mubr.f32.mxu0 0.0
        %1112 = vmatmul.mubr.f32.gmra.mxu0 %v1045
        %v1113 = vpop.f32.mrf.mxu0
        %v1114 = vadd.f32 0.0, %v1113
        %v1115 = vpop.f32.mrf.mxu0
        %1116 = vdwg.mxu0
        %v1117 = vmul.f32 %v1114, %v1040
        %1119 = vrot.lane.b32.xlu0 %v1117, 8
        %v1120 = vpop.permute.xlu0 %1119
        %vm1122 = vcmask 97344
        %1123 = vst.msk [vmem:[#allocation2] sm:$0xff] %vm1122, %v1120
        %1124 = vrot.lane.b32.xlu0 %v603, 116
        %v1125 = vpop.permute.xlu0 %1124
        %1126 = vrot.lane.b32.xlu0 %v603, 84
        %v1127 = vpop.permute.xlu0 %1126
        %v1128 = vsel %vm609, %v1125, 0
        %v1130 = vsel %vm609, %v1127, 0
        %1132 = vmatprep.subr.mxu0 0.0
        %1133 = vmatpush1.xpose.msra.mxu0 0.0
        %1134 = vmatprep.subr.mxu0 0.0
        %1135 = vmatpush1.xpose.msra.mxu0 0.0
        %1136 = vmatprep.subr.mxu0 0.0
        %1137 = vmatpush1.xpose.msra.mxu0 0.0
        %1138 = vmatprep.subr.mxu0 0.0
        %1139 = vmatpush1.xpose.msra.mxu0 0.0
        %1140 = vmatprep.subr.mxu0 0.0
        %1141 = vmatpush1.xpose.msra.mxu0 0.0
        %1142 = vmatprep.subr.mxu0 0.0
        %1143 = vmatpush1.xpose.msra.mxu0 0.0
        %1144 = vmatprep.subr.mxu0 0.0
        %1145 = vmatpush1.xpose.msra.mxu0 0.0
        %1146 = vmatprep.subr.mxu0 0.0
        %1147 = vmatpush1.xpose.msra.mxu0 0.0
        %1148 = vmatprep.subr.mxu0 0.0
        %1149 = vmatpush1.xpose.msra.mxu0 0.0
        %1150 = vmatprep.subr.mxu0 0.0
        %1151 = vmatpush1.xpose.msra.mxu0 0.0
        %1152 = vmatprep.subr.mxu0 0.0
        %1153 = vmatpush1.xpose.msra.mxu0 0.0
        %1154 = vmatprep.subr.mxu0 0.0
        %1155 = vmatpush1.xpose.msra.mxu0 0.0
        %1156 = vmatprep.subr.mxu0 0.0
        %1157 = vmatpush1.xpose.msra.mxu0 0.0
        %1158 = vmatprep.subr.mxu0 0.0
        %1159 = vmatpush1.xpose.msra.mxu0 0.0
        %1160 = vmatprep.subr.mxu0 0.0
        %1161 = vmatpush1.xpose.msra.mxu0 0.0
        %1162 = vmatprep.subr.mxu0 0.0
        %1163 = vmatpush1.xpose.msra.mxu0 %v1130
        %1164 = vmatprep.subr.mxu0 0.0
        %1165 = vmatpush2.xpose.msra.mxu0 0.0
        %1166 = vmatprep.subr.mxu0 0.0
        %1167 = vmatpush2.xpose.msra.mxu0 0.0
        %1168 = vmatprep.subr.mxu0 0.0
        %1169 = vmatpush2.xpose.msra.mxu0 0.0
        %1170 = vmatprep.subr.mxu0 0.0
        %1171 = vmatpush2.xpose.msra.mxu0 0.0
        %1172 = vmatprep.subr.mxu0 0.0
        %1173 = vmatpush2.xpose.msra.mxu0 0.0
        %1174 = vmatprep.subr.mxu0 0.0
        %1175 = vmatpush2.xpose.msra.mxu0 0.0
        %1176 = vmatprep.subr.mxu0 0.0
        %1177 = vmatpush2.xpose.msra.mxu0 0.0
        %1178 = vmatprep.subr.mxu0 0.0
        %1179 = vmatpush2.xpose.msra.mxu0 0.0
        %1180 = vmatprep.subr.mxu0 0.0
        %1181 = vmatpush2.xpose.msra.mxu0 0.0
        %1182 = vmatprep.subr.mxu0 0.0
        %1183 = vmatpush2.xpose.msra.mxu0 0.0
        %1184 = vmatprep.subr.mxu0 0.0
        %1185 = vmatpush2.xpose.msra.mxu0 0.0
        %1186 = vmatprep.subr.mxu0 0.0
        %1187 = vmatpush2.xpose.msra.mxu0 0.0
        %1188 = vmatprep.subr.mxu0 0.0
        %1189 = vmatpush2.xpose.msra.mxu0 0.0
        %1190 = vmatprep.subr.mxu0 0.0
        %1191 = vmatpush2.xpose.msra.mxu0 0.0
        %1192 = vmatprep.subr.mxu0 0.0
        %1193 = vmatpush2.xpose.msra.mxu0 0.0
        %1194 = vmatprep.subr.mxu0 0.0
        %1195 = vmatpush2.xpose.msra.mxu0 0.0
        %1196 = vmatprep.mubr.f32.mxu0 0.0
        %1197 = vmatmul.mubr.f32.gmra.mxu0 %v1128
        %v1198 = vpop.f32.mrf.mxu0
        %v1199 = vadd.f32 0.0, %v1198
        %v1200 = vpop.f32.mrf.mxu0
        %1201 = vdwg.mxu0
        %v1202 = vsel %vm684, %v1199, -inf
        %1203 = vmax.xlane.f32.xlu0 %v1202
        %v1204 = vpop.xlane.xlu0 %1203
        %v1205 = vsub.f32 %v1199, %v1204
        %v1206 = vmul.f32 %v1205, 1.442695
        %v1207 = vpow.pop %v1206
        %v1208 = vsel %vm684, %v1207, 0.0
        %1209 = vadd.xlane.f32.xlu0 %v1208
        %v1210 = vpop.xlane.xlu0 %1209
        %v1211 = vrcp.pop %v1210
        %v1212 = vmul.f32 %v1210, %v1211
        %v1213 = vsub.f32 2.0, %v1212
        %v1214 = vmul.f32 %v1211, %v1213
        %1215 = vrot.lane.b32.xlu0 %v603, 52
        %v1216 = vpop.permute.xlu0 %1215
        %v1219 = vsel %vm684, %v1207, 0
        %1221 = vmatprep.subr.mxu0 0.0
        %1222 = vmatpush1.msra.mxu0 0.0
        %1223 = vmatprep.subr.mxu0 0.0
        %1224 = vmatpush1.msra.mxu0 0.0
        %1225 = vmatprep.subr.mxu0 0.0
        %1226 = vmatpush1.msra.mxu0 0.0
        %1227 = vmatprep.subr.mxu0 0.0
        %1228 = vmatpush1.msra.mxu0 0.0
        %1229 = vmatprep.subr.mxu0 0.0
        %1230 = vmatpush1.msra.mxu0 0.0
        %1231 = vmatprep.subr.mxu0 0.0
        %1232 = vmatpush1.msra.mxu0 0.0
        %1233 = vmatprep.subr.mxu0 0.0
        %1234 = vmatpush1.msra.mxu0 0.0
        %1235 = vmatprep.subr.mxu0 0.0
        %1236 = vmatpush1.msra.mxu0 0.0
        %1237 = vmatprep.subr.mxu0 0.0
        %1238 = vmatpush1.msra.mxu0 0.0
        %1239 = vmatprep.subr.mxu0 0.0
        %1240 = vmatpush1.msra.mxu0 0.0
        %1241 = vmatprep.subr.mxu0 0.0
        %1242 = vmatpush1.msra.mxu0 0.0
        %1243 = vmatprep.subr.mxu0 0.0
        %1244 = vmatpush1.msra.mxu0 0.0
        %1245 = vmatprep.subr.mxu0 0.0
        %1246 = vmatpush1.msra.mxu0 0.0
        %1247 = vmatprep.subr.mxu0 0.0
        %1248 = vmatpush1.msra.mxu0 0.0
        %1249 = vmatprep.subr.mxu0 0.0
        %1250 = vmatpush1.msra.mxu0 0.0
        %1251 = vmatprep.subr.mxu0 0.0
        %1252 = vmatpush1.msra.mxu0 %v1216
        %1253 = vmatprep.subr.mxu0 0.0
        %1254 = vmatpush2.msra.mxu0 0.0
        %1255 = vmatprep.subr.mxu0 0.0
        %1256 = vmatpush2.msra.mxu0 0.0
        %1257 = vmatprep.subr.mxu0 0.0
        %1258 = vmatpush2.msra.mxu0 0.0
        %1259 = vmatprep.subr.mxu0 0.0
        %1260 = vmatpush2.msra.mxu0 0.0
        %1261 = vmatprep.subr.mxu0 0.0
        %1262 = vmatpush2.msra.mxu0 0.0
        %1263 = vmatprep.subr.mxu0 0.0
        %1264 = vmatpush2.msra.mxu0 0.0
        %1265 = vmatprep.subr.mxu0 0.0
        %1266 = vmatpush2.msra.mxu0 0.0
        %1267 = vmatprep.subr.mxu0 0.0
        %1268 = vmatpush2.msra.mxu0 0.0
        %1269 = vmatprep.subr.mxu0 0.0
        %1270 = vmatpush2.msra.mxu0 0.0
        %1271 = vmatprep.subr.mxu0 0.0
        %1272 = vmatpush2.msra.mxu0 0.0
        %1273 = vmatprep.subr.mxu0 0.0
        %1274 = vmatpush2.msra.mxu0 0.0
        %1275 = vmatprep.subr.mxu0 0.0
        %1276 = vmatpush2.msra.mxu0 0.0
        %1277 = vmatprep.subr.mxu0 0.0
        %1278 = vmatpush2.msra.mxu0 0.0
        %1279 = vmatprep.subr.mxu0 0.0
        %1280 = vmatpush2.msra.mxu0 0.0
        %1281 = vmatprep.subr.mxu0 0.0
        %1282 = vmatpush2.msra.mxu0 0.0
        %1283 = vmatprep.subr.mxu0 0.0
        %1284 = vmatpush2.msra.mxu0 0.0
        %1285 = vmatprep.mubr.f32.mxu0 0.0
        %1286 = vmatmul.mubr.f32.gmra.mxu0 %v1219
        %v1287 = vpop.f32.mrf.mxu0
        %v1288 = vadd.f32 0.0, %v1287
        %v1289 = vpop.f32.mrf.mxu0
        %1290 = vdwg.mxu0
        %v1291 = vmul.f32 %v1288, %v1214
        %1293 = vrot.lane.b32.xlu0 %v1291, 12
        %v1294 = vpop.permute.xlu0 %1293
        %vm1296 = vcmask 130144
        %1297 = vst.msk [vmem:[#allocation2] sm:$0xff] %vm1296, %v1294
        %1298 = vrot.lane.b32.xlu0 %v603, 112
        %v1299 = vpop.permute.xlu0 %1298
        %1300 = vrot.lane.b32.xlu0 %v603, 80
        %v1301 = vpop.permute.xlu0 %1300
        %v1302 = vsel %vm609, %v1299, 0
        %v1304 = vsel %vm609, %v1301, 0
        %1306 = vmatprep.subr.mxu0 0.0
        %1307 = vmatpush1.xpose.msra.mxu0 0.0
        %1308 = vmatprep.subr.mxu0 0.0
        %1309 = vmatpush1.xpose.msra.mxu0 0.0
        %1310 = vmatprep.subr.mxu0 0.0
        %1311 = vmatpush1.xpose.msra.mxu0 0.0
        %1312 = vmatprep.subr.mxu0 0.0
        %1313 = vmatpush1.xpose.msra.mxu0 0.0
        %1314 = vmatprep.subr.mxu0 0.0
        %1315 = vmatpush1.xpose.msra.mxu0 0.0
        %1316 = vmatprep.subr.mxu0 0.0
        %1317 = vmatpush1.xpose.msra.mxu0 0.0
        %1318 = vmatprep.subr.mxu0 0.0
        %1319 = vmatpush1.xpose.msra.mxu0 0.0
        %1320 = vmatprep.subr.mxu0 0.0
        %1321 = vmatpush1.xpose.msra.mxu0 0.0
        %1322 = vmatprep.subr.mxu0 0.0
        %1323 = vmatpush1.xpose.msra.mxu0 0.0
        %1324 = vmatprep.subr.mxu0 0.0
        %1325 = vmatpush1.xpose.msra.mxu0 0.0
        %1326 = vmatprep.subr.mxu0 0.0
        %1327 = vmatpush1.xpose.msra.mxu0 0.0
        %1328 = vmatprep.subr.mxu0 0.0
        %1329 = vmatpush1.xpose.msra.mxu0 0.0
        %1330 = vmatprep.subr.mxu0 0.0
        %1331 = vmatpush1.xpose.msra.mxu0 0.0
        %1332 = vmatprep.subr.mxu0 0.0
        %1333 = vmatpush1.xpose.msra.mxu0 0.0
        %1334 = vmatprep.subr.mxu0 0.0
        %1335 = vmatpush1.xpose.msra.mxu0 0.0
        %1336 = vmatprep.subr.mxu0 0.0
        %1337 = vmatpush1.xpose.msra.mxu0 %v1304
        %1338 = vmatprep.subr.mxu0 0.0
        %1339 = vmatpush2.xpose.msra.mxu0 0.0
        %1340 = vmatprep.subr.mxu0 0.0
        %1341 = vmatpush2.xpose.msra.mxu0 0.0
        %1342 = vmatprep.subr.mxu0 0.0
        %1343 = vmatpush2.xpose.msra.mxu0 0.0
        %1344 = vmatprep.subr.mxu0 0.0
        %1345 = vmatpush2.xpose.msra.mxu0 0.0
        %1346 = vmatprep.subr.mxu0 0.0
        %1347 = vmatpush2.xpose.msra.mxu0 0.0
        %1348 = vmatprep.subr.mxu0 0.0
        %1349 = vmatpush2.xpose.msra.mxu0 0.0
        %1350 = vmatprep.subr.mxu0 0.0
        %1351 = vmatpush2.xpose.msra.mxu0 0.0
        %1352 = vmatprep.subr.mxu0 0.0
        %1353 = vmatpush2.xpose.msra.mxu0 0.0
        %1354 = vmatprep.subr.mxu0 0.0
        %1355 = vmatpush2.xpose.msra.mxu0 0.0
        %1356 = vmatprep.subr.mxu0 0.0
        %1357 = vmatpush2.xpose.msra.mxu0 0.0
        %1358 = vmatprep.subr.mxu0 0.0
        %1359 = vmatpush2.xpose.msra.mxu0 0.0
        %1360 = vmatprep.subr.mxu0 0.0
        %1361 = vmatpush2.xpose.msra.mxu0 0.0
        %1362 = vmatprep.subr.mxu0 0.0
        %1363 = vmatpush2.xpose.msra.mxu0 0.0
        %1364 = vmatprep.subr.mxu0 0.0
        %1365 = vmatpush2.xpose.msra.mxu0 0.0
        %1366 = vmatprep.subr.mxu0 0.0
        %1367 = vmatpush2.xpose.msra.mxu0 0.0
        %1368 = vmatprep.subr.mxu0 0.0
        %1369 = vmatpush2.xpose.msra.mxu0 0.0
        %1370 = vmatprep.mubr.f32.mxu0 0.0
        %1371 = vmatmul.mubr.f32.gmra.mxu0 %v1302
        %v1372 = vpop.f32.mrf.mxu0
        %v1373 = vadd.f32 0.0, %v1372
        %v1374 = vpop.f32.mrf.mxu0
        %1375 = vdwg.mxu0
        %v1376 = vsel %vm684, %v1373, -inf
        %1377 = vmax.xlane.f32.xlu0 %v1376
        %v1378 = vpop.xlane.xlu0 %1377
        %v1379 = vsub.f32 %v1373, %v1378
        %v1380 = vmul.f32 %v1379, 1.442695
        %v1381 = vpow.pop %v1380
        %v1382 = vsel %vm684, %v1381, 0.0
        %1383 = vadd.xlane.f32.xlu0 %v1382
        %v1384 = vpop.xlane.xlu0 %1383
        %v1385 = vrcp.pop %v1384
        %v1386 = vmul.f32 %v1384, %v1385
        %v1387 = vsub.f32 2.0, %v1386
        %v1388 = vmul.f32 %v1385, %v1387
        %1389 = vrot.lane.b32.xlu0 %v603, 48
        %v1390 = vpop.permute.xlu0 %1389
        %v1393 = vsel %vm684, %v1381, 0
        %1395 = vmatprep.subr.mxu0 0.0
        %1396 = vmatpush1.msra.mxu0 0.0
        %1397 = vmatprep.subr.mxu0 0.0
        %1398 = vmatpush1.msra.mxu0 0.0
        %1399 = vmatprep.subr.mxu0 0.0
        %1400 = vmatpush1.msra.mxu0 0.0
        %1401 = vmatprep.subr.mxu0 0.0
        %1402 = vmatpush1.msra.mxu0 0.0
        %1403 = vmatprep.subr.mxu0 0.0
        %1404 = vmatpush1.msra.mxu0 0.0
        %1405 = vmatprep.subr.mxu0 0.0
        %1406 = vmatpush1.msra.mxu0 0.0
        %1407 = vmatprep.subr.mxu0 0.0
        %1408 = vmatpush1.msra.mxu0 0.0
        %1409 = vmatprep.subr.mxu0 0.0
        %1410 = vmatpush1.msra.mxu0 0.0
        %1411 = vmatprep.subr.mxu0 0.0
        %1412 = vmatpush1.msra.mxu0 0.0
        %1413 = vmatprep.subr.mxu0 0.0
        %1414 = vmatpush1.msra.mxu0 0.0
        %1415 = vmatprep.subr.mxu0 0.0
        %1416 = vmatpush1.msra.mxu0 0.0
        %1417 = vmatprep.subr.mxu0 0.0
        %1418 = vmatpush1.msra.mxu0 0.0
        %1419 = vmatprep.subr.mxu0 0.0
        %1420 = vmatpush1.msra.mxu0 0.0
        %1421 = vmatprep.subr.mxu0 0.0
        %1422 = vmatpush1.msra.mxu0 0.0
        %1423 = vmatprep.subr.mxu0 0.0
        %1424 = vmatpush1.msra.mxu0 0.0
        %1425 = vmatprep.subr.mxu0 0.0
        %1426 = vmatpush1.msra.mxu0 %v1390
        %1427 = vmatprep.subr.mxu0 0.0
        %1428 = vmatpush2.msra.mxu0 0.0
        %1429 = vmatprep.subr.mxu0 0.0
        %1430 = vmatpush2.msra.mxu0 0.0
        %1431 = vmatprep.subr.mxu0 0.0
        %1432 = vmatpush2.msra.mxu0 0.0
        %1433 = vmatprep.subr.mxu0 0.0
        %1434 = vmatpush2.msra.mxu0 0.0
        %1435 = vmatprep.subr.mxu0 0.0
        %1436 = vmatpush2.msra.mxu0 0.0
        %1437 = vmatprep.subr.mxu0 0.0
        %1438 = vmatpush2.msra.mxu0 0.0
        %1439 = vmatprep.subr.mxu0 0.0
        %1440 = vmatpush2.msra.mxu0 0.0
        %1441 = vmatprep.subr.mxu0 0.0
        %1442 = vmatpush2.msra.mxu0 0.0
        %1443 = vmatprep.subr.mxu0 0.0
        %1444 = vmatpush2.msra.mxu0 0.0
        %1445 = vmatprep.subr.mxu0 0.0
        %1446 = vmatpush2.msra.mxu0 0.0
        %1447 = vmatprep.subr.mxu0 0.0
        %1448 = vmatpush2.msra.mxu0 0.0
        %1449 = vmatprep.subr.mxu0 0.0
        %1450 = vmatpush2.msra.mxu0 0.0
        %1451 = vmatprep.subr.mxu0 0.0
        %1452 = vmatpush2.msra.mxu0 0.0
        %1453 = vmatprep.subr.mxu0 0.0
        %1454 = vmatpush2.msra.mxu0 0.0
        %1455 = vmatprep.subr.mxu0 0.0
        %1456 = vmatpush2.msra.mxu0 0.0
        %1457 = vmatprep.subr.mxu0 0.0
        %1458 = vmatpush2.msra.mxu0 0.0
        %1459 = vmatprep.mubr.f32.mxu0 0.0
        %1460 = vmatmul.mubr.f32.gmra.mxu0 %v1393
        %v1461 = vpop.f32.mrf.mxu0
        %v1462 = vadd.f32 0.0, %v1461
        %v1463 = vpop.f32.mrf.mxu0
        %1464 = vdwg.mxu0
        %v1465 = vmul.f32 %v1462, %v1388
        %1467 = vrot.lane.b32.xlu0 %v1465, 16
        %v1468 = vpop.permute.xlu0 %1467
        %vm1470 = vcmask 162944
        %1471 = vst.msk [vmem:[#allocation2] sm:$0xff] %vm1470, %v1468
        %1472 = vrot.lane.b32.xlu0 %v603, 108
        %v1473 = vpop.permute.xlu0 %1472
        %1474 = vrot.lane.b32.xlu0 %v603, 76
        %v1475 = vpop.permute.xlu0 %1474
        %v1476 = vsel %vm609, %v1473, 0
        %v1478 = vsel %vm609, %v1475, 0
        %1480 = vmatprep.subr.mxu0 0.0
        %1481 = vmatpush1.xpose.msra.mxu0 0.0
        %1482 = vmatprep.subr.mxu0 0.0
        %1483 = vmatpush1.xpose.msra.mxu0 0.0
        %1484 = vmatprep.subr.mxu0 0.0
        %1485 = vmatpush1.xpose.msra.mxu0 0.0
        %1486 = vmatprep.subr.mxu0 0.0
        %1487 = vmatpush1.xpose.msra.mxu0 0.0
        %1488 = vmatprep.subr.mxu0 0.0
        %1489 = vmatpush1.xpose.msra.mxu0 0.0
        %1490 = vmatprep.subr.mxu0 0.0
        %1491 = vmatpush1.xpose.msra.mxu0 0.0
        %1492 = vmatprep.subr.mxu0 0.0
        %1493 = vmatpush1.xpose.msra.mxu0 0.0
        %1494 = vmatprep.subr.mxu0 0.0
        %1495 = vmatpush1.xpose.msra.mxu0 0.0
        %1496 = vmatprep.subr.mxu0 0.0
        %1497 = vmatpush1.xpose.msra.mxu0 0.0
        %1498 = vmatprep.subr.mxu0 0.0
        %1499 = vmatpush1.xpose.msra.mxu0 0.0
        %1500 = vmatprep.subr.mxu0 0.0
        %1501 = vmatpush1.xpose.msra.mxu0 0.0
        %1502 = vmatprep.subr.mxu0 0.0
        %1503 = vmatpush1.xpose.msra.mxu0 0.0
        %1504 = vmatprep.subr.mxu0 0.0
        %1505 = vmatpush1.xpose.msra.mxu0 0.0
        %1506 = vmatprep.subr.mxu0 0.0
        %1507 = vmatpush1.xpose.msra.mxu0 0.0
        %1508 = vmatprep.subr.mxu0 0.0
        %1509 = vmatpush1.xpose.msra.mxu0 0.0
        %1510 = vmatprep.subr.mxu0 0.0
        %1511 = vmatpush1.xpose.msra.mxu0 %v1478
        %1512 = vmatprep.subr.mxu0 0.0
        %1513 = vmatpush2.xpose.msra.mxu0 0.0
        %1514 = vmatprep.subr.mxu0 0.0
        %1515 = vmatpush2.xpose.msra.mxu0 0.0
        %1516 = vmatprep.subr.mxu0 0.0
        %1517 = vmatpush2.xpose.msra.mxu0 0.0
        %1518 = vmatprep.subr.mxu0 0.0
        %1519 = vmatpush2.xpose.msra.mxu0 0.0
        %1520 = vmatprep.subr.mxu0 0.0
        %1521 = vmatpush2.xpose.msra.mxu0 0.0
        %1522 = vmatprep.subr.mxu0 0.0
        %1523 = vmatpush2.xpose.msra.mxu0 0.0
        %1524 = vmatprep.subr.mxu0 0.0
        %1525 = vmatpush2.xpose.msra.mxu0 0.0
        %1526 = vmatprep.subr.mxu0 0.0
        %1527 = vmatpush2.xpose.msra.mxu0 0.0
        %1528 = vmatprep.subr.mxu0 0.0
        %1529 = vmatpush2.xpose.msra.mxu0 0.0
        %1530 = vmatprep.subr.mxu0 0.0
        %1531 = vmatpush2.xpose.msra.mxu0 0.0
        %1532 = vmatprep.subr.mxu0 0.0
        %1533 = vmatpush2.xpose.msra.mxu0 0.0
        %1534 = vmatprep.subr.mxu0 0.0
        %1535 = vmatpush2.xpose.msra.mxu0 0.0
        %1536 = vmatprep.subr.mxu0 0.0
        %1537 = vmatpush2.xpose.msra.mxu0 0.0
        %1538 = vmatprep.subr.mxu0 0.0
        %1539 = vmatpush2.xpose.msra.mxu0 0.0
        %1540 = vmatprep.subr.mxu0 0.0
        %1541 = vmatpush2.xpose.msra.mxu0 0.0
        %1542 = vmatprep.subr.mxu0 0.0
        %1543 = vmatpush2.xpose.msra.mxu0 0.0
        %1544 = vmatprep.mubr.f32.mxu0 0.0
        %1545 = vmatmul.mubr.f32.gmra.mxu0 %v1476
        %v1546 = vpop.f32.mrf.mxu0
        %v1547 = vadd.f32 0.0, %v1546
        %v1548 = vpop.f32.mrf.mxu0
        %1549 = vdwg.mxu0
        %v1550 = vsel %vm684, %v1547, -inf
        %1551 = vmax.xlane.f32.xlu0 %v1550
        %v1552 = vpop.xlane.xlu0 %1551
        %v1553 = vsub.f32 %v1547, %v1552
        %v1554 = vmul.f32 %v1553, 1.442695
        %v1555 = vpow.pop %v1554
        %v1556 = vsel %vm684, %v1555, 0.0
        %1557 = vadd.xlane.f32.xlu0 %v1556
        %v1558 = vpop.xlane.xlu0 %1557
        %v1559 = vrcp.pop %v1558
        %v1560 = vmul.f32 %v1558, %v1559
        %v1561 = vsub.f32 2.0, %v1560
        %v1562 = vmul.f32 %v1559, %v1561
        %1563 = vrot.lane.b32.xlu0 %v603, 44
        %v1564 = vpop.permute.xlu0 %1563
        %v1567 = vsel %vm684, %v1555, 0
        %1569 = vmatprep.subr.mxu0 0.0
        %1570 = vmatpush1.msra.mxu0 0.0
        %1571 = vmatprep.subr.mxu0 0.0
        %1572 = vmatpush1.msra.mxu0 0.0
        %1573 = vmatprep.subr.mxu0 0.0
        %1574 = vmatpush1.msra.mxu0 0.0
        %1575 = vmatprep.subr.mxu0 0.0
        %1576 = vmatpush1.msra.mxu0 0.0
        %1577 = vmatprep.subr.mxu0 0.0
        %1578 = vmatpush1.msra.mxu0 0.0
        %1579 = vmatprep.subr.mxu0 0.0
        %1580 = vmatpush1.msra.mxu0 0.0
        %1581 = vmatprep.subr.mxu0 0.0
        %1582 = vmatpush1.msra.mxu0 0.0
        %1583 = vmatprep.subr.mxu0 0.0
        %1584 = vmatpush1.msra.mxu0 0.0
        %1585 = vmatprep.subr.mxu0 0.0
        %1586 = vmatpush1.msra.mxu0 0.0
        %1587 = vmatprep.subr.mxu0 0.0
        %1588 = vmatpush1.msra.mxu0 0.0
        %1589 = vmatprep.subr.mxu0 0.0
        %1590 = vmatpush1.msra.mxu0 0.0
        %1591 = vmatprep.subr.mxu0 0.0
        %1592 = vmatpush1.msra.mxu0 0.0
        %1593 = vmatprep.subr.mxu0 0.0
        %1594 = vmatpush1.msra.mxu0 0.0
        %1595 = vmatprep.subr.mxu0 0.0
        %1596 = vmatpush1.msra.mxu0 0.0
        %1597 = vmatprep.subr.mxu0 0.0
        %1598 = vmatpush1.msra.mxu0 0.0
        %1599 = vmatprep.subr.mxu0 0.0
        %1600 = vmatpush1.msra.mxu0 %v1564
        %1601 = vmatprep.subr.mxu0 0.0
        %1602 = vmatpush2.msra.mxu0 0.0
        %1603 = vmatprep.subr.mxu0 0.0
        %1604 = vmatpush2.msra.mxu0 0.0
        %1605 = vmatprep.subr.mxu0 0.0
        %1606 = vmatpush2.msra.mxu0 0.0
        %1607 = vmatprep.subr.mxu0 0.0
        %1608 = vmatpush2.msra.mxu0 0.0
        %1609 = vmatprep.subr.mxu0 0.0
        %1610 = vmatpush2.msra.mxu0 0.0
        %1611 = vmatprep.subr.mxu0 0.0
        %1612 = vmatpush2.msra.mxu0 0.0
        %1613 = vmatprep.subr.mxu0 0.0
        %1614 = vmatpush2.msra.mxu0 0.0
        %1615 = vmatprep.subr.mxu0 0.0
        %1616 = vmatpush2.msra.mxu0 0.0
        %1617 = vmatprep.subr.mxu0 0.0
        %1618 = vmatpush2.msra.mxu0 0.0
        %1619 = vmatprep.subr.mxu0 0.0
        %1620 = vmatpush2.msra.mxu0 0.0
        %1621 = vmatprep.subr.mxu0 0.0
        %1622 = vmatpush2.msra.mxu0 0.0
        %1623 = vmatprep.subr.mxu0 0.0
        %1624 = vmatpush2.msra.mxu0 0.0
        %1625 = vmatprep.subr.mxu0 0.0
        %1626 = vmatpush2.msra.mxu0 0.0
        %1627 = vmatprep.subr.mxu0 0.0
        %1628 = vmatpush2.msra.mxu0 0.0
        %1629 = vmatprep.subr.mxu0 0.0
        %1630 = vmatpush2.msra.mxu0 0.0
        %1631 = vmatprep.subr.mxu0 0.0
        %1632 = vmatpush2.msra.mxu0 0.0
        %1633 = vmatprep.mubr.f32.mxu0 0.0
        %1634 = vmatmul.mubr.f32.gmra.mxu0 %v1567
        %v1635 = vpop.f32.mrf.mxu0
        %v1636 = vadd.f32 0.0, %v1635
        %v1637 = vpop.f32.mrf.mxu0
        %1638 = vdwg.mxu0
        %v1639 = vmul.f32 %v1636, %v1562
        %1641 = vrot.lane.b32.xlu0 %v1639, 20
        %v1642 = vpop.permute.xlu0 %1641
        %vm1644 = vcmask 195744
        %1645 = vst.msk [vmem:[#allocation2] sm:$0xff] %vm1644, %v1642
        %1646 = vrot.lane.b32.xlu0 %v603, 104
        %v1647 = vpop.permute.xlu0 %1646
        %1648 = vrot.lane.b32.xlu0 %v603, 72
        %v1649 = vpop.permute.xlu0 %1648
        %v1650 = vsel %vm609, %v1647, 0
        %v1652 = vsel %vm609, %v1649, 0
        %1654 = vmatprep.subr.mxu0 0.0
        %1655 = vmatpush1.xpose.msra.mxu0 0.0
        %1656 = vmatprep.subr.mxu0 0.0
        %1657 = vmatpush1.xpose.msra.mxu0 0.0
        %1658 = vmatprep.subr.mxu0 0.0
        %1659 = vmatpush1.xpose.msra.mxu0 0.0
        %1660 = vmatprep.subr.mxu0 0.0
        %1661 = vmatpush1.xpose.msra.mxu0 0.0
        %1662 = vmatprep.subr.mxu0 0.0
        %1663 = vmatpush1.xpose.msra.mxu0 0.0
        %1664 = vmatprep.subr.mxu0 0.0
        %1665 = vmatpush1.xpose.msra.mxu0 0.0
        %1666 = vmatprep.subr.mxu0 0.0
        %1667 = vmatpush1.xpose.msra.mxu0 0.0
        %1668 = vmatprep.subr.mxu0 0.0
        %1669 = vmatpush1.xpose.msra.mxu0 0.0
        %1670 = vmatprep.subr.mxu0 0.0
        %1671 = vmatpush1.xpose.msra.mxu0 0.0
        %1672 = vmatprep.subr.mxu0 0.0
        %1673 = vmatpush1.xpose.msra.mxu0 0.0
        %1674 = vmatprep.subr.mxu0 0.0
        %1675 = vmatpush1.xpose.msra.mxu0 0.0
        %1676 = vmatprep.subr.mxu0 0.0
        %1677 = vmatpush1.xpose.msra.mxu0 0.0
        %1678 = vmatprep.subr.mxu0 0.0
        %1679 = vmatpush1.xpose.msra.mxu0 0.0
        %1680 = vmatprep.subr.mxu0 0.0
        %1681 = vmatpush1.xpose.msra.mxu0 0.0
        %1682 = vmatprep.subr.mxu0 0.0
        %1683 = vmatpush1.xpose.msra.mxu0 0.0
        %1684 = vmatprep.subr.mxu0 0.0
        %1685 = vmatpush1.xpose.msra.mxu0 %v1652
        %1686 = vmatprep.subr.mxu0 0.0
        %1687 = vmatpush2.xpose.msra.mxu0 0.0
        %1688 = vmatprep.subr.mxu0 0.0
        %1689 = vmatpush2.xpose.msra.mxu0 0.0
        %1690 = vmatprep.subr.mxu0 0.0
        %1691 = vmatpush2.xpose.msra.mxu0 0.0
        %1692 = vmatprep.subr.mxu0 0.0
        %1693 = vmatpush2.xpose.msra.mxu0 0.0
        %1694 = vmatprep.subr.mxu0 0.0
        %1695 = vmatpush2.xpose.msra.mxu0 0.0
        %1696 = vmatprep.subr.mxu0 0.0
        %1697 = vmatpush2.xpose.msra.mxu0 0.0
        %1698 = vmatprep.subr.mxu0 0.0
        %1699 = vmatpush2.xpose.msra.mxu0 0.0
        %1700 = vmatprep.subr.mxu0 0.0
        %1701 = vmatpush2.xpose.msra.mxu0 0.0
        %1702 = vmatprep.subr.mxu0 0.0
        %1703 = vmatpush2.xpose.msra.mxu0 0.0
        %1704 = vmatprep.subr.mxu0 0.0
        %1705 = vmatpush2.xpose.msra.mxu0 0.0
        %1706 = vmatprep.subr.mxu0 0.0
        %1707 = vmatpush2.xpose.msra.mxu0 0.0
        %1708 = vmatprep.subr.mxu0 0.0
        %1709 = vmatpush2.xpose.msra.mxu0 0.0
        %1710 = vmatprep.subr.mxu0 0.0
        %1711 = vmatpush2.xpose.msra.mxu0 0.0
        %1712 = vmatprep.subr.mxu0 0.0
        %1713 = vmatpush2.xpose.msra.mxu0 0.0
        %1714 = vmatprep.subr.mxu0 0.0
        %1715 = vmatpush2.xpose.msra.mxu0 0.0
        %1716 = vmatprep.subr.mxu0 0.0
        %1717 = vmatpush2.xpose.msra.mxu0 0.0
        %1718 = vmatprep.mubr.f32.mxu0 0.0
        %1719 = vmatmul.mubr.f32.gmra.mxu0 %v1650
        %v1720 = vpop.f32.mrf.mxu0
        %v1721 = vadd.f32 0.0, %v1720
        %v1722 = vpop.f32.mrf.mxu0
        %1723 = vdwg.mxu0
        %v1724 = vsel %vm684, %v1721, -inf
        %1725 = vmax.xlane.f32.xlu0 %v1724
        %v1726 = vpop.xlane.xlu0 %1725
        %v1727 = vsub.f32 %v1721, %v1726
        %v1728 = vmul.f32 %v1727, 1.442695
        %v1729 = vpow.pop %v1728
        %v1730 = vsel %vm684, %v1729, 0.0
        %1731 = vadd.xlane.f32.xlu0 %v1730
        %v1732 = vpop.xlane.xlu0 %1731
        %v1733 = vrcp.pop %v1732
        %v1734 = vmul.f32 %v1732, %v1733
        %v1735 = vsub.f32 2.0, %v1734
        %v1736 = vmul.f32 %v1733, %v1735
        %1737 = vrot.lane.b32.xlu0 %v603, 40
        %v1738 = vpop.permute.xlu0 %1737
        %v1741 = vsel %vm684, %v1729, 0
        %1743 = vmatprep.subr.mxu0 0.0
        %1744 = vmatpush1.msra.mxu0 0.0
        %1745 = vmatprep.subr.mxu0 0.0
        %1746 = vmatpush1.msra.mxu0 0.0
        %1747 = vmatprep.subr.mxu0 0.0
        %1748 = vmatpush1.msra.mxu0 0.0
        %1749 = vmatprep.subr.mxu0 0.0
        %1750 = vmatpush1.msra.mxu0 0.0
        %1751 = vmatprep.subr.mxu0 0.0
        %1752 = vmatpush1.msra.mxu0 0.0
        %1753 = vmatprep.subr.mxu0 0.0
        %1754 = vmatpush1.msra.mxu0 0.0
        %1755 = vmatprep.subr.mxu0 0.0
        %1756 = vmatpush1.msra.mxu0 0.0
        %1757 = vmatprep.subr.mxu0 0.0
        %1758 = vmatpush1.msra.mxu0 0.0
        %1759 = vmatprep.subr.mxu0 0.0
        %1760 = vmatpush1.msra.mxu0 0.0
        %1761 = vmatprep.subr.mxu0 0.0
        %1762 = vmatpush1.msra.mxu0 0.0
        %1763 = vmatprep.subr.mxu0 0.0
        %1764 = vmatpush1.msra.mxu0 0.0
        %1765 = vmatprep.subr.mxu0 0.0
        %1766 = vmatpush1.msra.mxu0 0.0
        %1767 = vmatprep.subr.mxu0 0.0
        %1768 = vmatpush1.msra.mxu0 0.0
        %1769 = vmatprep.subr.mxu0 0.0
        %1770 = vmatpush1.msra.mxu0 0.0
        %1771 = vmatprep.subr.mxu0 0.0
        %1772 = vmatpush1.msra.mxu0 0.0
        %1773 = vmatprep.subr.mxu0 0.0
        %1774 = vmatpush1.msra.mxu0 %v1738
        %1775 = vmatprep.subr.mxu0 0.0
        %1776 = vmatpush2.msra.mxu0 0.0
        %1777 = vmatprep.subr.mxu0 0.0
        %1778 = vmatpush2.msra.mxu0 0.0
        %1779 = vmatprep.subr.mxu0 0.0
        %1780 = vmatpush2.msra.mxu0 0.0
        %1781 = vmatprep.subr.mxu0 0.0
        %1782 = vmatpush2.msra.mxu0 0.0
        %1783 = vmatprep.subr.mxu0 0.0
        %1784 = vmatpush2.msra.mxu0 0.0
        %1785 = vmatprep.subr.mxu0 0.0
        %1786 = vmatpush2.msra.mxu0 0.0
        %1787 = vmatprep.subr.mxu0 0.0
        %1788 = vmatpush2.msra.mxu0 0.0
        %1789 = vmatprep.subr.mxu0 0.0
        %1790 = vmatpush2.msra.mxu0 0.0
        %1791 = vmatprep.subr.mxu0 0.0
        %1792 = vmatpush2.msra.mxu0 0.0
        %1793 = vmatprep.subr.mxu0 0.0
        %1794 = vmatpush2.msra.mxu0 0.0
        %1795 = vmatprep.subr.mxu0 0.0
        %1796 = vmatpush2.msra.mxu0 0.0
        %1797 = vmatprep.subr.mxu0 0.0
        %1798 = vmatpush2.msra.mxu0 0.0
        %1799 = vmatprep.subr.mxu0 0.0
        %1800 = vmatpush2.msra.mxu0 0.0
        %1801 = vmatprep.subr.mxu0 0.0
        %1802 = vmatpush2.msra.mxu0 0.0
        %1803 = vmatprep.subr.mxu0 0.0
        %1804 = vmatpush2.msra.mxu0 0.0
        %1805 = vmatprep.subr.mxu0 0.0
        %1806 = vmatpush2.msra.mxu0 0.0
        %1807 = vmatprep.mubr.f32.mxu0 0.0
        %1808 = vmatmul.mubr.f32.gmra.mxu0 %v1741
        %v1809 = vpop.f32.mrf.mxu0
        %v1810 = vadd.f32 0.0, %v1809
        %v1811 = vpop.f32.mrf.mxu0
        %1812 = vdwg.mxu0
        %v1813 = vmul.f32 %v1810, %v1736
        %1815 = vrot.lane.b32.xlu0 %v1813, 24
        %v1816 = vpop.permute.xlu0 %1815
        %vm1818 = vcmask 228544
        %1819 = vst.msk [vmem:[#allocation2] sm:$0xff] %vm1818, %v1816
        %1820 = vrot.lane.b32.xlu0 %v603, 100
        %v1821 = vpop.permute.xlu0 %1820
        %1822 = vrot.lane.b32.xlu0 %v603, 68
        %v1823 = vpop.permute.xlu0 %1822
        %v1824 = vsel %vm609, %v1821, 0
        %v1826 = vsel %vm609, %v1823, 0
        %1828 = vmatprep.subr.mxu0 0.0
        %1829 = vmatpush1.xpose.msra.mxu0 0.0
        %1830 = vmatprep.subr.mxu0 0.0
        %1831 = vmatpush1.xpose.msra.mxu0 0.0
        %1832 = vmatprep.subr.mxu0 0.0
        %1833 = vmatpush1.xpose.msra.mxu0 0.0
        %1834 = vmatprep.subr.mxu0 0.0
        %1835 = vmatpush1.xpose.msra.mxu0 0.0
        %1836 = vmatprep.subr.mxu0 0.0
        %1837 = vmatpush1.xpose.msra.mxu0 0.0
        %1838 = vmatprep.subr.mxu0 0.0
        %1839 = vmatpush1.xpose.msra.mxu0 0.0
        %1840 = vmatprep.subr.mxu0 0.0
        %1841 = vmatpush1.xpose.msra.mxu0 0.0
        %1842 = vmatprep.subr.mxu0 0.0
        %1843 = vmatpush1.xpose.msra.mxu0 0.0
        %1844 = vmatprep.subr.mxu0 0.0
        %1845 = vmatpush1.xpose.msra.mxu0 0.0
        %1846 = vmatprep.subr.mxu0 0.0
        %1847 = vmatpush1.xpose.msra.mxu0 0.0
        %1848 = vmatprep.subr.mxu0 0.0
        %1849 = vmatpush1.xpose.msra.mxu0 0.0
        %1850 = vmatprep.subr.mxu0 0.0
        %1851 = vmatpush1.xpose.msra.mxu0 0.0
        %1852 = vmatprep.subr.mxu0 0.0
        %1853 = vmatpush1.xpose.msra.mxu0 0.0
        %1854 = vmatprep.subr.mxu0 0.0
        %1855 = vmatpush1.xpose.msra.mxu0 0.0
        %1856 = vmatprep.subr.mxu0 0.0
        %1857 = vmatpush1.xpose.msra.mxu0 0.0
        %1858 = vmatprep.subr.mxu0 0.0
        %1859 = vmatpush1.xpose.msra.mxu0 %v1826
        %1860 = vmatprep.subr.mxu0 0.0
        %1861 = vmatpush2.xpose.msra.mxu0 0.0
        %1862 = vmatprep.subr.mxu0 0.0
        %1863 = vmatpush2.xpose.msra.mxu0 0.0
        %1864 = vmatprep.subr.mxu0 0.0
        %1865 = vmatpush2.xpose.msra.mxu0 0.0
        %1866 = vmatprep.subr.mxu0 0.0
        %1867 = vmatpush2.xpose.msra.mxu0 0.0
        %1868 = vmatprep.subr.mxu0 0.0
        %1869 = vmatpush2.xpose.msra.mxu0 0.0
        %1870 = vmatprep.subr.mxu0 0.0
        %1871 = vmatpush2.xpose.msra.mxu0 0.0
        %1872 = vmatprep.subr.mxu0 0.0
        %1873 = vmatpush2.xpose.msra.mxu0 0.0
        %1874 = vmatprep.subr.mxu0 0.0
        %1875 = vmatpush2.xpose.msra.mxu0 0.0
        %1876 = vmatprep.subr.mxu0 0.0
        %1877 = vmatpush2.xpose.msra.mxu0 0.0
        %1878 = vmatprep.subr.mxu0 0.0
        %1879 = vmatpush2.xpose.msra.mxu0 0.0
        %1880 = vmatprep.subr.mxu0 0.0
        %1881 = vmatpush2.xpose.msra.mxu0 0.0
        %1882 = vmatprep.subr.mxu0 0.0
        %1883 = vmatpush2.xpose.msra.mxu0 0.0
        %1884 = vmatprep.subr.mxu0 0.0
        %1885 = vmatpush2.xpose.msra.mxu0 0.0
        %1886 = vmatprep.subr.mxu0 0.0
        %1887 = vmatpush2.xpose.msra.mxu0 0.0
        %1888 = vmatprep.subr.mxu0 0.0
        %1889 = vmatpush2.xpose.msra.mxu0 0.0
        %1890 = vmatprep.subr.mxu0 0.0
        %1891 = vmatpush2.xpose.msra.mxu0 0.0
        %1892 = vmatprep.mubr.f32.mxu0 0.0
        %1893 = vmatmul.mubr.f32.gmra.mxu0 %v1824
        %v1894 = vpop.f32.mrf.mxu0
        %v1895 = vadd.f32 0.0, %v1894
        %v1896 = vpop.f32.mrf.mxu0
        %1897 = vdwg.mxu0
        %v1898 = vsel %vm684, %v1895, -inf
        %1899 = vmax.xlane.f32.xlu0 %v1898
        %v1900 = vpop.xlane.xlu0 %1899
        %v1901 = vsub.f32 %v1895, %v1900
        %v1902 = vmul.f32 %v1901, 1.442695
        %v1903 = vpow.pop %v1902
        %v1904 = vsel %vm684, %v1903, 0.0
        %1905 = vadd.xlane.f32.xlu0 %v1904
        %v1906 = vpop.xlane.xlu0 %1905
        %v1907 = vrcp.pop %v1906
        %v1908 = vmul.f32 %v1906, %v1907
        %v1909 = vsub.f32 2.0, %v1908
        %v1910 = vmul.f32 %v1907, %v1909
        %1911 = vrot.lane.b32.xlu0 %v603, 36
        %v1912 = vpop.permute.xlu0 %1911
        %v1915 = vsel %vm684, %v1903, 0
        %1917 = vmatprep.subr.mxu0 0.0
        %1918 = vmatpush1.msra.mxu0 0.0
        %1919 = vmatprep.subr.mxu0 0.0
        %1920 = vmatpush1.msra.mxu0 0.0
        %1921 = vmatprep.subr.mxu0 0.0
        %1922 = vmatpush1.msra.mxu0 0.0
        %1923 = vmatprep.subr.mxu0 0.0
        %1924 = vmatpush1.msra.mxu0 0.0
        %1925 = vmatprep.subr.mxu0 0.0
        %1926 = vmatpush1.msra.mxu0 0.0
        %1927 = vmatprep.subr.mxu0 0.0
        %1928 = vmatpush1.msra.mxu0 0.0
        %1929 = vmatprep.subr.mxu0 0.0
        %1930 = vmatpush1.msra.mxu0 0.0
        %1931 = vmatprep.subr.mxu0 0.0
        %1932 = vmatpush1.msra.mxu0 0.0
        %1933 = vmatprep.subr.mxu0 0.0
        %1934 = vmatpush1.msra.mxu0 0.0
        %1935 = vmatprep.subr.mxu0 0.0
        %1936 = vmatpush1.msra.mxu0 0.0
        %1937 = vmatprep.subr.mxu0 0.0
        %1938 = vmatpush1.msra.mxu0 0.0
        %1939 = vmatprep.subr.mxu0 0.0
        %1940 = vmatpush1.msra.mxu0 0.0
        %1941 = vmatprep.subr.mxu0 0.0
        %1942 = vmatpush1.msra.mxu0 0.0
        %1943 = vmatprep.subr.mxu0 0.0
        %1944 = vmatpush1.msra.mxu0 0.0
        %1945 = vmatprep.subr.mxu0 0.0
        %1946 = vmatpush1.msra.mxu0 0.0
        %1947 = vmatprep.subr.mxu0 0.0
        %1948 = vmatpush1.msra.mxu0 %v1912
        %1949 = vmatprep.subr.mxu0 0.0
        %1950 = vmatpush2.msra.mxu0 0.0
        %1951 = vmatprep.subr.mxu0 0.0
        %1952 = vmatpush2.msra.mxu0 0.0
        %1953 = vmatprep.subr.mxu0 0.0
        %1954 = vmatpush2.msra.mxu0 0.0
        %1955 = vmatprep.subr.mxu0 0.0
        %1956 = vmatpush2.msra.mxu0 0.0
        %1957 = vmatprep.subr.mxu0 0.0
        %1958 = vmatpush2.msra.mxu0 0.0
        %1959 = vmatprep.subr.mxu0 0.0
        %1960 = vmatpush2.msra.mxu0 0.0
        %1961 = vmatprep.subr.mxu0 0.0
        %1962 = vmatpush2.msra.mxu0 0.0
        %1963 = vmatprep.subr.mxu0 0.0
        %1964 = vmatpush2.msra.mxu0 0.0
        %1965 = vmatprep.subr.mxu0 0.0
        %1966 = vmatpush2.msra.mxu0 0.0
        %1967 = vmatprep.subr.mxu0 0.0
        %1968 = vmatpush2.msra.mxu0 0.0
        %1969 = vmatprep.subr.mxu0 0.0
        %1970 = vmatpush2.msra.mxu0 0.0
        %1971 = vmatprep.subr.mxu0 0.0
        %1972 = vmatpush2.msra.mxu0 0.0
        %1973 = vmatprep.subr.mxu0 0.0
        %1974 = vmatpush2.msra.mxu0 0.0
        %1975 = vmatprep.subr.mxu0 0.0
        %1976 = vmatpush2.msra.mxu0 0.0
        %1977 = vmatprep.subr.mxu0 0.0
        %1978 = vmatpush2.msra.mxu0 0.0
        %1979 = vmatprep.subr.mxu0 0.0
        %1980 = vmatpush2.msra.mxu0 0.0
        %1981 = vmatprep.mubr.f32.mxu0 0.0
        %1982 = vmatmul.mubr.f32.gmra.mxu0 %v1915
        %v1983 = vpop.f32.mrf.mxu0
        %v1984 = vadd.f32 0.0, %v1983
        %v1985 = vpop.f32.mrf.mxu0
        %1986 = vdwg.mxu0
        %v1987 = vmul.f32 %v1984, %v1910
        %1989 = vrot.lane.b32.xlu0 %v1987, 28
        %v1990 = vpop.permute.xlu0 %1989
        %vm1992 = vcmask 261344
        %1993 = vst.msk [vmem:[#allocation2] sm:$0xff] %vm1992, %v1990
        %v1994 = vld [vmem:[#allocation2] sm:$0xff]
        %v1995 = vld [vmem:[%s4] sm:$0xff]
        %v1996 = vld [vmem:[%s4 + $0x8] sm:$0xff]
        %v1997 = vld [vmem:[%s4 + $0x10] sm:$0xff]
        %v1998 = vld [vmem:[%s4 + $0x18] sm:$0xff]
        %v1999 = vld [vmem:[#allocation7] sm:$0x1]
        %v2001 = vlaneseq
        %v2002 = vshrl.u32 %v2001, 7
        %v2003 = vsub.s32 0, %v2002
        %v2004 = vrot.slane %v1999, %v2003
        %v2007 = vsel %vm500, %v1994, 0
        %2009 = vmatprep.subr.mxu0 0.0
        %2010 = vmatpush1.msra.mxu0 0.0
        %2011 = vmatprep.subr.mxu0 0.0
        %2012 = vmatpush1.msra.mxu0 0.0
        %2013 = vmatprep.subr.mxu0 0.0
        %2014 = vmatpush1.msra.mxu0 0.0
        %2015 = vmatprep.subr.mxu0 0.0
        %2016 = vmatpush1.msra.mxu0 0.0
        %2017 = vmatprep.subr.mxu0 0.0
        %2018 = vmatpush1.msra.mxu0 0.0
        %2019 = vmatprep.subr.mxu0 0.0
        %2020 = vmatpush1.msra.mxu0 0.0
        %2021 = vmatprep.subr.mxu0 0.0
        %2022 = vmatpush1.msra.mxu0 0.0
        %2023 = vmatprep.subr.mxu0 0.0
        %2024 = vmatpush1.msra.mxu0 0.0
        %2025 = vmatprep.subr.mxu0 0.0
        %2026 = vmatpush1.msra.mxu0 0.0
        %2027 = vmatprep.subr.mxu0 0.0
        %2028 = vmatpush1.msra.mxu0 0.0
        %2029 = vmatprep.subr.mxu0 0.0
        %2030 = vmatpush1.msra.mxu0 0.0
        %2031 = vmatprep.subr.mxu0 0.0
        %2032 = vmatpush1.msra.mxu0 0.0
        %2033 = vmatprep.subr.mxu0 0.0
        %2034 = vmatpush1.msra.mxu0 %v1998
        %2035 = vmatprep.subr.mxu0 0.0
        %2036 = vmatpush1.msra.mxu0 %v1997
        %2037 = vmatprep.subr.mxu0 0.0
        %2038 = vmatpush1.msra.mxu0 %v1996
        %2039 = vmatprep.subr.mxu0 0.0
        %2040 = vmatpush1.msra.mxu0 %v1995
        %2041 = vmatprep.subr.mxu0 0.0
        %2042 = vmatpush2.msra.mxu0 0.0
        %2043 = vmatprep.subr.mxu0 0.0
        %2044 = vmatpush2.msra.mxu0 0.0
        %2045 = vmatprep.subr.mxu0 0.0
        %2046 = vmatpush2.msra.mxu0 0.0
        %2047 = vmatprep.subr.mxu0 0.0
        %2048 = vmatpush2.msra.mxu0 0.0
        %2049 = vmatprep.subr.mxu0 0.0
        %2050 = vmatpush2.msra.mxu0 0.0
        %2051 = vmatprep.subr.mxu0 0.0
        %2052 = vmatpush2.msra.mxu0 0.0
        %2053 = vmatprep.subr.mxu0 0.0
        %2054 = vmatpush2.msra.mxu0 0.0
        %2055 = vmatprep.subr.mxu0 0.0
        %2056 = vmatpush2.msra.mxu0 0.0
        %2057 = vmatprep.subr.mxu0 0.0
        %2058 = vmatpush2.msra.mxu0 0.0
        %2059 = vmatprep.subr.mxu0 0.0
        %2060 = vmatpush2.msra.mxu0 0.0
        %2061 = vmatprep.subr.mxu0 0.0
        %2062 = vmatpush2.msra.mxu0 0.0
        %2063 = vmatprep.subr.mxu0 0.0
        %2064 = vmatpush2.msra.mxu0 0.0
        %2065 = vmatprep.subr.mxu0 0.0
        %2066 = vmatpush2.msra.mxu0 0.0
        %2067 = vmatprep.subr.mxu0 0.0
        %2068 = vmatpush2.msra.mxu0 0.0
        %2069 = vmatprep.subr.mxu0 0.0
        %2070 = vmatpush2.msra.mxu0 0.0
        %2071 = vmatprep.subr.mxu0 0.0
        %2072 = vmatpush2.msra.mxu0 0.0
        %2073 = vmatprep.mubr.f32.mxu0 0.0
        %2074 = vmatmul.mubr.f32.gmra.mxu0 %v2007
        %v2075 = vpop.f32.mrf.mxu0
        %v2076 = vadd.f32 %v2004, %v2075
        %v2077 = vpop.f32.mrf.mxu0
        %2078 = vdwg.mxu0
        %v2079 = vadd.f32 %v497, %v2076
        %v2080 = vld [vmem:[#allocation8] sm:$0x1]
        %v2081 = vld [vmem:[#allocation10] sm:$0x1]
        %v2082 = vsel %vm500, %v2079, 0.0
        %2083 = vadd.xlane.f32.xlu0 %v2082
        %v2084 = vpop.xlane.xlu0 %2083
        %v2085 = vmul.f32 %v2084, %v504
        %v2086 = vsub.f32 %v2079, %v2085
        %v2087 = vmul.f32 %v2086, %v2086
        %v2088 = vsel %vm500, %v2087, 0.0
        %2089 = vadd.xlane.f32.xlu0 %v2088
        %v2090 = vpop.xlane.xlu0 %2089
        %v2091 = vmul.f32 %v2090, %v504
        %v2092 = vadd.f32 %v2091, 1e-05
        %v2093 = vrsqrt.pop %v2092
        %v2094 = vmul.f32 %v2086, %v2093
        %v2096 = vlaneseq
        %v2097 = vshrl.u32 %v2096, 7
        %v2098 = vsub.s32 0, %v2097
        %v2099 = vrot.slane %v2080, %v2098
        %v2101 = vmul.f32 %v2094, %v2099
        %v2103 = vlaneseq
        %v2104 = vshrl.u32 %v2103, 7
        %v2105 = vsub.s32 0, %v2104
        %v2106 = vrot.slane %v2081, %v2105
        %v2108 = vadd.f32 %v2101, %v2106
        %v2109 = vld [vmem:[%s8] sm:$0xff]
        %v2110 = vld [vmem:[%s8 + $0x8] sm:$0xff]
        %v2111 = vld [vmem:[%s8 + $0x10] sm:$0xff]
        %v2112 = vld [vmem:[%s8 + $0x18] sm:$0xff]
        %v2113 = vld [vmem:[#allocation11] sm:$0x1]
        %v2115 = vlaneseq
        %v2116 = vshrl.u32 %v2115, 7
        %v2117 = vsub.s32 0, %v2116
        %v2118 = vrot.slane %v2113, %v2117
        %v2121 = vsel %vm500, %v2108, 0
        %2123 = vmatprep.subr.mxu0 0.0
        %2124 = vmatpush1.msra.mxu0 0.0
        %2125 = vmatprep.subr.mxu0 0.0
        %2126 = vmatpush1.msra.mxu0 0.0
        %2127 = vmatprep.subr.mxu0 0.0
        %2128 = vmatpush1.msra.mxu0 0.0
        %2129 = vmatprep.subr.mxu0 0.0
        %2130 = vmatpush1.msra.mxu0 0.0
        %2131 = vmatprep.subr.mxu0 0.0
        %2132 = vmatpush1.msra.mxu0 0.0
        %2133 = vmatprep.subr.mxu0 0.0
        %2134 = vmatpush1.msra.mxu0 0.0
        %2135 = vmatprep.subr.mxu0 0.0
        %2136 = vmatpush1.msra.mxu0 0.0
        %2137 = vmatprep.subr.mxu0 0.0
        %2138 = vmatpush1.msra.mxu0 0.0
        %2139 = vmatprep.subr.mxu0 0.0
        %2140 = vmatpush1.msra.mxu0 0.0
        %2141 = vmatprep.subr.mxu0 0.0
        %2142 = vmatpush1.msra.mxu0 0.0
        %2143 = vmatprep.subr.mxu0 0.0
        %2144 = vmatpush1.msra.mxu0 0.0
        %2145 = vmatprep.subr.mxu0 0.0
        %2146 = vmatpush1.msra.mxu0 0.0
        %2147 = vmatprep.subr.mxu0 0.0
        %2148 = vmatpush1.msra.mxu0 %v2112
        %2149 = vmatprep.subr.mxu0 0.0
        %2150 = vmatpush1.msra.mxu0 %v2111
        %2151 = vmatprep.subr.mxu0 0.0
        %2152 = vmatpush1.msra.mxu0 %v2110
        %2153 = vmatprep.subr.mxu0 0.0
        %2154 = vmatpush1.msra.mxu0 %v2109
        %2155 = vmatprep.subr.mxu0 0.0
        %2156 = vmatpush2.msra.mxu0 0.0
        %2157 = vmatprep.subr.mxu0 0.0
        %2158 = vmatpush2.msra.mxu0 0.0
        %2159 = vmatprep.subr.mxu0 0.0
        %2160 = vmatpush2.msra.mxu0 0.0
        %2161 = vmatprep.subr.mxu0 0.0
        %2162 = vmatpush2.msra.mxu0 0.0
        %2163 = vmatprep.subr.mxu0 0.0
        %2164 = vmatpush2.msra.mxu0 0.0
        %2165 = vmatprep.subr.mxu0 0.0
        %2166 = vmatpush2.msra.mxu0 0.0
        %2167 = vmatprep.subr.mxu0 0.0
        %2168 = vmatpush2.msra.mxu0 0.0
        %2169 = vmatprep.subr.mxu0 0.0
        %2170 = vmatpush2.msra.mxu0 0.0
        %2171 = vmatprep.subr.mxu0 0.0
        %2172 = vmatpush2.msra.mxu0 0.0
        %2173 = vmatprep.subr.mxu0 0.0
        %2174 = vmatpush2.msra.mxu0 0.0
        %2175 = vmatprep.subr.mxu0 0.0
        %2176 = vmatpush2.msra.mxu0 0.0
        %2177 = vmatprep.subr.mxu0 0.0
        %2178 = vmatpush2.msra.mxu0 0.0
        %2179 = vmatprep.subr.mxu0 0.0
        %2180 = vmatpush2.msra.mxu0 0.0
        %2181 = vmatprep.subr.mxu0 0.0
        %2182 = vmatpush2.msra.mxu0 0.0
        %2183 = vmatprep.subr.mxu0 0.0
        %2184 = vmatpush2.msra.mxu0 0.0
        %2185 = vmatprep.subr.mxu0 0.0
        %2186 = vmatpush2.msra.mxu0 0.0
        %2187 = vmatprep.mubr.f32.mxu0 0.0
        %2188 = vmatmul.mubr.f32.gmra.mxu0 %v2121
        %v2189 = vpop.f32.mrf.mxu0
        %v2190 = vadd.f32 %v2118, %v2189
        %v2191 = vpop.f32.mrf.mxu0
        %2192 = vdwg.mxu0
        %v2193 = vmul.f32 %v2190, 0.5
        %v2194 = vmul.f32 %v2190, 0.70710677
        %v2195 = vand.u32 2147483647, %v2194
        %v2196 = vmul.f32 %v2195, 0.3275911
        %v2197 = vadd.f32 %v2196, 1.0
        %v2198 = vrcp.pop %v2197
        %v2199 = vmul.f32 %v2197, %v2198
        %v2200 = vsub.f32 2.0, %v2199
        %v2201 = vmul.f32 %v2198, %v2200
        %v2202 = vmul.f32 %v2201, 1.0614054
        %v2203 = vadd.f32 %v2202, -1.4531521
        %v2204 = vmul.f32 %v2203, %v2201
        %v2205 = vadd.f32 %v2204, 1.4214138
        %v2206 = vmul.f32 %v2205, %v2201
        %v2207 = vadd.f32 %v2206, -0.28449672
        %v2208 = vmul.f32 %v2207, %v2201
        %v2209 = vadd.f32 %v2208, 0.2548296
        %v2210 = vmul.f32 %v2209, %v2201
        %v2211 = vsub.f32 0.0, %v2195
        %v2212 = vmul.f32 %v2211, %v2195
        %v2213 = vmul.f32 %v2212, 1.442695
        %v2214 = vpow.pop %v2213
        %v2215 = vmul.f32 %v2210, %v2214
        %v2216 = vsub.f32 1.0, %v2215
        %vm2217 = vcmp.ge.f32.partialorder %v2194, 0.0
        %v2218 = vsub.f32 0.0, %v2216
        %v2219 = vsel %vm2217, %v2216, %v2218
        %v2220 = vadd.f32 %v2219, 1.0
        %v2221 = vmul.f32 %v2193, %v2220
        %v2222 = vld [vmem:[%s10] sm:$0xff]
        %v2223 = vld [vmem:[%s10 + $0x8] sm:$0xff]
        %v2224 = vld [vmem:[%s10 + $0x10] sm:$0xff]
        %v2225 = vld [vmem:[%s10 + $0x18] sm:$0xff]
        %v2226 = vld [vmem:[%s10 + $0x20] sm:$0xff]
        %v2227 = vld [vmem:[%s10 + $0x28] sm:$0xff]
        %v2228 = vld [vmem:[%s10 + $0x30] sm:$0xff]
        %v2229 = vld [vmem:[%s10 + $0x38] sm:$0xff]
        %v2230 = vld [vmem:[#allocation13] sm:$0x1]
        %v2232 = vlaneseq
        %v2233 = vshrl.u32 %v2232, 7
        %v2234 = vsub.s32 0, %v2233
        %v2235 = vrot.slane %v2230, %v2234
        %vm2237 = vcmask 523264
        %v2239 = vsel %vm2237, %v2221, 0
        %2241 = vmatprep.subr.mxu0 0.0
        %2242 = vmatpush1.msra.mxu0 0.0
        %2243 = vmatprep.subr.mxu0 0.0
        %2244 = vmatpush1.msra.mxu0 0.0
        %2245 = vmatprep.subr.mxu0 0.0
        %2246 = vmatpush1.msra.mxu0 0.0
        %2247 = vmatprep.subr.mxu0 0.0
        %2248 = vmatpush1.msra.mxu0 0.0
        %2249 = vmatprep.subr.mxu0 0.0
        %2250 = vmatpush1.msra.mxu0 0.0
        %2251 = vmatprep.subr.mxu0 0.0
        %2252 = vmatpush1.msra.mxu0 0.0
        %2253 = vmatprep.subr.mxu0 0.0
        %2254 = vmatpush1.msra.mxu0 0.0
        %2255 = vmatprep.subr.mxu0 0.0
        %2256 = vmatpush1.msra.mxu0 0.0
        %2257 = vmatprep.subr.mxu0 0.0
        %2258 = vmatpush1.msra.mxu0 %v2229
        %2259 = vmatprep.subr.mxu0 0.0
        %2260 = vmatpush1.msra.mxu0 %v2228
        %2261 = vmatprep.subr.mxu0 0.0
        %2262 = vmatpush1.msra.mxu0 %v2227
        %2263 = vmatprep.subr.mxu0 0.0
        %2264 = vmatpush1.msra.mxu0 %v2226
        %2265 = vmatprep.subr.mxu0 0.0
        %2266 = vmatpush1.msra.mxu0 %v2225
        %2267 = vmatprep.subr.mxu0 0.0
        %2268 = vmatpush1.msra.mxu0 %v2224
        %2269 = vmatprep.subr.mxu0 0.0
        %2270 = vmatpush1.msra.mxu0 %v2223
        %2271 = vmatprep.subr.mxu0 0.0
        %2272 = vmatpush1.msra.mxu0 %v2222
        %2273 = vmatprep.subr.mxu0 0.0
        %2274 = vmatpush2.msra.mxu0 0.0
        %2275 = vmatprep.subr.mxu0 0.0
        %2276 = vmatpush2.msra.mxu0 0.0
        %2277 = vmatprep.subr.mxu0 0.0
        %2278 = vmatpush2.msra.mxu0 0.0
        %2279 = vmatprep.subr.mxu0 0.0
        %2280 = vmatpush2.msra.mxu0 0.0
        %2281 = vmatprep.subr.mxu0 0.0
        %2282 = vmatpush2.msra.mxu0 0.0
        %2283 = vmatprep.subr.mxu0 0.0
        %2284 = vmatpush2.msra.mxu0 0.0
        %2285 = vmatprep.subr.mxu0 0.0
        %2286 = vmatpush2.msra.mxu0 0.0
        %2287 = vmatprep.subr.mxu0 0.0
        %2288 = vmatpush2.msra.mxu0 0.0
        %2289 = vmatprep.subr.mxu0 0.0
        %2290 = vmatpush2.msra.mxu0 0.0
        %2291 = vmatprep.subr.mxu0 0.0
        %2292 = vmatpush2.msra.mxu0 0.0
        %2293 = vmatprep.subr.mxu0 0.0
        %2294 = vmatpush2.msra.mxu0 0.0
        %2295 = vmatprep.subr.mxu0 0.0
        %2296 = vmatpush2.msra.mxu0 0.0
        %2297 = vmatprep.subr.mxu0 0.0
        %2298 = vmatpush2.msra.mxu0 0.0
        %2299 = vmatprep.subr.mxu0 0.0
        %2300 = vmatpush2.msra.mxu0 0.0
        %2301 = vmatprep.subr.mxu0 0.0
        %2302 = vmatpush2.msra.mxu0 0.0
        %2303 = vmatprep.subr.mxu0 0.0
        %2304 = vmatpush2.msra.mxu0 0.0
        %2305 = vmatprep.mubr.f32.mxu0 0.0
        %2306 = vmatmul.mubr.f32.gmra.mxu0 %v2239
        %v2307 = vpop.f32.mrf.mxu0
        %v2308 = vadd.f32 %v2235, %v2307
        %v2309 = vpop.f32.mrf.mxu0
        %2310 = vdwg.mxu0
        %v2311 = vadd.f32 %v2079, %v2308
        %2312 = vst.msk [vmem:[%s496] sm:$0xff] %vm500, %v2311
        %p2313 = scmp.lt.s32.totalorder %s27, 1
        %s2314 = scalar_select %p2313, %s27, 1
        %s2315 = smul.addr %s2314, 8
        %s2316 = scalar_lea.vmem %s12, %s2315
        // Predicated region
        $region97: #{dtransformer_pallas.2} parent=67 // pred_check
          %p2317 = pneg %p302
        $region98: #{dtransformer_pallas.2} parent=67 // pred_check_branch
          %2319 = sbr.rel (%p2317) target = $region100
        $region99: #{dtransformer_pallas.2} parent=67 // pred_region
          _
        $region100: #{dtransformer_pallas.2} parent=67 // pred_fallthru
          _
      $region68: #{dtransformer_pallas.2} parent=5 // pred_fallthru
        _
      %p2320 = scmp.le.s32.totalorder 2, %s22
      // Predicated region
      $region101: #{dtransformer_pallas.2} parent=5 // pred_check
        %p2321 = pneg %p2320
      $region102: #{dtransformer_pallas.2} parent=5 // pred_check_branch
        %2323 = sbr.rel (%p2321) target = $region104
      $region103: #{dtransformer_pallas.2} parent=5 // pred_region
        %s2324 = ssub.s32 %s22, 2
        // Predicated region
        $region105: #{dtransformer_pallas.2} parent=103 // pred_check
          %p2325 = pneg %p308
        $region106: #{dtransformer_pallas.2} parent=103 // pred_check_branch
          %2327 = sbr.rel (%p2325) target = $region108
        $region107: #{dtransformer_pallas.2} parent=103 // pred_region
          %p2328 = scmp.lt.s32.totalorder %s28, 1
          %s2329 = scalar_select %p2328, %s28, 1
          %s2330 = smul.addr %s2329, 8
          %s2331 = scalar_lea.vmem %s12, %s2330
        $region108: #{dtransformer_pallas.2} parent=103 // pred_fallthru
          _
      $region104: #{dtransformer_pallas.2} parent=5 // pred_fallthru
        _
    $region6: #{dtransformer_pallas.2} parent=1 // loop_footer
      %s26 = sadd.s32 1, %s22
    $region7: #{dtransformer_pallas.2} parent=1 // loop_footer_branch
      %21 = sbr.rel target = $region3
    $region8: #{dtransformer_pallas.2} parent=1 // loop_exit
      _
    %2332 = vsyncpa [#allocation4], 1
    %s2333 = scalar_lea.sflag [#allocation4], 1
    %2334 = vsyncpa %s2333, 1
    %2335 = vsyncpa [#allocation6], 1
    %2336 = vsyncpa [#allocation9], 1
    %2337 = vsyncpa [#allocation12], 1

</llo_original>
